<compile_context>
chip_gen: v7x
topology: tpu7x:2x2x1
jax: 0.10.0
libtpu: 0.0.40
codegen_flags: <defaults>
</compile_context>

<pallas_src>
import functools

import jax
import jax.numpy as jnp
from jax.experimental import pallas as pl
from jax.experimental.pallas import tpu as pltpu


def _convblock_kernel(x_ref, w1_ref, w2_ref, par_ref, out_ref,
                      xs_ref, h1_ref, h2_ref, st_ref,
                      *, N, H, W, C, TH, eps):
    """Phases (grid axis 0, sequential):
      0: stage input row-tile (bf16, width-padded) into xs scratch
      1: conv1 (K=3C matmuls) + accumulate BN1 sum / sumsq, store raw conv1 -> h1
      2: fold BN1 -> FMA, BN1+SiLU on the fly (masked halo), conv2, BN2 stats -> h2
      3: fold BN2 (*gamma), y = x + q*scale + shift, write output tile
    par rows: 0=bn1_w 1=bn1_b 2=bn2_w 3=bn2_b 4=gamma
    st  rows: 0=sum1 1=sumsq1 2=sum2 3=sumsq2 4=scale1 5=shift1 6=scale2 7=shift2
    """
    p = pl.program_id(0)
    n = pl.program_id(1)
    t = pl.program_id(2)
    row0 = t * TH                       # first output row of this tile (unpadded)
    inv_cnt = 1.0 / float(N * H * W)
    f32 = jnp.float32
    bf16 = jnp.bfloat16

    def interior_mask():
        # mask over a (TH+2, W+2, C) halo window in padded coordinates
        ri = jax.lax.broadcasted_iota(jnp.int32, (TH + 2, W + 2, C), 0) + row0
        ci = jax.lax.broadcasted_iota(jnp.int32, (TH + 2, W + 2, C), 1)
        return (ri >= 1) & (ri <= H) & (ci >= 1) & (ci <= W)

    def conv3x3(win, w_ref):
        # win: (TH+2, W+2, C) bf16 (already zero outside the image)
        # width im2col -> per-dy (TH*W, 3C) slabs, K = 3C contraction on the MXU
        slab = jnp.concatenate(
            [win[:, 0:W, :], win[:, 1:W + 1, :], win[:, 2:W + 2, :]], axis=-1)
        acc = jnp.zeros((TH * W, C), f32)
        for dy in range(3):
            lhs = slab[dy:dy + TH].reshape(TH * W, 3 * C)
            acc = acc + jnp.dot(lhs, w_ref[dy], preferred_element_type=f32)
        return acc                                           # (TH*W, C) f32

    # ---------------- one-time init (first grid step) ----------------
    @pl.when((p == 0) & (n == 0) & (t == 0))
    def _init():
        st_ref[...] = jnp.zeros_like(st_ref)

    # ---------------- phase 0: stage input tile ----------------------
    @pl.when(p == 0)
    def _stage():
        x_tile = x_ref[0].astype(bf16)                       # (TH, W, C)
        zcol = jnp.zeros((TH, 1, C), bf16)
        xs_ref[n, pl.ds(row0 + 1, TH), :, :] = jnp.concatenate(
            [zcol, x_tile, zcol], axis=1)                    # width-padded rows

    # ---------------- phase 1: conv1 + BN1 partial stats -------------
    @pl.when(p == 1)
    def _conv1():
        win = xs_ref[n, pl.ds(row0, TH + 2), :, :]           # (TH+2, W+2, C) bf16
        win = jnp.where(interior_mask(), win, jnp.zeros((), bf16))
        acc = conv3x3(win, w1_ref)        # conv bias dropped: cancelled by BN mean
        st_ref[0:1, :] += jnp.sum(acc, axis=0, keepdims=True)
        st_ref[1:2, :] += jnp.sum(acc * acc, axis=0, keepdims=True)
        zcol = jnp.zeros((TH, 1, C), bf16)
        h1_ref[n, pl.ds(row0 + 1, TH), :, :] = jnp.concatenate(
            [zcol, acc.reshape(TH, W, C).astype(bf16), zcol], axis=1)

    # ---------------- phase 2: BN1+SiLU (on the fly) + conv2 ----------
    @pl.when((p == 2) & (n == 0) & (t == 0))
    def _fold_bn1():
        mu = st_ref[0:1, :] * inv_cnt
        var = jnp.maximum(st_ref[1:2, :] * inv_cnt - mu * mu, 0.0)
        scale = par_ref[0:1, :] * jax.lax.rsqrt(var + eps)
        st_ref[4:5, :] = scale
        st_ref[5:6, :] = par_ref[1:2, :] - mu * scale

    @pl.when(p == 2)
    def _conv2():
        win = h1_ref[n, pl.ds(row0, TH + 2), :, :].astype(f32)   # (TH+2, W+2, C)
        z = win * st_ref[4:5, :] + st_ref[5:6, :]            # folded BN1 FMA
        z = z * jax.nn.sigmoid(z)                            # SiLU
        z = jnp.where(interior_mask(), z, 0.0)               # zero pad after act
        acc2 = conv3x3(z.astype(bf16), w2_ref)
        st_ref[2:3, :] += jnp.sum(acc2, axis=0, keepdims=True)
        st_ref[3:4, :] += jnp.sum(acc2 * acc2, axis=0, keepdims=True)
        h2_ref[n, pl.ds(row0, TH), :, :] = acc2.reshape(TH, W, C).astype(bf16)

    # ---------------- phase 3: BN2 (folded with gamma) + residual -----
    @pl.when((p == 3) & (n == 0) & (t == 0))
    def _fold_bn2():
        mu = st_ref[2:3, :] * inv_cnt
        var = jnp.maximum(st_ref[3:4, :] * inv_cnt - mu * mu, 0.0)
        scale = par_ref[2:3, :] * jax.lax.rsqrt(var + eps)
        shift = par_ref[3:4, :] - mu * scale
        st_ref[6:7, :] = par_ref[4:5, :] * scale             # gamma * scale2
        st_ref[7:8, :] = par_ref[4:5, :] * shift             # gamma * shift2

    @pl.when(p == 3)
    def _finalize():
        q = h2_ref[n, pl.ds(row0, TH), :, :].astype(f32)     # (TH, W, C)
        out_ref[0] = x_ref[0] + q * st_ref[6:7, :] + st_ref[7:8, :]


def _pick_tile_h(H, W):
    th = max(1, min(H, max(1, 256 // max(1, W))))
    while H % th:
        th -= 1
    return th


def conv_block_forward(x_nchw, params, *, eps=1e-5, tile_h=None):
    """Pallas ConvBlock forward. Input/output in PyTorch NCHW layout."""
    N, C, H, W = x_nchw.shape
    x = jnp.transpose(x_nchw, (0, 2, 3, 1)).astype(jnp.float32)   # NHWC, f32 (exact residual)

    TH = _pick_tile_h(H, W) if tile_h is None else int(tile_h)
    assert H % TH == 0, (H, TH)
    NT = H // TH

    # weights: (kh, kw, Cin, Cout) -> (kh, kw*Cin, Cout) for the K=3C contraction
    w1r = params["w1"].reshape(3, 3 * C, C).astype(jnp.bfloat16)
    w2r = params["w2"].reshape(3, 3 * C, C).astype(jnp.bfloat16)
    # conv biases b1/b2 are intentionally dropped: a per-channel constant shift is
    # exactly removed by training-mode BatchNorm (mean subtraction, var unchanged).
    par = jnp.stack([params["bn1_w"], params["bn1_b"],
                     params["bn2_w"], params["bn2_b"],
                     params["gamma"]], axis=0).astype(jnp.float32)   # (5, C)

    kernel = functools.partial(_convblock_kernel, N=N, H=H, W=W, C=C, TH=TH, eps=eps)

    def x_map(p, n, t):
        # only phases 0 (stage) and 3 (residual) need fresh x tiles; otherwise pin
        # the block index so the pipeline does not refetch x every step.
        return (n, jnp.where((p == 0) | (p == 3), t, 0), 0, 0)

    def out_map(p, n, t):
        return (n, jnp.where(p == 3, t, 0), 0, 0)

    def _bytes(shape, dtype):
        sz = jnp.dtype(dtype).itemsize
        for d in shape:
            sz *= d
        return sz

    vmem_bytes = (
        2 * _bytes((N, H + 2, W + 2, C), jnp.bfloat16)        # xs, h1
        + _bytes((N, H, W, C), jnp.bfloat16)                  # h2
        + 2 * 2 * _bytes((1, TH, W, C), jnp.float32)          # in/out blocks (x2 buf)
        + 2 * 2 * _bytes((3, 3 * C, C), jnp.bfloat16)         # weights (x2 buf)
        + _bytes((8, C), jnp.float32))
    vmem_limit = min(int(1.5 * vmem_bytes) + (8 << 20), 112 * 2 ** 20)

    out_nhwc = pl.pallas_call(
        kernel,
        out_shape=jax.ShapeDtypeStruct((N, H, W, C), jnp.float32),
        grid_spec=pltpu.PrefetchScalarGridSpec(
            num_scalar_prefetch=0,
            grid=(4, N, NT),
            in_specs=[
                pl.BlockSpec((1, TH, W, C), x_map),
                pl.BlockSpec((3, 3 * C, C), lambda p, n, t: (0, 0, 0)),
                pl.BlockSpec((3, 3 * C, C), lambda p, n, t: (0, 0, 0)),
                pl.BlockSpec((5, C), lambda p, n, t: (0, 0)),
            ],
            out_specs=pl.BlockSpec((1, TH, W, C), out_map),
            scratch_shapes=[
                pltpu.VMEM((N, H + 2, W + 2, C), jnp.bfloat16),   # xs: staged padded input
                pltpu.VMEM((N, H + 2, W + 2, C), jnp.bfloat16),   # h1: raw conv1 output
                pltpu.VMEM((N, H, W, C), jnp.bfloat16),           # h2: raw conv2 output
                pltpu.VMEM((8, C), jnp.float32),                  # BN stats + folded affines
            ],
        ),
        compiler_params=pltpu.CompilerParams(
            dimension_semantics=("arbitrary", "arbitrary", "arbitrary"),
            vmem_limit_bytes=vmem_limit,
        ),
    )(x, w1r, w2r, par)
    return jnp.transpose(out_nhwc, (0, 3, 1, 2))                  # back to NCHW


def _reference_forward(x_nchw, params, *, eps=1e-5):
    """Pure-JAX reference with PyTorch semantics (NCHW, training-mode BN, with biases)."""
    def to_oihw(w):  # (kh, kw, Cin, Cout) -> (Cout, Cin, kh, kw)
        return jnp.transpose(w, (3, 2, 0, 1))

    def conv(x, w, b):
        y = jax.lax.conv_general_dilated(
            x, to_oihw(w), window_strides=(1, 1), padding=((1, 1), (1, 1)),
            dimension_numbers=("NCHW", "OIHW", "NCHW"))
        return y + b[None, :, None, None]

    def bn(x, g, b):
        mu = jnp.mean(x, axis=(0, 2, 3), keepdims=True)
        var = jnp.mean((x - mu) ** 2, axis=(0, 2, 3), keepdims=True)
        return (x - mu) / jnp.sqrt(var + eps) * g[None, :, None, None] + b[None, :, None, None]

    h = conv(x_nchw, params["w1"], params["b1"])
    h = bn(h, params["bn1_w"], params["bn1_b"])
    h = h * jax.nn.sigmoid(h)                                     # SiLU
    y = conv(h, params["w2"], params["b2"])
    y = bn(y, params["bn2_w"], params["bn2_b"])
    y = y * params["gamma"][None, :, None, None]
    return x_nchw + y


def make_params(key, dim, layer_scale=1e-2):
    ks = jax.random.split(key, 8)
    p = {
        "w1": 0.1 * jax.random.normal(ks[0], (3, 3, dim, dim), jnp.float32),
        "b1": 0.1 * jax.random.normal(ks[1], (dim,), jnp.float32),
        "w2": 0.1 * jax.random.normal(ks[2], (3, 3, dim, dim), jnp.float32),
        "b2": 0.1 * jax.random.normal(ks[3], (dim,), jnp.float32),
        "bn1_w": 1.0 + 0.1 * jax.random.normal(ks[4], (dim,), jnp.float32),
        "bn1_b": 0.1 * jax.random.normal(ks[5], (dim,), jnp.float32),
        "bn2_w": 1.0 + 0.1 * jax.random.normal(ks[6], (dim,), jnp.float32),
        "bn2_b": 0.1 * jax.random.normal(ks[7], (dim,), jnp.float32),
    }
    if layer_scale is not None:
        p["gamma"] = layer_scale * jnp.ones((dim,), jnp.float32)
    else:
        p["gamma"] = jnp.ones((dim,), jnp.float32)
    return p


if __name__ == "__main__":
    N, C, H, W = 2, 64, 16, 16     # small but lane-friendly dim
    key = jax.random.PRNGKey(0)
    k_x, k_p = jax.random.split(key)
    x = jax.random.normal(k_x, (N, C, H, W), jnp.float32)
    params = make_params(k_p, C, layer_scale=1e-2)

    # tile_h=8 -> 2 row-tiles per image, exercises the halo / multi-tile BN path
    out = jax.block_until_ready(conv_block_forward(x, params, tile_h=8))
    ref = jax.block_until_ready(_reference_forward(x, params))

    assert out.shape == (N, C, H, W), out.shape
    err = jnp.max(jnp.abs(out - ref))
    if not bool(err < 2e-2):
        raise AssertionError(f"mismatch vs reference, max abs err = {err}")
    print("KERNEL_OK")
</pallas_src>

<mosaic_0001>
module attributes {stable_mosaic.version = 11 : i64} {
  func.func @_convblock_kernel(%arg0: i32, %arg1: i32, %arg2: i32, %arg3: memref<1x8x16x64xf32, #tpu.memory_space<vmem>>, %arg4: memref<3x192x64xbf16, #tpu.memory_space<vmem>>, %arg5: memref<3x192x64xbf16, #tpu.memory_space<vmem>>, %arg6: memref<5x64xf32, #tpu.memory_space<vmem>>, %arg7: memref<1x8x16x64xf32, #tpu.memory_space<vmem>>, %arg8: memref<2x18x18x64xbf16, #tpu.memory_space<vmem>>, %arg9: memref<2x18x18x64xbf16, #tpu.memory_space<vmem>>, %arg10: memref<2x16x16x64xbf16, #tpu.memory_space<vmem>>, %arg11: memref<8x64xf32, #tpu.memory_space<vmem>>) attributes {dimension_semantics = [#tpu.dimension_semantics<arbitrary>, #tpu.dimension_semantics<arbitrary>, #tpu.dimension_semantics<arbitrary>], iteration_bounds = array<i64: 4, 2, 2>, scalar_prefetch = 0 : i64, scratch_operands = 4 : i64, tpu.core_type = #tpu.core_type<tc>, window_params = [{transform_indices = @transform_0, window_bounds = array<i64: 1, 8, 16, 64>}, {pipeline_mode = #tpu.pipeline_mode<synchronous>, transform_indices = @transform_1, window_bounds = array<i64: 3, 192, 64>}, {pipeline_mode = #tpu.pipeline_mode<synchronous>, transform_indices = @transform_2, window_bounds = array<i64: 3, 192, 64>}, {pipeline_mode = #tpu.pipeline_mode<synchronous>, transform_indices = @transform_3, window_bounds = array<i64: 5, 64>}, {transform_indices = @transform_4, window_bounds = array<i64: 1, 8, 16, 64>}]} {
    %c8_i32 = arith.constant 8 : i32
    %0 = arith.muli %arg2, %c8_i32 : i32
    %c0_i32 = arith.constant 0 : i32
    %1 = arith.cmpi eq, %arg0, %c0_i32 : i32
    %c0_i32_0 = arith.constant 0 : i32
    %2 = arith.cmpi eq, %arg1, %c0_i32_0 : i32
    %3 = arith.andi %1, %2 : i1
    %c0_i32_1 = arith.constant 0 : i32
    %4 = arith.cmpi eq, %arg2, %c0_i32_1 : i32
    %5 = arith.andi %3, %4 : i1
    %6 = arith.extui %5 : i1 to i32
    %c0_i32_2 = arith.constant 0 : i32
    %7 = arith.cmpi ne, %6, %c0_i32_2 : i32
    scf.if %7 {
      %cst = arith.constant 0.000000e+00 : f32
      %34 = vector.broadcast %cst : f32 to vector<8x64xf32>
      %c0 = arith.constant 0 : index
      %c0_16 = arith.constant 0 : index
      %35 = vector.load %arg11[%c0, %c0_16] : memref<8x64xf32, #tpu.memory_space<vmem>>, vector<8x64xf32>
      tpu.vector_store %arg11[%c0, %c0_16], %34 {strides = array<i32>} : memref<8x64xf32, #tpu.memory_space<vmem>>, vector<8x64xf32>,
    } else {
    }
    %c0_i32_3 = arith.constant 0 : i32
    %8 = arith.cmpi eq, %arg0, %c0_i32_3 : i32
    %9 = arith.extui %8 : i1 to i32
    %c0_i32_4 = arith.constant 0 : i32
    %10 = arith.cmpi ne, %9, %c0_i32_4 : i32
    scf.if %10 {
      %c0 = arith.constant 0 : index
      %c0_16 = arith.constant 0 : index
      %c0_17 = arith.constant 0 : index
      %c0_18 = arith.constant 0 : index
      %34 = vector.load %arg3[%c0, %c0_16, %c0_17, %c0_18] : memref<1x8x16x64xf32, #tpu.memory_space<vmem>>, vector<1x8x16x64xf32>
      %35 = vector.shape_cast %34 : vector<1x8x16x64xf32> to vector<8x16x64xf32>
      %36 = arith.truncf %35 : vector<8x16x64xf32> to vector<8x16x64xbf16>
      %cst = arith.constant 0.000000e+00 : bf16
      %37 = vector.broadcast %cst : bf16 to vector<8x1x64xbf16>
      %38 = tpu.concatenate %37, %36, %37 in 1 : vector<8x1x64xbf16>, vector<8x16x64xbf16>, vector<8x1x64xbf16> -> vector<8x18x64xbf16>
      %c1_i32_19 = arith.constant 1 : i32
      %39 = arith.addi %0, %c1_i32_19 : i32
      %40 = arith.index_cast %arg1 : i32 to index
      %41 = arith.index_cast %39 : i32 to index
      %c0_20 = arith.constant 0 : index
      %c0_21 = arith.constant 0 : index
      %42 = vector.load %arg8[%40, %41, %c0_20, %c0_21] : memref<2x18x18x64xbf16, #tpu.memory_space<vmem>>, vector<1x8x18x64xbf16>
      %43 = vector.shape_cast %42 : vector<1x8x18x64xbf16> to vector<8x18x64xbf16>
      %44 = vector.shape_cast %38 : vector<8x18x64xbf16> to vector<1x8x18x64xbf16>
      tpu.vector_store %arg8[%40, %41, %c0_20, %c0_21], %44 {strides = array<i32>} : memref<2x18x18x64xbf16, #tpu.memory_space<vmem>>, vector<1x8x18x64xbf16>,
    } else {
    }
    %c1_i32 = arith.constant 1 : i32
    %11 = arith.cmpi eq, %arg0, %c1_i32 : i32
    %12 = arith.extui %11 : i1 to i32
    %c0_i32_5 = arith.constant 0 : i32
    %13 = arith.cmpi ne, %12, %c0_i32_5 : i32
    scf.if %13 {
      %34 = arith.index_cast %arg1 : i32 to index
      %35 = arith.index_cast %0 : i32 to index
      %c0 = arith.constant 0 : index
      %c0_16 = arith.constant 0 : index
      %36 = vector.load %arg8[%34, %35, %c0, %c0_16] : memref<2x18x18x64xbf16, #tpu.memory_space<vmem>>, vector<1x10x18x64xbf16>
      %37 = vector.shape_cast %36 : vector<1x10x18x64xbf16> to vector<10x18x64xbf16>
      %38 = tpu.iota {dimensions = array<i32: 0>} : vector<10x18x64xi32>
      %39 = vector.broadcast %0 : i32 to vector<10x18x64xi32>
      %40 = arith.addi %38, %39 : vector<10x18x64xi32>
      %41 = tpu.iota {dimensions = array<i32: 1>} : vector<10x18x64xi32>
      %c1_i32_17 = arith.constant 1 : i32
      %42 = vector.broadcast %c1_i32_17 : i32 to vector<10x18x64xi32>
      %43 = arith.cmpi sge, %40, %42 : vector<10x18x64xi32>
      %c16_i32 = arith.constant 16 : i32
      %44 = vector.broadcast %c16_i32 : i32 to vector<10x18x64xi32>
      %45 = arith.cmpi sle, %40, %44 : vector<10x18x64xi32>
      %46 = arith.andi %43, %45 : vector<10x18x64xi1>
      %c1_i32_18 = arith.constant 1 : i32
      %47 = vector.broadcast %c1_i32_18 : i32 to vector<10x18x64xi32>
      %48 = arith.cmpi sge, %41, %47 : vector<10x18x64xi32>
      %49 = arith.andi %46, %48 : vector<10x18x64xi1>
      %c16_i32_19 = arith.constant 16 : i32
      %50 = vector.broadcast %c16_i32_19 : i32 to vector<10x18x64xi32>
      %51 = arith.cmpi sle, %41, %50 : vector<10x18x64xi32>
      %52 = arith.andi %49, %51 : vector<10x18x64xi1>
      %cst = arith.constant 0.000000e+00 : bf16
      %53 = vector.broadcast %cst : bf16 to vector<10x18x64xbf16>
      %54 = arith.select %52, %37, %53 : vector<10x18x64xi1>, vector<10x18x64xbf16>
      %55 = vector.extract_strided_slice %54 {offsets = [0, 0, 0], sizes = [10, 16, 64], strides = [1, 1, 1]} : vector<10x18x64xbf16> to vector<10x16x64xbf16>
      %56 = vector.extract_strided_slice %54 {offsets = [0, 1, 0], sizes = [10, 16, 64], strides = [1, 1, 1]} : vector<10x18x64xbf16> to vector<10x16x64xbf16>
      %57 = vector.extract_strided_slice %54 {offsets = [0, 2, 0], sizes = [10, 16, 64], strides = [1, 1, 1]} : vector<10x18x64xbf16> to vector<10x16x64xbf16>
      %58 = tpu.concatenate %55, %56, %57 in 2 : vector<10x16x64xbf16>, vector<10x16x64xbf16>, vector<10x16x64xbf16> -> vector<10x16x192xbf16>
      %cst_20 = arith.constant 0.000000e+00 : f32
      %59 = vector.broadcast %cst_20 : f32 to vector<128x64xf32>
      %60 = vector.extract_strided_slice %58 {offsets = [0, 0, 0], sizes = [8, 16, 192], strides = [1, 1, 1]} : vector<10x16x192xbf16> to vector<8x16x192xbf16>
      %61 = vector.shape_cast %60 : vector<8x16x192xbf16> to vector<128x192xbf16>
      %c0_21 = arith.constant 0 : index
      %c0_22 = arith.constant 0 : index
      %c0_23 = arith.constant 0 : index
      %62 = vector.load %arg4[%c0_21, %c0_22, %c0_23] : memref<3x192x64xbf16, #tpu.memory_space<vmem>>, vector<1x192x64xbf16>
      %63 = vector.shape_cast %62 : vector<1x192x64xbf16> to vector<192x64xbf16>
      %cst_24 = arith.constant dense<0.000000e+00> : vector<128x64xf32>
      %64 = tpu.matmul %61, %63, %cst_24 {dimension_numbers = #tpu.dot_dimension_numbers<[1], [0], [0], [1], [0, 0, 1, 1], [], []>} : vector<128x192xbf16>, vector<192x64xbf16>, vector<128x64xf32> -> vector<128x64xf32>
      %65 = arith.addf %59, %64 : vector<128x64xf32>
      %66 = vector.extract_strided_slice %58 {offsets = [1, 0, 0], sizes = [8, 16, 192], strides = [1, 1, 1]} : vector<10x16x192xbf16> to vector<8x16x192xbf16>
      %67 = vector.shape_cast %66 : vector<8x16x192xbf16> to vector<128x192xbf16>
      %c1 = arith.constant 1 : index
      %c0_25 = arith.constant 0 : index
      %c0_26 = arith.constant 0 : index
      %68 = vector.load %arg4[%c1, %c0_25, %c0_26] : memref<3x192x64xbf16, #tpu.memory_space<vmem>>, vector<1x192x64xbf16>
      %69 = vector.shape_cast %68 : vector<1x192x64xbf16> to vector<192x64xbf16>
      %cst_27 = arith.constant dense<0.000000e+00> : vector<128x64xf32>
      %70 = tpu.matmul %67, %69, %cst_27 {dimension_numbers = #tpu.dot_dimension_numbers<[1], [0], [0], [1], [0, 0, 1, 1], [], []>} : vector<128x192xbf16>, vector<192x64xbf16>, vector<128x64xf32> -> vector<128x64xf32>
      %71 = arith.addf %65, %70 : vector<128x64xf32>
      %72 = vector.extract_strided_slice %58 {offsets = [2, 0, 0], sizes = [8, 16, 192], strides = [1, 1, 1]} : vector<10x16x192xbf16> to vector<8x16x192xbf16>
      %73 = vector.shape_cast %72 : vector<8x16x192xbf16> to vector<128x192xbf16>
      %c2 = arith.constant 2 : index
      %c0_28 = arith.constant 0 : index
      %c0_29 = arith.constant 0 : index
      %74 = vector.load %arg4[%c2, %c0_28, %c0_29] : memref<3x192x64xbf16, #tpu.memory_space<vmem>>, vector<1x192x64xbf16>
      %75 = vector.shape_cast %74 : vector<1x192x64xbf16> to vector<192x64xbf16>
      %cst_30 = arith.constant dense<0.000000e+00> : vector<128x64xf32>
      %76 = tpu.matmul %73, %75, %cst_30 {dimension_numbers = #tpu.dot_dimension_numbers<[1], [0], [0], [1], [0, 0, 1, 1], [], []>} : vector<128x192xbf16>, vector<192x64xbf16>, vector<128x64xf32> -> vector<128x64xf32>
      %77 = arith.addf %71, %76 : vector<128x64xf32>
      %c0_31 = arith.constant 0 : index
      %c0_32 = arith.constant 0 : index
      %78 = vector.load %arg11[%c0_31, %c0_32] : memref<8x64xf32, #tpu.memory_space<vmem>>, vector<1x64xf32>
      %cst_33 = arith.constant dense<0.000000e+00> : vector<64xf32>
      %79 = vector.multi_reduction <add>, %77, %cst_33 [0] : vector<128x64xf32> to vector<64xf32>
      %80 = vector.shape_cast %79 : vector<64xf32> to vector<1x64xf32>
      %81 = arith.addf %78, %80 : vector<1x64xf32>
      %c0_34 = arith.constant 0 : index
      %c0_35 = arith.constant 0 : index
      %82 = vector.load %arg11[%c0_34, %c0_35] : memref<8x64xf32, #tpu.memory_space<vmem>>, vector<1x64xf32>
      tpu.vector_store %arg11[%c0_34, %c0_35], %81 {strides = array<i32>} : memref<8x64xf32, #tpu.memory_space<vmem>>, vector<1x64xf32>,
      %c1_36 = arith.constant 1 : index
      %c0_37 = arith.constant 0 : index
      %83 = vector.load %arg11[%c1_36, %c0_37] : memref<8x64xf32, #tpu.memory_space<vmem>>, vector<1x64xf32>
      %84 = arith.mulf %77, %77 : vector<128x64xf32>
      %cst_38 = arith.constant dense<0.000000e+00> : vector<64xf32>
      %85 = vector.multi_reduction <add>, %84, %cst_38 [0] : vector<128x64xf32> to vector<64xf32>
      %86 = vector.shape_cast %85 : vector<64xf32> to vector<1x64xf32>
      %87 = arith.addf %83, %86 : vector<1x64xf32>
      %c1_39 = arith.constant 1 : index
      %c0_40 = arith.constant 0 : index
      %88 = vector.load %arg11[%c1_39, %c0_40] : memref<8x64xf32, #tpu.memory_space<vmem>>, vector<1x64xf32>
      tpu.vector_store %arg11[%c1_39, %c0_40], %87 {strides = array<i32>} : memref<8x64xf32, #tpu.memory_space<vmem>>, vector<1x64xf32>,
      %cst_41 = arith.constant 0.000000e+00 : bf16
      %89 = vector.broadcast %cst_41 : bf16 to vector<8x1x64xbf16>
      %90 = vector.shape_cast %77 : vector<128x64xf32> to vector<8x16x64xf32>
      %91 = arith.truncf %90 : vector<8x16x64xf32> to vector<8x16x64xbf16>
      %92 = tpu.concatenate %89, %91, %89 in 1 : vector<8x1x64xbf16>, vector<8x16x64xbf16>, vector<8x1x64xbf16> -> vector<8x18x64xbf16>
      %c1_i32_42 = arith.constant 1 : i32
      %93 = arith.addi %0, %c1_i32_42 : i32
      %94 = arith.index_cast %arg1 : i32 to index
      %95 = arith.index_cast %93 : i32 to index
      %c0_43 = arith.constant 0 : index
      %c0_44 = arith.constant 0 : index
      %96 = vector.load %arg9[%94, %95, %c0_43, %c0_44] : memref<2x18x18x64xbf16, #tpu.memory_space<vmem>>, vector<1x8x18x64xbf16>
      %97 = vector.shape_cast %96 : vector<1x8x18x64xbf16> to vector<8x18x64xbf16>
      %98 = vector.shape_cast %92 : vector<8x18x64xbf16> to vector<1x8x18x64xbf16>
      tpu.vector_store %arg9[%94, %95, %c0_43, %c0_44], %98 {strides = array<i32>} : memref<2x18x18x64xbf16, #tpu.memory_space<vmem>>, vector<1x8x18x64xbf16>,
    } else {
    }
    %c2_i32 = arith.constant 2 : i32
    %14 = arith.cmpi eq, %arg0, %c2_i32 : i32
    %c0_i32_6 = arith.constant 0 : i32
    %15 = arith.cmpi eq, %arg1, %c0_i32_6 : i32
    %16 = arith.andi %14, %15 : i1
    %c0_i32_7 = arith.constant 0 : i32
    %17 = arith.cmpi eq, %arg2, %c0_i32_7 : i32
    %18 = arith.andi %16, %17 : i1
    %19 = arith.extui %18 : i1 to i32
    %c0_i32_8 = arith.constant 0 : i32
    %20 = arith.cmpi ne, %19, %c0_i32_8 : i32
    scf.if %20 {
      %c0 = arith.constant 0 : index
      %c0_16 = arith.constant 0 : index
      %34 = vector.load %arg11[%c0, %c0_16] : memref<8x64xf32, #tpu.memory_space<vmem>>, vector<1x64xf32>
      %cst = arith.constant 0.001953125 : f32
      %35 = vector.broadcast %cst : f32 to vector<1x64xf32>
      %36 = arith.mulf %34, %35 : vector<1x64xf32>
      %c1 = arith.constant 1 : index
      %c0_17 = arith.constant 0 : index
      %37 = vector.load %arg11[%c1, %c0_17] : memref<8x64xf32, #tpu.memory_space<vmem>>, vector<1x64xf32>
      %cst_18 = arith.constant 0.001953125 : f32
      %38 = vector.broadcast %cst_18 : f32 to vector<1x64xf32>
      %39 = arith.mulf %37, %38 : vector<1x64xf32>
      %40 = arith.mulf %36, %36 : vector<1x64xf32>
      %41 = arith.subf %39, %40 : vector<1x64xf32>
      %cst_19 = arith.constant 0.000000e+00 : f32
      %42 = vector.broadcast %cst_19 : f32 to vector<1x64xf32>
      %43 = arith.maximumf %41, %42 : vector<1x64xf32>
      %c0_20 = arith.constant 0 : index
      %c0_21 = arith.constant 0 : index
      %44 = vector.load %arg6[%c0_20, %c0_21] : memref<5x64xf32, #tpu.memory_space<vmem>>, vector<1x64xf32>
      %cst_22 = arith.constant 9.99999974E-6 : f32
      %45 = vector.broadcast %cst_22 : f32 to vector<1x64xf32>
      %46 = arith.addf %43, %45 : vector<1x64xf32>
      %47 = math.rsqrt %46 : vector<1x64xf32>
      %48 = arith.mulf %44, %47 : vector<1x64xf32>
      %c4 = arith.constant 4 : index
      %c0_23 = arith.constant 0 : index
      %49 = vector.load %arg11[%c4, %c0_23] : memref<8x64xf32, #tpu.memory_space<vmem>>, vector<1x64xf32>
      tpu.vector_store %arg11[%c4, %c0_23], %48 {strides = array<i32>} : memref<8x64xf32, #tpu.memory_space<vmem>>, vector<1x64xf32>,
      %c1_24 = arith.constant 1 : index
      %c0_25 = arith.constant 0 : index
      %50 = vector.load %arg6[%c1_24, %c0_25] : memref<5x64xf32, #tpu.memory_space<vmem>>, vector<1x64xf32>
      %51 = arith.mulf %36, %48 : vector<1x64xf32>
      %52 = arith.subf %50, %51 : vector<1x64xf32>
      %c5 = arith.constant 5 : index
      %c0_26 = arith.constant 0 : index
      %53 = vector.load %arg11[%c5, %c0_26] : memref<8x64xf32, #tpu.memory_space<vmem>>, vector<1x64xf32>
      tpu.vector_store %arg11[%c5, %c0_26], %52 {strides = array<i32>} : memref<8x64xf32, #tpu.memory_space<vmem>>, vector<1x64xf32>,
    } else {
    }
    %c2_i32_9 = arith.constant 2 : i32
    %21 = arith.cmpi eq, %arg0, %c2_i32_9 : i32
    %22 = arith.extui %21 : i1 to i32
    %c0_i32_10 = arith.constant 0 : i32
    %23 = arith.cmpi ne, %22, %c0_i32_10 : i32
    scf.if %23 {
      %34 = arith.index_cast %arg1 : i32 to index
      %35 = arith.index_cast %0 : i32 to index
      %c0 = arith.constant 0 : index
      %c0_16 = arith.constant 0 : index
      %36 = vector.load %arg9[%34, %35, %c0, %c0_16] : memref<2x18x18x64xbf16, #tpu.memory_space<vmem>>, vector<1x10x18x64xbf16>
      %37 = vector.shape_cast %36 : vector<1x10x18x64xbf16> to vector<10x18x64xbf16>
      %38 = arith.extf %37 : vector<10x18x64xbf16> to vector<10x18x64xf32>
      %c4 = arith.constant 4 : index
      %c0_17 = arith.constant 0 : index
      %39 = vector.load %arg11[%c4, %c0_17] : memref<8x64xf32, #tpu.memory_space<vmem>>, vector<1x64xf32>
      %40 = vector.shape_cast %39 : vector<1x64xf32> to vector<1x1x64xf32>
      %41 = vector.broadcast %40 : vector<1x1x64xf32> to vector<10x18x64xf32>
      %42 = arith.mulf %38, %41 : vector<10x18x64xf32>
      %c5 = arith.constant 5 : index
      %c0_18 = arith.constant 0 : index
      %43 = vector.load %arg11[%c5, %c0_18] : memref<8x64xf32, #tpu.memory_space<vmem>>, vector<1x64xf32>
      %44 = vector.shape_cast %43 : vector<1x64xf32> to vector<1x1x64xf32>
      %45 = vector.broadcast %44 : vector<1x1x64xf32> to vector<10x18x64xf32>
      %46 = arith.addf %42, %45 : vector<10x18x64xf32>
      %47 = arith.negf %46 : vector<10x18x64xf32>
      %48 = math.exp %47 : vector<10x18x64xf32>
      %cst = arith.constant 1.000000e+00 : f32
      %49 = vector.broadcast %cst : f32 to vector<10x18x64xf32>
      %50 = arith.addf %49, %48 : vector<10x18x64xf32>
      %51 = arith.divf %49, %50 : vector<10x18x64xf32>
      %52 = arith.mulf %46, %51 : vector<10x18x64xf32>
      %53 = tpu.iota {dimensions = array<i32: 0>} : vector<10x18x64xi32>
      %54 = vector.broadcast %0 : i32 to vector<10x18x64xi32>
      %55 = arith.addi %53, %54 : vector<10x18x64xi32>
      %56 = tpu.iota {dimensions = array<i32: 1>} : vector<10x18x64xi32>
      %c1_i32_19 = arith.constant 1 : i32
      %57 = vector.broadcast %c1_i32_19 : i32 to vector<10x18x64xi32>
      %58 = arith.cmpi sge, %55, %57 : vector<10x18x64xi32>
      %c16_i32 = arith.constant 16 : i32
      %59 = vector.broadcast %c16_i32 : i32 to vector<10x18x64xi32>
      %60 = arith.cmpi sle, %55, %59 : vector<10x18x64xi32>
      %61 = arith.andi %58, %60 : vector<10x18x64xi1>
      %c1_i32_20 = arith.constant 1 : i32
      %62 = vector.broadcast %c1_i32_20 : i32 to vector<10x18x64xi32>
      %63 = arith.cmpi sge, %56, %62 : vector<10x18x64xi32>
      %64 = arith.andi %61, %63 : vector<10x18x64xi1>
      %c16_i32_21 = arith.constant 16 : i32
      %65 = vector.broadcast %c16_i32_21 : i32 to vector<10x18x64xi32>
      %66 = arith.cmpi sle, %56, %65 : vector<10x18x64xi32>
      %67 = arith.andi %64, %66 : vector<10x18x64xi1>
      %cst_22 = arith.constant 0.000000e+00 : f32
      %68 = vector.broadcast %cst_22 : f32 to vector<10x18x64xf32>
      %69 = arith.select %67, %52, %68 : vector<10x18x64xi1>, vector<10x18x64xf32>
      %70 = arith.truncf %69 : vector<10x18x64xf32> to vector<10x18x64xbf16>
      %71 = vector.extract_strided_slice %70 {offsets = [0, 0, 0], sizes = [10, 16, 64], strides = [1, 1, 1]} : vector<10x18x64xbf16> to vector<10x16x64xbf16>
      %72 = vector.extract_strided_slice %70 {offsets = [0, 1, 0], sizes = [10, 16, 64], strides = [1, 1, 1]} : vector<10x18x64xbf16> to vector<10x16x64xbf16>
      %73 = vector.extract_strided_slice %70 {offsets = [0, 2, 0], sizes = [10, 16, 64], strides = [1, 1, 1]} : vector<10x18x64xbf16> to vector<10x16x64xbf16>
      %74 = tpu.concatenate %71, %72, %73 in 2 : vector<10x16x64xbf16>, vector<10x16x64xbf16>, vector<10x16x64xbf16> -> vector<10x16x192xbf16>
      %cst_23 = arith.constant 0.000000e+00 : f32
      %75 = vector.broadcast %cst_23 : f32 to vector<128x64xf32>
      %76 = vector.extract_strided_slice %74 {offsets = [0, 0, 0], sizes = [8, 16, 192], strides = [1, 1, 1]} : vector<10x16x192xbf16> to vector<8x16x192xbf16>
      %77 = vector.shape_cast %76 : vector<8x16x192xbf16> to vector<128x192xbf16>
      %c0_24 = arith.constant 0 : index
      %c0_25 = arith.constant 0 : index
      %c0_26 = arith.constant 0 : index
      %78 = vector.load %arg5[%c0_24, %c0_25, %c0_26] : memref<3x192x64xbf16, #tpu.memory_space<vmem>>, vector<1x192x64xbf16>
      %79 = vector.shape_cast %78 : vector<1x192x64xbf16> to vector<192x64xbf16>
      %cst_27 = arith.constant dense<0.000000e+00> : vector<128x64xf32>
      %80 = tpu.matmul %77, %79, %cst_27 {dimension_numbers = #tpu.dot_dimension_numbers<[1], [0], [0], [1], [0, 0, 1, 1], [], []>} : vector<128x192xbf16>, vector<192x64xbf16>, vector<128x64xf32> -> vector<128x64xf32>
      %81 = arith.addf %75, %80 : vector<128x64xf32>
      %82 = vector.extract_strided_slice %74 {offsets = [1, 0, 0], sizes = [8, 16, 192], strides = [1, 1, 1]} : vector<10x16x192xbf16> to vector<8x16x192xbf16>
      %83 = vector.shape_cast %82 : vector<8x16x192xbf16> to vector<128x192xbf16>
      %c1 = arith.constant 1 : index
      %c0_28 = arith.constant 0 : index
      %c0_29 = arith.constant 0 : index
      %84 = vector.load %arg5[%c1, %c0_28, %c0_29] : memref<3x192x64xbf16, #tpu.memory_space<vmem>>, vector<1x192x64xbf16>
      %85 = vector.shape_cast %84 : vector<1x192x64xbf16> to vector<192x64xbf16>
      %cst_30 = arith.constant dense<0.000000e+00> : vector<128x64xf32>
      %86 = tpu.matmul %83, %85, %cst_30 {dimension_numbers = #tpu.dot_dimension_numbers<[1], [0], [0], [1], [0, 0, 1, 1], [], []>} : vector<128x192xbf16>, vector<192x64xbf16>, vector<128x64xf32> -> vector<128x64xf32>
      %87 = arith.addf %81, %86 : vector<128x64xf32>
      %88 = vector.extract_strided_slice %74 {offsets = [2, 0, 0], sizes = [8, 16, 192], strides = [1, 1, 1]} : vector<10x16x192xbf16> to vector<8x16x192xbf16>
      %89 = vector.shape_cast %88 : vector<8x16x192xbf16> to vector<128x192xbf16>
      %c2 = arith.constant 2 : index
      %c0_31 = arith.constant 0 : index
      %c0_32 = arith.constant 0 : index
      %90 = vector.load %arg5[%c2, %c0_31, %c0_32] : memref<3x192x64xbf16, #tpu.memory_space<vmem>>, vector<1x192x64xbf16>
      %91 = vector.shape_cast %90 : vector<1x192x64xbf16> to vector<192x64xbf16>
      %cst_33 = arith.constant dense<0.000000e+00> : vector<128x64xf32>
      %92 = tpu.matmul %89, %91, %cst_33 {dimension_numbers = #tpu.dot_dimension_numbers<[1], [0], [0], [1], [0, 0, 1, 1], [], []>} : vector<128x192xbf16>, vector<192x64xbf16>, vector<128x64xf32> -> vector<128x64xf32>
      %93 = arith.addf %87, %92 : vector<128x64xf32>
      %c2_34 = arith.constant 2 : index
      %c0_35 = arith.constant 0 : index
      %94 = vector.load %arg11[%c2_34, %c0_35] : memref<8x64xf32, #tpu.memory_space<vmem>>, vector<1x64xf32>
      %cst_36 = arith.constant dense<0.000000e+00> : vector<64xf32>
      %95 = vector.multi_reduction <add>, %93, %cst_36 [0] : vector<128x64xf32> to vector<64xf32>
      %96 = vector.shape_cast %95 : vector<64xf32> to vector<1x64xf32>
      %97 = arith.addf %94, %96 : vector<1x64xf32>
      %c2_37 = arith.constant 2 : index
      %c0_38 = arith.constant 0 : index
      %98 = vector.load %arg11[%c2_37, %c0_38] : memref<8x64xf32, #tpu.memory_space<vmem>>, vector<1x64xf32>
      tpu.vector_store %arg11[%c2_37, %c0_38], %97 {strides = array<i32>} : memref<8x64xf32, #tpu.memory_space<vmem>>, vector<1x64xf32>,
      %c3 = arith.constant 3 : index
      %c0_39 = arith.constant 0 : index
      %99 = vector.load %arg11[%c3, %c0_39] : memref<8x64xf32, #tpu.memory_space<vmem>>, vector<1x64xf32>
      %100 = arith.mulf %93, %93 : vector<128x64xf32>
      %cst_40 = arith.constant dense<0.000000e+00> : vector<64xf32>
      %101 = vector.multi_reduction <add>, %100, %cst_40 [0] : vector<128x64xf32> to vector<64xf32>
      %102 = vector.shape_cast %101 : vector<64xf32> to vector<1x64xf32>
      %103 = arith.addf %99, %102 : vector<1x64xf32>
      %c3_41 = arith.constant 3 : index
      %c0_42 = arith.constant 0 : index
      %104 = vector.load %arg11[%c3_41, %c0_42] : memref<8x64xf32, #tpu.memory_space<vmem>>, vector<1x64xf32>
      tpu.vector_store %arg11[%c3_41, %c0_42], %103 {strides = array<i32>} : memref<8x64xf32, #tpu.memory_space<vmem>>, vector<1x64xf32>,
      %105 = vector.shape_cast %93 : vector<128x64xf32> to vector<8x16x64xf32>
      %106 = arith.truncf %105 : vector<8x16x64xf32> to vector<8x16x64xbf16>
      %107 = arith.index_cast %arg1 : i32 to index
      %108 = arith.index_cast %0 : i32 to index
      %c0_43 = arith.constant 0 : index
      %c0_44 = arith.constant 0 : index
      %109 = vector.load %arg10[%107, %108, %c0_43, %c0_44] : memref<2x16x16x64xbf16, #tpu.memory_space<vmem>>, vector<1x8x16x64xbf16>
      %110 = vector.shape_cast %109 : vector<1x8x16x64xbf16> to vector<8x16x64xbf16>
      %111 = vector.shape_cast %106 : vector<8x16x64xbf16> to vector<1x8x16x64xbf16>
      tpu.vector_store %arg10[%107, %108, %c0_43, %c0_44], %111 {strides = array<i32>} : memref<2x16x16x64xbf16, #tpu.memory_space<vmem>>, vector<1x8x16x64xbf16>,
    } else {
    }
    %c3_i32 = arith.constant 3 : i32
    %24 = arith.cmpi eq, %arg0, %c3_i32 : i32
    %c0_i32_11 = arith.constant 0 : i32
    %25 = arith.cmpi eq, %arg1, %c0_i32_11 : i32
    %26 = arith.andi %24, %25 : i1
    %c0_i32_12 = arith.constant 0 : i32
    %27 = arith.cmpi eq, %arg2, %c0_i32_12 : i32
    %28 = arith.andi %26, %27 : i1
    %29 = arith.extui %28 : i1 to i32
    %c0_i32_13 = arith.constant 0 : i32
    %30 = arith.cmpi ne, %29, %c0_i32_13 : i32
    scf.if %30 {
      %c2 = arith.constant 2 : index
      %c0 = arith.constant 0 : index
      %34 = vector.load %arg11[%c2, %c0] : memref<8x64xf32, #tpu.memory_space<vmem>>, vector<1x64xf32>
      %cst = arith.constant 0.001953125 : f32
      %35 = vector.broadcast %cst : f32 to vector<1x64xf32>
      %36 = arith.mulf %34, %35 : vector<1x64xf32>
      %c3 = arith.constant 3 : index
      %c0_16 = arith.constant 0 : index
      %37 = vector.load %arg11[%c3, %c0_16] : memref<8x64xf32, #tpu.memory_space<vmem>>, vector<1x64xf32>
      %cst_17 = arith.constant 0.001953125 : f32
      %38 = vector.broadcast %cst_17 : f32 to vector<1x64xf32>
      %39 = arith.mulf %37, %38 : vector<1x64xf32>
      %40 = arith.mulf %36, %36 : vector<1x64xf32>
      %41 = arith.subf %39, %40 : vector<1x64xf32>
      %cst_18 = arith.constant 0.000000e+00 : f32
      %42 = vector.broadcast %cst_18 : f32 to vector<1x64xf32>
      %43 = arith.maximumf %41, %42 : vector<1x64xf32>
      %c2_19 = arith.constant 2 : index
      %c0_20 = arith.constant 0 : index
      %44 = vector.load %arg6[%c2_19, %c0_20] : memref<5x64xf32, #tpu.memory_space<vmem>>, vector<1x64xf32>
      %cst_21 = arith.constant 9.99999974E-6 : f32
      %45 = vector.broadcast %cst_21 : f32 to vector<1x64xf32>
      %46 = arith.addf %43, %45 : vector<1x64xf32>
      %47 = math.rsqrt %46 : vector<1x64xf32>
      %48 = arith.mulf %44, %47 : vector<1x64xf32>
      %c3_22 = arith.constant 3 : index
      %c0_23 = arith.constant 0 : index
      %49 = vector.load %arg6[%c3_22, %c0_23] : memref<5x64xf32, #tpu.memory_space<vmem>>, vector<1x64xf32>
      %50 = arith.mulf %36, %48 : vector<1x64xf32>
      %51 = arith.subf %49, %50 : vector<1x64xf32>
      %c4 = arith.constant 4 : index
      %c0_24 = arith.constant 0 : index
      %52 = vector.load %arg6[%c4, %c0_24] : memref<5x64xf32, #tpu.memory_space<vmem>>, vector<1x64xf32>
      %53 = arith.mulf %52, %48 : vector<1x64xf32>
      %c6 = arith.constant 6 : index
      %c0_25 = arith.constant 0 : index
      %54 = vector.load %arg11[%c6, %c0_25] : memref<8x64xf32, #tpu.memory_space<vmem>>, vector<1x64xf32>
      tpu.vector_store %arg11[%c6, %c0_25], %53 {strides = array<i32>} : memref<8x64xf32, #tpu.memory_space<vmem>>, vector<1x64xf32>,
      %c4_26 = arith.constant 4 : index
      %c0_27 = arith.constant 0 : index
      %55 = vector.load %arg6[%c4_26, %c0_27] : memref<5x64xf32, #tpu.memory_space<vmem>>, vector<1x64xf32>
      %56 = arith.mulf %55, %51 : vector<1x64xf32>
      %c7 = arith.constant 7 : index
      %c0_28 = arith.constant 0 : index
      %57 = vector.load %arg11[%c7, %c0_28] : memref<8x64xf32, #tpu.memory_space<vmem>>, vector<1x64xf32>
      tpu.vector_store %arg11[%c7, %c0_28], %56 {strides = array<i32>} : memref<8x64xf32, #tpu.memory_space<vmem>>, vector<1x64xf32>,
    } else {
    }
    %c3_i32_14 = arith.constant 3 : i32
    %31 = arith.cmpi eq, %arg0, %c3_i32_14 : i32
    %32 = arith.extui %31 : i1 to i32
    %c0_i32_15 = arith.constant 0 : i32
    %33 = arith.cmpi ne, %32, %c0_i32_15 : i32
    scf.if %33 {
      %34 = arith.index_cast %arg1 : i32 to index
      %35 = arith.index_cast %0 : i32 to index
      %c0 = arith.constant 0 : index
      %c0_16 = arith.constant 0 : index
      %36 = vector.load %arg10[%34, %35, %c0, %c0_16] : memref<2x16x16x64xbf16, #tpu.memory_space<vmem>>, vector<1x8x16x64xbf16>
      %37 = vector.shape_cast %36 : vector<1x8x16x64xbf16> to vector<8x16x64xbf16>
      %38 = arith.extf %37 : vector<8x16x64xbf16> to vector<8x16x64xf32>
      %c0_17 = arith.constant 0 : index
      %c0_18 = arith.constant 0 : index
      %c0_19 = arith.constant 0 : index
      %c0_20 = arith.constant 0 : index
      %39 = vector.load %arg3[%c0_17, %c0_18, %c0_19, %c0_20] : memref<1x8x16x64xf32, #tpu.memory_space<vmem>>, vector<1x8x16x64xf32>
      %40 = vector.shape_cast %39 : vector<1x8x16x64xf32> to vector<8x16x64xf32>
      %c6 = arith.constant 6 : index
      %c0_21 = arith.constant 0 : index
      %41 = vector.load %arg11[%c6, %c0_21] : memref<8x64xf32, #tpu.memory_space<vmem>>, vector<1x64xf32>
      %42 = vector.shape_cast %41 : vector<1x64xf32> to vector<1x1x64xf32>
      %43 = vector.broadcast %42 : vector<1x1x64xf32> to vector<8x16x64xf32>
      %44 = arith.mulf %38, %43 : vector<8x16x64xf32>
      %45 = arith.addf %40, %44 : vector<8x16x64xf32>
      %c7 = arith.constant 7 : index
      %c0_22 = arith.constant 0 : index
      %46 = vector.load %arg11[%c7, %c0_22] : memref<8x64xf32, #tpu.memory_space<vmem>>, vector<1x64xf32>
      %47 = vector.shape_cast %46 : vector<1x64xf32> to vector<1x1x64xf32>
      %48 = vector.broadcast %47 : vector<1x1x64xf32> to vector<8x16x64xf32>
      %49 = arith.addf %45, %48 : vector<8x16x64xf32>
      %c0_23 = arith.constant 0 : index
      %c0_24 = arith.constant 0 : index
      %c0_25 = arith.constant 0 : index
      %c0_26 = arith.constant 0 : index
      %50 = vector.load %arg7[%c0_23, %c0_24, %c0_25, %c0_26] : memref<1x8x16x64xf32, #tpu.memory_space<vmem>>, vector<1x8x16x64xf32>
      %51 = vector.shape_cast %50 : vector<1x8x16x64xf32> to vector<8x16x64xf32>
      %52 = vector.shape_cast %49 : vector<8x16x64xf32> to vector<1x8x16x64xf32>
      tpu.vector_store %arg7[%c0_23, %c0_24, %c0_25, %c0_26], %52 {strides = array<i32>} : memref<1x8x16x64xf32, #tpu.memory_space<vmem>>, vector<1x8x16x64xf32>,
    } else {
    }
    return
  }
  func.func @transform_0(%arg0: i32, %arg1: i32, %arg2: i32) -> (i32, i32, i32, i32) {
    %c0_i32 = arith.constant 0 : i32
    %0 = arith.cmpi eq, %arg0, %c0_i32 : i32
    %c3_i32 = arith.constant 3 : i32
    %1 = arith.cmpi eq, %arg0, %c3_i32 : i32
    %2 = arith.ori %0, %1 : i1
    %c0_i32_0 = arith.constant 0 : i32
    %3 = arith.select %2, %arg2, %c0_i32_0 : i32
    %c0_i32_1 = arith.constant 0 : i32
    %c0_i32_2 = arith.constant 0 : i32
    %c0_i32_3 = arith.constant 0 : i32
    return %arg1, %3, %c0_i32_1, %c0_i32_2 : i32, i32, i32, i32
  }
  func.func @transform_1(%arg0: i32, %arg1: i32, %arg2: i32) -> (i32, i32, i32) {
    %c0_i32 = arith.constant 0 : i32
    %c0_i32_0 = arith.constant 0 : i32
    %c0_i32_1 = arith.constant 0 : i32
    %c0_i32_2 = arith.constant 0 : i32
    return %c0_i32, %c0_i32_0, %c0_i32_1 : i32, i32, i32
  }
  func.func @transform_2(%arg0: i32, %arg1: i32, %arg2: i32) -> (i32, i32, i32) {
    %c0_i32 = arith.constant 0 : i32
    %c0_i32_0 = arith.constant 0 : i32
    %c0_i32_1 = arith.constant 0 : i32
    %c0_i32_2 = arith.constant 0 : i32
    return %c0_i32, %c0_i32_0, %c0_i32_1 : i32, i32, i32
  }
  func.func @transform_3(%arg0: i32, %arg1: i32, %arg2: i32) -> (i32, i32) {
    %c0_i32 = arith.constant 0 : i32
    %c0_i32_0 = arith.constant 0 : i32
    %c0_i32_1 = arith.constant 0 : i32
    return %c0_i32, %c0_i32_0 : i32, i32
  }
  func.func @transform_4(%arg0: i32, %arg1: i32, %arg2: i32) -> (i32, i32, i32, i32) {
    %c3_i32 = arith.constant 3 : i32
    %0 = arith.cmpi eq, %arg0, %c3_i32 : i32
    %c0_i32 = arith.constant 0 : i32
    %1 = arith.select %0, %arg2, %c0_i32 : i32
    %c0_i32_0 = arith.constant 0 : i32
    %c0_i32_1 = arith.constant 0 : i32
    %c0_i32_2 = arith.constant 0 : i32
    return %arg1, %1, %c0_i32_0, %c0_i32_1 : i32, i32, i32, i32
  }
}

</mosaic_0001>

<llo_original>
// kernel: tpu_custom_call.1
$region0: #{tpu_custom_call.1}
  #allocation0 [shape = 'u32[]', space=smem, size = 0x4, offset = 0x4, fixed_abs, tag = 'smem constant byte address 0x4 - core index']
  #allocation1 [shape = 'u32[144,128]{1,0:T(1,128)}', space=vmem, size = 0x12000, scoped, tag = 'internal scratch']
  #allocation2 [shape = 'bf16[2,18,18,64]{3,2,1,0:T(8,128)(2,1)}', space=vmem, size = 0x36000, scoped, tag = 'scratch operand']
  #allocation3 [shape = 'bf16[2,18,18,64]{3,2,1,0:T(8,128)(2,1)}', space=vmem, size = 0x36000, scoped, tag = 'scratch operand']
  #allocation4 [shape = 'bf16[2,16,16,64]{3,2,1,0:T(16,128)(2,1)}', space=vmem, size = 0x20000, scoped, tag = 'scratch operand']
  #allocation5 [shape = 'f32[8,64]{1,0:T(8,128)}', space=vmem, size = 0x1000, scoped, tag = 'scratch operand']
  %s0 = inlined_call_operand.vmem [shape: f32[2,16,16,64], index: 0, kind: input, shape index: {}]
  %s1 = inlined_call_operand.vmem [shape: bf16[3,192,64], index: 1, kind: input, shape index: {}]
  %s2 = inlined_call_operand.vmem [shape: bf16[3,192,64], index: 2, kind: input, shape index: {}]
  %s3 = inlined_call_operand.vmem [shape: f32[5,64], index: 3, kind: input, shape index: {}]
  %s4 = inlined_call_operand.hbm [shape: f32[2,16,16,64], index: 4, kind: output, shape index: {}]
  %s5 = sld [smem:[#allocation0]]
  $region77: #{tpu_custom_call.1} parent=0
    _
  %s7 = ssub.s32 1, %s5
  %s8 = scalar_select 0, %s7, %s5
  $region1: #{tpu_custom_call.1} parent=0
    #allocation6 [shape = 'u8[131072]{0}', space=vmem, size = 0x20000, scoped, tag = 'output window, operand 0']
    #allocation7 [shape = 's32[2]{0}', space=sflag, size = 0x8, scoped, tag = 'scoped memory for tpu_custom_call.1']
    %9 = vsyncpa [#allocation7], 0
    %s10 = scalar_lea.sflag [#allocation7], 1
    %11 = vsyncpa %s10, 0
    loop: start=0, step=1, limit=18
    $region2: #{tpu_custom_call.1} parent=1 // loop_pre_header
      _
    $region3: #{tpu_custom_call.1} parent=1 // loop_header
      %s13 = sphi 0, %s17
      %p14 = scmp.ge.s32.totalorder %s13, 18
      %s20 = sphi 0, %s39
      %s21 = sphi 0, %s35
      %s22 = sphi 0, %s31
      %s23 = sphi 0, %s20
      %s24 = sphi 0, %s21
      %s25 = sphi 0, %s22
      %s26 = sphi 0, %s23
      %s27 = sphi 0, %s24
      %s28 = sphi 0, %s25
      %s52 = sphi 0, %s54
      %s55 = sphi 0, %s52
      %s56 = sphi 0, %s55
      %s72 = sphi 0, %s56
      %s76 = sphi 0, %s76
      %s78 = sphi 0, %s76
      %s79 = sphi 0, %s78
      %s93 = sphi 0, %s79
      %s97 = sphi 0, %s97
      %s99 = sphi 0, %s97
      %s100 = sphi 0, %s99
      %s114 = sphi 0, %s100
      %s118 = sphi 0, %s118
      %s120 = sphi 0, %s118
      %s121 = sphi 0, %s120
      %s135 = sphi 0, %s121
      %s147 = sphi 0, %s149
      %s150 = sphi 0, %s147
      %s151 = sphi 0, %s150
      %s167 = sphi 0, %s151
    $region4: #{tpu_custom_call.1} parent=1 // loop_header_branch
      %16 = sbr.rel (%p14) target = $region8
    $region5: #{tpu_custom_call.1} parent=1 // loop_body
      %s18 = ssub.s32 %s13, 1
      %s19 = ssub.s32 %s13, 2
      %s29 = sadd.s32 1, %s22
      %p30 = scmp.ge.s32.totalorder %s29, 2
      %s31 = scalar_select %p30, 0, %s29
      %s32 = sadd.s32 1, %s21
      %s33 = scalar_select %p30, %s32, %s21
      %p34 = scmp.ge.s32.totalorder %s33, 2
      %s35 = scalar_select %p34, 0, %s33
      %s36 = sadd.s32 1, %s20
      %s37 = scalar_select %p34, %s36, %s20
      %p38 = scmp.ge.s32.totalorder %s37, 4
      %s39 = scalar_select %p38, 0, %s37
      %p40 = scmp.eq.s32.totalorder %s20, 0
      %p41 = scmp.eq.s32.totalorder %s20, 3
      %p42 = por %p40, %p41
      %s43 = scalar_select %p42, %s22, 0
      %p44 = scmp.eq.s32.totalorder %s39, 0
      %p45 = scmp.eq.s32.totalorder %s39, 3
      %p46 = por %p44, %p45
      %s47 = scalar_select %p46, %s31, 0
      %s48 = ssub.s32 %s21, %s35
      %s49 = ssub.s32 %s43, %s47
      %s50 = sor.u32 %s48, %s49
      %p51 = scmp.eq.s32.totalorder %s50, 0
      %s53 = sadd.s32 %s52, 1
      %s54 = scalar_select %p51, %s52, %s53
      %p57 = pneg %p51
      %p58 = scmp.eq.s32.totalorder %s13, 15
      %p59 = por %p57, %p58
      %p60 = scmp.ne.s32.totalorder %s52, %s55
      %p61 = scmp.eq.s32.totalorder %s13, 0
      %p62 = por %p60, %p61
      %p63 = scmp.ne.s32.totalorder %s52, %s55
      %p64 = scmp.eq.s32.totalorder %s18, 15
      %p65 = por %p63, %p64
      %p66 = scmp.ne.s32.totalorder %s55, %s56
      %p67 = scmp.eq.s32.totalorder %s18, 0
      %p68 = por %p66, %p67
      %p69 = scmp.ne.s32.totalorder %s55, %s56
      %p70 = scmp.eq.s32.totalorder %s19, 15
      %p71 = por %p69, %p70
      %p73 = scmp.ne.s32.totalorder %s56, %s72
      %p74 = scmp.eq.s32.totalorder %s19, 0
      %p75 = por %p73, %p74
      %s77 = sadd.s32 %s76, 1
      %p80 = scmp.eq.s32.totalorder %s13, 15
      %p81 = scmp.ne.s32.totalorder %s76, %s78
      %p82 = scmp.eq.s32.totalorder %s13, 0
      %p83 = por %p81, %p82
      %p84 = scmp.ne.s32.totalorder %s76, %s78
      %p85 = scmp.eq.s32.totalorder %s18, 15
      %p86 = por %p84, %p85
      %p87 = scmp.ne.s32.totalorder %s78, %s79
      %p88 = scmp.eq.s32.totalorder %s18, 0
      %p89 = por %p87, %p88
      %p90 = scmp.ne.s32.totalorder %s78, %s79
      %p91 = scmp.eq.s32.totalorder %s19, 15
      %p92 = por %p90, %p91
      %p94 = scmp.ne.s32.totalorder %s79, %s93
      %p95 = scmp.eq.s32.totalorder %s19, 0
      %p96 = por %p94, %p95
      %s98 = sadd.s32 %s97, 1
      %p101 = scmp.eq.s32.totalorder %s13, 15
      %p102 = scmp.ne.s32.totalorder %s97, %s99
      %p103 = scmp.eq.s32.totalorder %s13, 0
      %p104 = por %p102, %p103
      %p105 = scmp.ne.s32.totalorder %s97, %s99
      %p106 = scmp.eq.s32.totalorder %s18, 15
      %p107 = por %p105, %p106
      %p108 = scmp.ne.s32.totalorder %s99, %s100
      %p109 = scmp.eq.s32.totalorder %s18, 0
      %p110 = por %p108, %p109
      %p111 = scmp.ne.s32.totalorder %s99, %s100
      %p112 = scmp.eq.s32.totalorder %s19, 15
      %p113 = por %p111, %p112
      %p115 = scmp.ne.s32.totalorder %s100, %s114
      %p116 = scmp.eq.s32.totalorder %s19, 0
      %p117 = por %p115, %p116
      %s119 = sadd.s32 %s118, 1
      %p122 = scmp.eq.s32.totalorder %s13, 15
      %p123 = scmp.ne.s32.totalorder %s118, %s120
      %p124 = scmp.eq.s32.totalorder %s13, 0
      %p125 = por %p123, %p124
      %p126 = scmp.ne.s32.totalorder %s118, %s120
      %p127 = scmp.eq.s32.totalorder %s18, 15
      %p128 = por %p126, %p127
      %p129 = scmp.ne.s32.totalorder %s120, %s121
      %p130 = scmp.eq.s32.totalorder %s18, 0
      %p131 = por %p129, %p130
      %p132 = scmp.ne.s32.totalorder %s120, %s121
      %p133 = scmp.eq.s32.totalorder %s19, 15
      %p134 = por %p132, %p133
      %p136 = scmp.ne.s32.totalorder %s121, %s135
      %p137 = scmp.eq.s32.totalorder %s19, 0
      %p138 = por %p136, %p137
      %p139 = scmp.eq.s32.totalorder %s20, 3
      %s140 = scalar_select %p139, %s22, 0
      %p141 = scmp.eq.s32.totalorder %s39, 3
      %s142 = scalar_select %p141, %s31, 0
      %s143 = ssub.s32 %s21, %s35
      %s144 = ssub.s32 %s140, %s142
      %s145 = sor.u32 %s143, %s144
      %p146 = scmp.eq.s32.totalorder %s145, 0
      %s148 = sadd.s32 %s147, 1
      %s149 = scalar_select %p146, %s147, %s148
      %p152 = pneg %p146
      %p153 = scmp.eq.s32.totalorder %s13, 15
      %p154 = por %p152, %p153
      %p155 = scmp.ne.s32.totalorder %s147, %s150
      %p156 = scmp.eq.s32.totalorder %s13, 0
      %p157 = por %p155, %p156
      %p158 = scmp.ne.s32.totalorder %s147, %s150
      %p159 = scmp.eq.s32.totalorder %s18, 15
      %p160 = por %p158, %p159
      %p161 = scmp.ne.s32.totalorder %s150, %s151
      %p162 = scmp.eq.s32.totalorder %s18, 0
      %p163 = por %p161, %p162
      %p164 = scmp.ne.s32.totalorder %s150, %s151
      %p165 = scmp.eq.s32.totalorder %s19, 15
      %p166 = por %p164, %p165
      %p168 = scmp.ne.s32.totalorder %s151, %s167
      %p169 = scmp.eq.s32.totalorder %s19, 0
      %p170 = por %p168, %p169
      %p171 = scmp.le.s32.totalorder 1, %s13
      %p172 = scmp.lt.s32.totalorder %s13, 17
      %p173 = pnand %p171, %p172
      %p174 = pneg %p173
      // Predicated region
      $region9: #{tpu_custom_call.1} parent=5 // pred_check
        _
      $region10: #{tpu_custom_call.1} parent=5 // pred_check_branch
        %176 = sbr.rel (%p173) target = $region12
      $region11: #{tpu_custom_call.1} parent=5 // pred_region
        %s177 = ssub.s32 %s13, 1
        // Predicated region
        $region13: #{tpu_custom_call.1} parent=11 // pred_check
          %p178 = pneg %p89
        $region14: #{tpu_custom_call.1} parent=11 // pred_check_branch
          %180 = sbr.rel (%p178) target = $region16
        $region15: #{tpu_custom_call.1} parent=11 // pred_region
          _
        $region16: #{tpu_custom_call.1} parent=11 // pred_fallthru
          _
        // Predicated region
        $region17: #{tpu_custom_call.1} parent=11 // pred_check
          %p181 = pneg %p110
        $region18: #{tpu_custom_call.1} parent=11 // pred_check_branch
          %183 = sbr.rel (%p181) target = $region20
        $region19: #{tpu_custom_call.1} parent=11 // pred_region
          _
        $region20: #{tpu_custom_call.1} parent=11 // pred_fallthru
          _
        // Predicated region
        $region21: #{tpu_custom_call.1} parent=11 // pred_check
          %p184 = pneg %p131
        $region22: #{tpu_custom_call.1} parent=11 // pred_check_branch
          %186 = sbr.rel (%p184) target = $region24
        $region23: #{tpu_custom_call.1} parent=11 // pred_region
          _
        $region24: #{tpu_custom_call.1} parent=11 // pred_fallthru
          _
      $region12: #{tpu_custom_call.1} parent=5 // pred_fallthru
        _
      %p187 = scmp.lt.s32.totalorder %s13, 16
      // Predicated region
      $region25: #{tpu_custom_call.1} parent=5 // pred_check
        %p188 = pneg %p187
      $region26: #{tpu_custom_call.1} parent=5 // pred_check_branch
        %190 = sbr.rel (%p188) target = $region28
      $region27: #{tpu_custom_call.1} parent=5 // pred_region
        // Predicated region
        $region29: #{tpu_custom_call.1} parent=27 // pred_check
          %p191 = pneg %p62
        $region30: #{tpu_custom_call.1} parent=27 // pred_check_branch
          %193 = sbr.rel (%p191) target = $region32
        $region31: #{tpu_custom_call.1} parent=27 // pred_region
          %p194 = scmp.eq.s32.totalorder %s20, 0
          %p195 = scmp.eq.s32.totalorder %s20, 3
          %p196 = por %p194, %p195
          %s197 = scalar_select %p196, %s22, 0
          %s198 = smul.u32 8, %s197
          %p199 = scmp.lt.s32.totalorder %s21, 1
          %s200 = scalar_select %p199, %s21, 1
          %p201 = scmp.lt.s32.totalorder %s198, 15
          %s202 = scalar_select %p201, %s198, 15
          %s203 = smul.addr %s202, 2
          %s204 = smul.addr %s200, 32
          %s205 = sadd.s32 %s203, %s204
          %s206 = smul.addr %s205, 8
          %s207 = scalar_lea.vmem %s0, %s206
          %p208 = scmp.eq.s32.totalorder %s20, 0
          %p209 = scmp.eq.s32.totalorder %s20, 3
          %p210 = por %p208, %p209
          %s211 = scalar_select %p210, %s22, 0
          %s212 = smul.u32 8, %s211
        $region32: #{tpu_custom_call.1} parent=27 // pred_fallthru
          _
      $region28: #{tpu_custom_call.1} parent=5 // pred_fallthru
        _
      %p213 = scmp.le.s32.totalorder 1, %s13
      %p214 = scmp.lt.s32.totalorder %s13, 17
      %p215 = pnand %p213, %p214
      %p216 = pneg %p215
      // Predicated region
      $region33: #{tpu_custom_call.1} parent=5 // pred_check
        _
      $region34: #{tpu_custom_call.1} parent=5 // pred_check_branch
        %218 = sbr.rel (%p215) target = $region36
      $region35: #{tpu_custom_call.1} parent=5 // pred_region
        %s219 = ssub.s32 %s13, 1
        %p220 = scmp.eq.s32.totalorder %s23, 0
        %p221 = scmp.eq.s32.totalorder %s23, 3
        %p222 = por %p220, %p221
        %s223 = scalar_select %p222, %s25, 0
        %s224 = smul.u32 8, %s223
        %p225 = scmp.lt.s32.totalorder %s24, 1
        %s226 = scalar_select %p225, %s24, 1
        %p227 = scmp.lt.s32.totalorder %s224, 15
        %s228 = scalar_select %p227, %s224, 15
        %s229 = smul.addr %s228, 2
        %s230 = smul.addr %s226, 32
        %s231 = sadd.s32 %s229, %s230
        %s232 = smul.addr %s231, 8
        %s233 = scalar_lea.vmem %s0, %s232
        %p234 = pneg %p68
        %p235 = pneg %p65
        %p236 = pneg %p89
        %p237 = pneg %p86
        %p238 = pneg %p110
        %p239 = pneg %p107
        %p240 = pneg %p131
        %p241 = pneg %p128
        %p242 = pneg %p163
        %p243 = pneg %p160
        %s244 = sand.u32 %s150, 1
        %s245 = scalar_lea.sflag [#allocation7], %s244
        %s246 = sand.u32 %s150, 1
        %s247 = smul.addr %s246, 128
        %s248 = scalar_lea.vmem [#allocation6], %s247
        %p249 = scmp.eq.s32.totalorder %s23, 0
        %p250 = scmp.eq.s32.totalorder %s23, 3
        %p251 = por %p249, %p250
        %s252 = scalar_select %p251, %s25, 0
        %s253 = smul.u32 8, %s252
        %p254 = scmp.lt.s32.totalorder %s24, 1
        %s255 = scalar_select %p254, %s24, 1
        %p256 = scmp.lt.s32.totalorder %s253, 15
        %s257 = scalar_select %p256, %s253, 15
        %s258 = smul.addr %s257, 2
        %s259 = smul.addr %s255, 32
        %s260 = sadd.s32 %s258, %s259
        %s261 = smul.addr %s260, 8
        %s262 = scalar_lea.vmem %s0, %s261
        %p263 = scmp.eq.s32.totalorder %s23, 0
        %p264 = scmp.eq.s32.totalorder %s23, 3
        %p265 = por %p263, %p264
        %s266 = scalar_select %p265, %s25, 0
        %s267 = smul.u32 8, %s266
        %p268 = scmp.eq.s32.totalorder %s23, 3
        %s269 = scalar_select %p268, %s25, 0
        %s270 = smul.u32 8, %s269
        %s272 = smul.u32 %s25, 8
        %p273 = scmp.eq.s32.totalorder %s23, 0
        %p274 = scmp.eq.s32.totalorder %s24, 0
        %p275 = pnand %p273, %p274
        %p276 = pneg %p275
        %p277 = scmp.eq.s32.totalorder %s25, 0
        %p278 = pnand %p276, %p277
        %p279 = pneg %p278
        // Predicated region
        $region37: #{tpu_custom_call.1} parent=35 // pred_check
          _
        $region38: #{tpu_custom_call.1} parent=35 // pred_check_branch
          %281 = sbr.rel (%p278) target = $region40
        $region39: #{tpu_custom_call.1} parent=35 // pred_region
          %vm282 = vcmask 523264
          %283 = vst.msk [vmem:[#allocation5] sm:$0xff] %vm282, 0.0
        $region40: #{tpu_custom_call.1} parent=35 // pred_fallthru
          _
        // Predicated region
        $region41: #{tpu_custom_call.1} parent=35 // pred_check
          %p284 = pneg %p273
        $region42: #{tpu_custom_call.1} parent=35 // pred_check_branch
          %286 = sbr.rel (%p284) target = $region44
        $region43: #{tpu_custom_call.1} parent=35 // pred_region
          %v287 = vld [vmem:[%s262] sm:$0xff]
          %v288 = vld [vmem:[%s262 + $0x8] sm:$0xff]
          %v289 = vld [vmem:[%s262 + $0x10] sm:$0xff]
          %v290 = vld [vmem:[%s262 + $0x18] sm:$0xff]
          %v291 = vld [vmem:[%s262 + $0x20] sm:$0xff]
          %v292 = vld [vmem:[%s262 + $0x28] sm:$0xff]
          %v293 = vld [vmem:[%s262 + $0x30] sm:$0xff]
          %v294 = vld [vmem:[%s262 + $0x38] sm:$0xff]
          %v295 = vld [vmem:[%s262 + $0x40] sm:$0xff]
          %v296 = vld [vmem:[%s262 + $0x48] sm:$0xff]
          %v297 = vld [vmem:[%s262 + $0x50] sm:$0xff]
          %v298 = vld [vmem:[%s262 + $0x58] sm:$0xff]
          %v299 = vld [vmem:[%s262 + $0x60] sm:$0xff]
          %v300 = vld [vmem:[%s262 + $0x68] sm:$0xff]
          %v301 = vld [vmem:[%s262 + $0x70] sm:$0xff]
          %v302 = vld [vmem:[%s262 + $0x78] sm:$0xff]
          %v303 = vpack.c.bf16 %v288, %v287
          %v304 = vpack.c.bf16 %v290, %v289
          %v305 = vpack.c.bf16 %v292, %v291
          %v306 = vpack.c.bf16 %v294, %v293
          %v307 = vpack.c.bf16 %v296, %v295
          %v308 = vpack.c.bf16 %v298, %v297
          %v309 = vpack.c.bf16 %v300, %v299
          %v310 = vpack.c.bf16 %v302, %v301
          %v312 = vshrl.u32 %v303, 16
          %v314 = vrot.slane %v312, 7
          %v315 = vshll.u32 %v303, 16
          %v317 = vor.u32 %v314, %v315
          %v319 = vshrl.u32 %v304, 16
          %v321 = vrot.slane %v319, 7
          %v322 = vshll.u32 %v304, 16
          %v324 = vor.u32 %v321, %v322
          %v326 = vshrl.u32 %v305, 16
          %v328 = vrot.slane %v326, 7
          %v329 = vshll.u32 %v305, 16
          %v331 = vor.u32 %v328, %v329
          %v333 = vshrl.u32 %v306, 16
          %v335 = vrot.slane %v333, 7
          %v336 = vshll.u32 %v306, 16
          %v338 = vor.u32 %v335, %v336
          %v340 = vshrl.u32 %v307, 16
          %v342 = vrot.slane %v340, 7
          %v343 = vshll.u32 %v307, 16
          %v345 = vor.u32 %v342, %v343
          %v347 = vshrl.u32 %v308, 16
          %v349 = vrot.slane %v347, 7
          %v350 = vshll.u32 %v308, 16
          %v352 = vor.u32 %v349, %v350
          %v354 = vshrl.u32 %v309, 16
          %v356 = vrot.slane %v354, 7
          %v357 = vshll.u32 %v309, 16
          %v359 = vor.u32 %v356, %v357
          %v361 = vshrl.u32 %v310, 16
          %v363 = vrot.slane %v361, 7
          %v364 = vshll.u32 %v310, 16
          %v366 = vor.u32 %v363, %v364
          %vm383 = vcmask 1040384
          %vm384 = vsmask.f32 256
          %vm385 = vmand %vm383, %vm384
          %v386 = vsel %vm385, 0, %v317
          %v387 = vsel %vm385, 0, %v324
          %v388 = vsel %vm385, 0, %v331
          %v389 = vsel %vm385, 0, %v338
          %v390 = vsel %vm385, 0, %v345
          %v391 = vsel %vm385, 0, %v352
          %v392 = vsel %vm385, 0, %v359
          %v393 = vsel %vm385, 0, %v366
          %v394 = vsel %vm385, %v314, 0
          %v395 = vsel %vm385, %v321, 0
          %v396 = vsel %vm385, %v328, 0
          %v397 = vsel %vm385, %v335, 0
          %v398 = vsel %vm385, %v342, 0
          %v399 = vsel %vm385, %v349, 0
          %v400 = vsel %vm385, %v356, 0
          %v401 = vsel %vm385, %v363, 0
          %s402 = sadd.s32 %s272, 1
          %v419 = vunpack.c.l.b16 %v386
          %v420 = vunpack.c.h.b16 %v386
          %v421 = vunpack.c.l.b16 %v394
          %v422 = vunpack.c.l.b16 %v387
          %v423 = vunpack.c.h.b16 %v387
          %v424 = vunpack.c.l.b16 %v395
          %v425 = vunpack.c.l.b16 %v388
          %v426 = vunpack.c.h.b16 %v388
          %v427 = vunpack.c.l.b16 %v396
          %v428 = vunpack.c.l.b16 %v389
          %v429 = vunpack.c.h.b16 %v389
          %v430 = vunpack.c.l.b16 %v397
          %v431 = vunpack.c.l.b16 %v390
          %v432 = vunpack.c.h.b16 %v390
          %v433 = vunpack.c.l.b16 %v398
          %v434 = vunpack.c.l.b16 %v391
          %v435 = vunpack.c.h.b16 %v391
          %v436 = vunpack.c.l.b16 %v399
          %v437 = vunpack.c.l.b16 %v392
          %v438 = vunpack.c.h.b16 %v392
          %v439 = vunpack.c.l.b16 %v400
          %v440 = vunpack.c.l.b16 %v393
          %v441 = vunpack.c.h.b16 %v393
          %v442 = vunpack.c.l.b16 %v401
          %v443 = vpack.c.b16 %v419, %v419
          %v444 = vpack.c.b16 %v420, %v420
          %v445 = vpack.c.b16 %v421, %v421
          %v446 = vpack.c.b16 %v422, %v422
          %v447 = vpack.c.b16 %v423, %v423
          %v448 = vpack.c.b16 %v424, %v424
          %v449 = vpack.c.b16 %v425, %v425
          %v450 = vpack.c.b16 %v426, %v426
          %v451 = vpack.c.b16 %v427, %v427
          %v452 = vpack.c.b16 %v428, %v428
          %v453 = vpack.c.b16 %v429, %v429
          %v454 = vpack.c.b16 %v430, %v430
          %v455 = vpack.c.b16 %v431, %v431
          %v456 = vpack.c.b16 %v432, %v432
          %v457 = vpack.c.b16 %v433, %v433
          %v458 = vpack.c.b16 %v434, %v434
          %v459 = vpack.c.b16 %v435, %v435
          %v460 = vpack.c.b16 %v436, %v436
          %v461 = vpack.c.b16 %v437, %v437
          %v462 = vpack.c.b16 %v438, %v438
          %v463 = vpack.c.b16 %v439, %v439
          %v464 = vpack.c.b16 %v440, %v440
          %v465 = vpack.c.b16 %v441, %v441
          %v466 = vpack.c.b16 %v442, %v442
          %s491 = smul.u32 %s402, 3
          %s492 = smul.u32 %s24, 54
          %s493 = sadd.s32 %s491, %s492
          %s494 = smul.addr %s493, 4
          %s495 = scalar_lea.vmem [#allocation2], %s494
          %vm496 = vcmask 519168
          %497 = vst.msk [vmem:[%s495] sm:$0xf] %vm496, %v443
          %498 = vst.msk [vmem:[%s495 + $0x4] sm:$0xf] %vm496, %v444
          %vm499 = vcmask 516096
          %500 = vst.msk [vmem:[%s495 + $0x8] sm:$0x1] %vm499, %v445
          %501 = vst.msk [vmem:[%s495 + $0xc] sm:$0xf] %vm496, %v446
          %502 = vst.msk [vmem:[%s495 + $0x10] sm:$0xf] %vm496, %v447
          %503 = vst.msk [vmem:[%s495 + $0x14] sm:$0x1] %vm499, %v448
          %504 = vst.msk [vmem:[%s495 + $0x18] sm:$0xf] %vm496, %v449
          %505 = vst.msk [vmem:[%s495 + $0x1c] sm:$0xf] %vm496, %v450
          %506 = vst.msk [vmem:[%s495 + $0x20] sm:$0x1] %vm499, %v451
          %507 = vst.msk [vmem:[%s495 + $0x24] sm:$0xf] %vm496, %v452
          %508 = vst.msk [vmem:[%s495 + $0x28] sm:$0xf] %vm496, %v453
          %509 = vst.msk [vmem:[%s495 + $0x2c] sm:$0x1] %vm499, %v454
          %510 = vst.msk [vmem:[%s495 + $0x30] sm:$0xf] %vm496, %v455
          %511 = vst.msk [vmem:[%s495 + $0x34] sm:$0xf] %vm496, %v456
          %512 = vst.msk [vmem:[%s495 + $0x38] sm:$0x1] %vm499, %v457
          %513 = vst.msk [vmem:[%s495 + $0x3c] sm:$0xf] %vm496, %v458
          %514 = vst.msk [vmem:[%s495 + $0x40] sm:$0xf] %vm496, %v459
          %515 = vst.msk [vmem:[%s495 + $0x44] sm:$0x1] %vm499, %v460
          %516 = vst.msk [vmem:[%s495 + $0x48] sm:$0xf] %vm496, %v461
          %517 = vst.msk [vmem:[%s495 + $0x4c] sm:$0xf] %vm496, %v462
          %518 = vst.msk [vmem:[%s495 + $0x50] sm:$0x1] %vm499, %v463
          %519 = vst.msk [vmem:[%s495 + $0x54] sm:$0xf] %vm496, %v464
          %520 = vst.msk [vmem:[%s495 + $0x58] sm:$0xf] %vm496, %v465
          %521 = vst.msk [vmem:[%s495 + $0x5c] sm:$0x1] %vm499, %v466
        $region44: #{tpu_custom_call.1} parent=35 // pred_fallthru
          _
        %p522 = scmp.eq.s32.totalorder %s23, 1
        // Predicated region
        $region45: #{tpu_custom_call.1} parent=35 // pred_check
          %p523 = pneg %p522
        $region46: #{tpu_custom_call.1} parent=35 // pred_check_branch
          %525 = sbr.rel (%p523) target = $region48
        $region47: #{tpu_custom_call.1} parent=35 // pred_region
          %s526 = smul.u32 %s272, 3
          %s527 = smul.u32 %s24, 54
          %s528 = sadd.s32 %s526, %s527
          %s529 = smul.addr %s528, 4
          %s530 = scalar_lea.vmem [#allocation2], %s529
          %v531 = vld [vmem:[%s530] sm:$0xf]
          %v532 = vld [vmem:[%s530 + $0x4] sm:$0xf]
          %v533 = vld [vmem:[%s530 + $0x8] sm:$0x1]
          %v534 = vld [vmem:[%s530 + $0xc] sm:$0xf]
          %v535 = vld [vmem:[%s530 + $0x10] sm:$0xf]
          %v536 = vld [vmem:[%s530 + $0x14] sm:$0x1]
          %v537 = vld [vmem:[%s530 + $0x18] sm:$0xf]
          %v538 = vld [vmem:[%s530 + $0x1c] sm:$0xf]
          %v539 = vld [vmem:[%s530 + $0x20] sm:$0x1]
          %v540 = vld [vmem:[%s530 + $0x24] sm:$0xf]
          %v541 = vld [vmem:[%s530 + $0x28] sm:$0xf]
          %v542 = vld [vmem:[%s530 + $0x2c] sm:$0x1]
          %v543 = vld [vmem:[%s530 + $0x30] sm:$0xf]
          %v544 = vld [vmem:[%s530 + $0x34] sm:$0xf]
          %v545 = vld [vmem:[%s530 + $0x38] sm:$0x1]
          %v546 = vld [vmem:[%s530 + $0x3c] sm:$0xf]
          %v547 = vld [vmem:[%s530 + $0x40] sm:$0xf]
          %v548 = vld [vmem:[%s530 + $0x44] sm:$0x1]
          %v549 = vld [vmem:[%s530 + $0x48] sm:$0xf]
          %v550 = vld [vmem:[%s530 + $0x4c] sm:$0xf]
          %v551 = vld [vmem:[%s530 + $0x50] sm:$0x1]
          %v552 = vld [vmem:[%s530 + $0x54] sm:$0xf]
          %v553 = vld [vmem:[%s530 + $0x58] sm:$0xf]
          %v554 = vld [vmem:[%s530 + $0x5c] sm:$0x1]
          %v555 = vld [vmem:[%s530 + $0x60] sm:$0xf]
          %v556 = vld [vmem:[%s530 + $0x64] sm:$0xf]
          %v557 = vld [vmem:[%s530 + $0x68] sm:$0x1]
          %v558 = vld [vmem:[%s530 + $0x6c] sm:$0xf]
          %v559 = vld [vmem:[%s530 + $0x70] sm:$0xf]
          %v560 = vld [vmem:[%s530 + $0x74] sm:$0x1]
          %v561 = vstv %s272
          %v562 = vadd.s32 %v561, 1
          %v563 = vadd.s32 %v561, 2
          %v564 = vadd.s32 %v561, 3
          %v565 = vadd.s32 %v561, 4
          %v566 = vadd.s32 %v561, 5
          %v567 = vadd.s32 %v561, 6
          %v568 = vadd.s32 %v561, 7
          %v569 = vadd.s32 %v561, 8
          %v570 = vadd.s32 %v561, 9
          %v571 = vlaneseq
          %v572 = vshrl.u32 %v571, 7
          %v573 = vadd.s32 %v572, 8
          %v574 = vadd.s32 %v572, 16
          %vm575 = vcmp.ge.s32.totalorder %v561, 1
          %vm576 = vcmp.ge.s32.totalorder %v562, 1
          %vm577 = vcmp.ge.s32.totalorder %v563, 1
          %vm578 = vcmp.ge.s32.totalorder %v564, 1
          %vm579 = vcmp.ge.s32.totalorder %v565, 1
          %vm580 = vcmp.ge.s32.totalorder %v566, 1
          %vm581 = vcmp.ge.s32.totalorder %v567, 1
          %vm582 = vcmp.ge.s32.totalorder %v568, 1
          %vm583 = vcmp.ge.s32.totalorder %v569, 1
          %vm584 = vcmp.ge.s32.totalorder %v570, 1
          %vm585 = vcmp.le.s32.totalorder %v561, 16
          %vm586 = vcmp.le.s32.totalorder %v562, 16
          %vm587 = vcmp.le.s32.totalorder %v563, 16
          %vm588 = vcmp.le.s32.totalorder %v564, 16
          %vm589 = vcmp.le.s32.totalorder %v565, 16
          %vm590 = vcmp.le.s32.totalorder %v566, 16
          %vm591 = vcmp.le.s32.totalorder %v567, 16
          %vm592 = vcmp.le.s32.totalorder %v568, 16
          %vm593 = vcmp.le.s32.totalorder %v569, 16
          %vm594 = vcmp.le.s32.totalorder %v570, 16
          %vm595 = vmand %vm575, %vm585
          %vm596 = vmand %vm576, %vm586
          %vm597 = vmand %vm577, %vm587
          %vm598 = vmand %vm578, %vm588
          %vm599 = vmand %vm579, %vm589
          %vm600 = vmand %vm580, %vm590
          %vm601 = vmand %vm581, %vm591
          %vm602 = vmand %vm582, %vm592
          %vm603 = vmand %vm583, %vm593
          %vm604 = vmand %vm584, %vm594
          %vm605 = vcmp.ge.s32.totalorder %v572, 1
          %vm606 = vcmp.ge.s32.totalorder %v573, 1
          %vm607 = vcmp.ge.s32.totalorder %v574, 1
          %vm608 = vmand %vm595, %vm605
          %vm609 = vmand %vm595, %vm606
          %vm610 = vmand %vm595, %vm607
          %vm611 = vmand %vm596, %vm605
          %vm612 = vmand %vm596, %vm606
          %vm613 = vmand %vm596, %vm607
          %vm614 = vmand %vm597, %vm605
          %vm615 = vmand %vm597, %vm606
          %vm616 = vmand %vm597, %vm607
          %vm617 = vmand %vm598, %vm605
          %vm618 = vmand %vm598, %vm606
          %vm619 = vmand %vm598, %vm607
          %vm620 = vmand %vm599, %vm605
          %vm621 = vmand %vm599, %vm606
          %vm622 = vmand %vm599, %vm607
          %vm623 = vmand %vm600, %vm605
          %vm624 = vmand %vm600, %vm606
          %vm625 = vmand %vm600, %vm607
          %vm626 = vmand %vm601, %vm605
          %vm627 = vmand %vm601, %vm606
          %vm628 = vmand %vm601, %vm607
          %vm629 = vmand %vm602, %vm605
          %vm630 = vmand %vm602, %vm606
          %vm631 = vmand %vm602, %vm607
          %vm632 = vmand %vm603, %vm605
          %vm633 = vmand %vm603, %vm606
          %vm634 = vmand %vm603, %vm607
          %vm635 = vmand %vm604, %vm605
          %vm636 = vmand %vm604, %vm606
          %vm637 = vmand %vm604, %vm607
          %vm638 = vcmp.le.s32.totalorder %v572, 16
          %vm639 = vcmp.le.s32.totalorder %v573, 16
          %vm640 = vcmp.le.s32.totalorder %v574, 16
          %vm641 = vmand %vm608, %vm638
          %vm642 = vmand %vm609, %vm639
          %vm643 = vmand %vm610, %vm640
          %vm644 = vmand %vm611, %vm638
          %vm645 = vmand %vm612, %vm639
          %vm646 = vmand %vm613, %vm640
          %vm647 = vmand %vm614, %vm638
          %vm648 = vmand %vm615, %vm639
          %vm649 = vmand %vm616, %vm640
          %vm650 = vmand %vm617, %vm638
          %vm651 = vmand %vm618, %vm639
          %vm652 = vmand %vm619, %vm640
          %vm653 = vmand %vm620, %vm638
          %vm654 = vmand %vm621, %vm639
          %vm655 = vmand %vm622, %vm640
          %vm656 = vmand %vm623, %vm638
          %vm657 = vmand %vm624, %vm639
          %vm658 = vmand %vm625, %vm640
          %vm659 = vmand %vm626, %vm638
          %vm660 = vmand %vm627, %vm639
          %vm661 = vmand %vm628, %vm640
          %vm662 = vmand %vm629, %vm638
          %vm663 = vmand %vm630, %vm639
          %vm664 = vmand %vm631, %vm640
          %vm665 = vmand %vm632, %vm638
          %vm666 = vmand %vm633, %vm639
          %vm667 = vmand %vm634, %vm640
          %vm668 = vmand %vm635, %vm638
          %vm669 = vmand %vm636, %vm639
          %vm670 = vmand %vm637, %vm640
          %vm671 = vmpackc.low %vm641, %vm641
          %vm672 = vmpackc.low %vm642, %vm642
          %vm673 = vmpackc.low %vm643, %vm643
          %vm674 = vmpackc.low %vm644, %vm644
          %vm675 = vmpackc.low %vm645, %vm645
          %vm676 = vmpackc.low %vm646, %vm646
          %vm677 = vmpackc.low %vm647, %vm647
          %vm678 = vmpackc.low %vm648, %vm648
          %vm679 = vmpackc.low %vm649, %vm649
          %vm680 = vmpackc.low %vm650, %vm650
          %vm681 = vmpackc.low %vm651, %vm651
          %vm682 = vmpackc.low %vm652, %vm652
          %vm683 = vmpackc.low %vm653, %vm653
          %vm684 = vmpackc.low %vm654, %vm654
          %vm685 = vmpackc.low %vm655, %vm655
          %vm686 = vmpackc.low %vm656, %vm656
          %vm687 = vmpackc.low %vm657, %vm657
          %vm688 = vmpackc.low %vm658, %vm658
          %vm689 = vmpackc.low %vm659, %vm659
          %vm690 = vmpackc.low %vm660, %vm660
          %vm691 = vmpackc.low %vm661, %vm661
          %vm692 = vmpackc.low %vm662, %vm662
          %vm693 = vmpackc.low %vm663, %vm663
          %vm694 = vmpackc.low %vm664, %vm664
          %vm695 = vmpackc.low %vm665, %vm665
          %vm696 = vmpackc.low %vm666, %vm666
          %vm697 = vmpackc.low %vm667, %vm667
          %vm698 = vmpackc.low %vm668, %vm668
          %vm699 = vmpackc.low %vm669, %vm669
          %vm700 = vmpackc.low %vm670, %vm670
          %v701 = vsel %vm671, %v531, 0
          %v702 = vsel %vm672, %v532, 0
          %v703 = vsel %vm673, %v533, 0
          %v704 = vsel %vm674, %v534, 0
          %v705 = vsel %vm675, %v535, 0
          %v706 = vsel %vm676, %v536, 0
          %v707 = vsel %vm677, %v537, 0
          %v708 = vsel %vm678, %v538, 0
          %v709 = vsel %vm679, %v539, 0
          %v710 = vsel %vm680, %v540, 0
          %v711 = vsel %vm681, %v541, 0
          %v712 = vsel %vm682, %v542, 0
          %v713 = vsel %vm683, %v543, 0
          %v714 = vsel %vm684, %v544, 0
          %v715 = vsel %vm685, %v545, 0
          %v716 = vsel %vm686, %v546, 0
          %v717 = vsel %vm687, %v547, 0
          %v718 = vsel %vm688, %v548, 0
          %v719 = vsel %vm689, %v549, 0
          %v720 = vsel %vm690, %v550, 0
          %v721 = vsel %vm691, %v551, 0
          %v722 = vsel %vm692, %v552, 0
          %v723 = vsel %vm693, %v553, 0
          %v724 = vsel %vm694, %v554, 0
          %v725 = vsel %vm695, %v555, 0
          %v726 = vsel %vm696, %v556, 0
          %v727 = vsel %vm697, %v557, 0
          %v728 = vsel %vm698, %v558, 0
          %v729 = vsel %vm699, %v559, 0
          %v730 = vsel %vm700, %v560, 0
          %v751 = vunpack.c.l.b16 %v701
          %v752 = vunpack.c.l.b16 %v702
          %v753 = vunpack.c.l.b16 %v704
          %v754 = vunpack.c.l.b16 %v705
          %v755 = vunpack.c.l.b16 %v707
          %v756 = vunpack.c.l.b16 %v708
          %v757 = vunpack.c.l.b16 %v710
          %v758 = vunpack.c.l.b16 %v711
          %v759 = vunpack.c.l.b16 %v713
          %v760 = vunpack.c.l.b16 %v714
          %v761 = vunpack.c.l.b16 %v716
          %v762 = vunpack.c.l.b16 %v717
          %v763 = vunpack.c.l.b16 %v719
          %v764 = vunpack.c.l.b16 %v720
          %v765 = vunpack.c.l.b16 %v722
          %v766 = vunpack.c.l.b16 %v723
          %v767 = vunpack.c.l.b16 %v725
          %v768 = vunpack.c.l.b16 %v726
          %v769 = vunpack.c.l.b16 %v728
          %v770 = vunpack.c.l.b16 %v729
          %v771 = vpack.c.b16 %v752, %v751
          %v772 = vpack.c.b16 %v754, %v753
          %v773 = vpack.c.b16 %v756, %v755
          %v774 = vpack.c.b16 %v758, %v757
          %v775 = vpack.c.b16 %v760, %v759
          %v776 = vpack.c.b16 %v762, %v761
          %v777 = vpack.c.b16 %v764, %v763
          %v778 = vpack.c.b16 %v766, %v765
          %v779 = vpack.c.b16 %v768, %v767
          %v780 = vpack.c.b16 %v770, %v769
          %v791 = vunpack.c.l.b16 %v703
          %v792 = vunpack.c.l.b16 %v706
          %v793 = vunpack.c.l.b16 %v709
          %v794 = vunpack.c.l.b16 %v712
          %v795 = vunpack.c.l.b16 %v715
          %v796 = vunpack.c.l.b16 %v718
          %v797 = vunpack.c.l.b16 %v721
          %v798 = vunpack.c.l.b16 %v724
          %v799 = vunpack.c.l.b16 %v727
          %v800 = vunpack.c.l.b16 %v730
          %v801 = vpack.c.b16 %v791, %v791
          %v802 = vpack.c.b16 %v792, %v792
          %v803 = vpack.c.b16 %v793, %v793
          %v804 = vpack.c.b16 %v794, %v794
          %v805 = vpack.c.b16 %v795, %v795
          %v806 = vpack.c.b16 %v796, %v796
          %v807 = vpack.c.b16 %v797, %v797
          %v808 = vpack.c.b16 %v798, %v798
          %v809 = vpack.c.b16 %v799, %v799
          %v810 = vpack.c.b16 %v800, %v800
          %vm811 = vsmask.f32 7424
          %v813 = vshrl.u32 %v771, 16
          %v815 = vshll.u32 %v771, 16
          %v817 = vrot.slane %v815, 1
          %v818 = vor.u32 %v813, %v817
          %v820 = vshll.u32 %v801, 16
          %v822 = vrot.slane %v820, 1
          %v823 = vsel %vm811, %v818, %v822
          %v825 = vshrl.u32 %v772, 16
          %v827 = vshll.u32 %v772, 16
          %v829 = vrot.slane %v827, 1
          %v830 = vor.u32 %v825, %v829
          %v832 = vshll.u32 %v802, 16
          %v834 = vrot.slane %v832, 1
          %v835 = vsel %vm811, %v830, %v834
          %v837 = vshrl.u32 %v773, 16
          %v839 = vshll.u32 %v773, 16
          %v841 = vrot.slane %v839, 1
          %v842 = vor.u32 %v837, %v841
          %v844 = vshll.u32 %v803, 16
          %v846 = vrot.slane %v844, 1
          %v847 = vsel %vm811, %v842, %v846
          %v849 = vshrl.u32 %v774, 16
          %v851 = vshll.u32 %v774, 16
          %v853 = vrot.slane %v851, 1
          %v854 = vor.u32 %v849, %v853
          %v856 = vshll.u32 %v804, 16
          %v858 = vrot.slane %v856, 1
          %v859 = vsel %vm811, %v854, %v858
          %v861 = vshrl.u32 %v775, 16
          %v863 = vshll.u32 %v775, 16
          %v865 = vrot.slane %v863, 1
          %v866 = vor.u32 %v861, %v865
          %v868 = vshll.u32 %v805, 16
          %v870 = vrot.slane %v868, 1
          %v871 = vsel %vm811, %v866, %v870
          %v873 = vshrl.u32 %v776, 16
          %v875 = vshll.u32 %v776, 16
          %v877 = vrot.slane %v875, 1
          %v878 = vor.u32 %v873, %v877
          %v880 = vshll.u32 %v806, 16
          %v882 = vrot.slane %v880, 1
          %v883 = vsel %vm811, %v878, %v882
          %v885 = vshrl.u32 %v777, 16
          %v887 = vshll.u32 %v777, 16
          %v889 = vrot.slane %v887, 1
          %v890 = vor.u32 %v885, %v889
          %v892 = vshll.u32 %v807, 16
          %v894 = vrot.slane %v892, 1
          %v895 = vsel %vm811, %v890, %v894
          %v897 = vshrl.u32 %v778, 16
          %v899 = vshll.u32 %v778, 16
          %v901 = vrot.slane %v899, 1
          %v902 = vor.u32 %v897, %v901
          %v904 = vshll.u32 %v808, 16
          %v906 = vrot.slane %v904, 1
          %v907 = vsel %vm811, %v902, %v906
          %v909 = vshrl.u32 %v779, 16
          %v911 = vshll.u32 %v779, 16
          %v913 = vrot.slane %v911, 1
          %v914 = vor.u32 %v909, %v913
          %v916 = vshll.u32 %v809, 16
          %v918 = vrot.slane %v916, 1
          %v919 = vsel %vm811, %v914, %v918
          %v921 = vshrl.u32 %v780, 16
          %v923 = vshll.u32 %v780, 16
          %v925 = vrot.slane %v923, 1
          %v926 = vor.u32 %v921, %v925
          %v928 = vshll.u32 %v810, 16
          %v930 = vrot.slane %v928, 1
          %v931 = vsel %vm811, %v926, %v930
          %932 = vrot.lane.b32.xlu0 %v823, 64
          %v933 = vpop.permute.xlu0 %932
          %934 = vrot.lane.b32.xlu0 %v835, 64
          %v935 = vpop.permute.xlu0 %934
          %936 = vrot.lane.b32.xlu0 %v847, 64
          %v937 = vpop.permute.xlu0 %936
          %938 = vrot.lane.b32.xlu0 %v859, 64
          %v939 = vpop.permute.xlu0 %938
          %940 = vrot.lane.b32.xlu0 %v871, 64
          %v941 = vpop.permute.xlu0 %940
          %942 = vrot.lane.b32.xlu0 %v883, 64
          %v943 = vpop.permute.xlu0 %942
          %944 = vrot.lane.b32.xlu0 %v895, 64
          %v945 = vpop.permute.xlu0 %944
          %946 = vrot.lane.b32.xlu0 %v907, 64
          %v947 = vpop.permute.xlu0 %946
          %948 = vrot.lane.b32.xlu0 %v919, 64
          %v949 = vpop.permute.xlu0 %948
          %950 = vrot.lane.b32.xlu0 %v931, 64
          %v951 = vpop.permute.xlu0 %950
          %vm952 = vcmask 1046528
          %v953 = vrot.slane %v771, 1
          %v954 = vrot.slane %v801, 1
          %v955 = vsel %vm952, %v953, %v954
          %v956 = vrot.slane %v772, 1
          %v957 = vrot.slane %v802, 1
          %v958 = vsel %vm952, %v956, %v957
          %v959 = vrot.slane %v773, 1
          %v960 = vrot.slane %v803, 1
          %v961 = vsel %vm952, %v959, %v960
          %v962 = vrot.slane %v774, 1
          %v963 = vrot.slane %v804, 1
          %v964 = vsel %vm952, %v962, %v963
          %v965 = vrot.slane %v775, 1
          %v966 = vrot.slane %v805, 1
          %v967 = vsel %vm952, %v965, %v966
          %v968 = vrot.slane %v776, 1
          %v969 = vrot.slane %v806, 1
          %v970 = vsel %vm952, %v968, %v969
          %v971 = vrot.slane %v777, 1
          %v972 = vrot.slane %v807, 1
          %v973 = vsel %vm952, %v971, %v972
          %v974 = vrot.slane %v778, 1
          %v975 = vrot.slane %v808, 1
          %v976 = vsel %vm952, %v974, %v975
          %v977 = vrot.slane %v779, 1
          %v978 = vrot.slane %v809, 1
          %v979 = vsel %vm952, %v977, %v978
          %v980 = vrot.slane %v780, 1
          %v981 = vrot.slane %v810, 1
          %v982 = vsel %vm952, %v980, %v981
          %vm983 = vcmask 523264
          %v985 = vsel %vm983, %v771, %v933
          %v988 = vsel %vm983, %v772, %v935
          %v991 = vsel %vm983, %v773, %v937
          %v994 = vsel %vm983, %v774, %v939
          %v997 = vsel %vm983, %v775, %v941
          %v1000 = vsel %vm983, %v776, %v943
          %v1003 = vsel %vm983, %v777, %v945
          %v1006 = vsel %vm983, %v778, %v947
          %v1009 = vsel %vm983, %v779, %v949
          %v1012 = vsel %vm983, %v780, %v951
          %v1014 = vld [vmem:[%s1] sm:$0xf]
          %v1015 = vld [vmem:[%s1 + $0x4] sm:$0xf]
          %v1016 = vld [vmem:[%s1 + $0x8] sm:$0xf]
          %v1017 = vld [vmem:[%s1 + $0xc] sm:$0xf]
          %v1018 = vld [vmem:[%s1 + $0x10] sm:$0xf]
          %v1019 = vld [vmem:[%s1 + $0x14] sm:$0xf]
          %v1020 = vld [vmem:[%s1 + $0x18] sm:$0xf]
          %v1021 = vld [vmem:[%s1 + $0x1c] sm:$0xf]
          %v1022 = vld [vmem:[%s1 + $0x20] sm:$0xf]
          %v1023 = vld [vmem:[%s1 + $0x24] sm:$0xf]
          %v1024 = vld [vmem:[%s1 + $0x28] sm:$0xf]
          %v1025 = vld [vmem:[%s1 + $0x2c] sm:$0xf]
          %v1026 = vld [vmem:[%s1 + $0x30] sm:$0xf]
          %v1027 = vld [vmem:[%s1 + $0x34] sm:$0xf]
          %v1028 = vld [vmem:[%s1 + $0x38] sm:$0xf]
          %v1029 = vld [vmem:[%s1 + $0x3c] sm:$0xf]
          %v1030 = vld [vmem:[%s1 + $0x40] sm:$0xf]
          %v1031 = vld [vmem:[%s1 + $0x44] sm:$0xf]
          %v1032 = vld [vmem:[%s1 + $0x48] sm:$0xf]
          %v1033 = vld [vmem:[%s1 + $0x4c] sm:$0xf]
          %v1034 = vld [vmem:[%s1 + $0x50] sm:$0xf]
          %v1035 = vld [vmem:[%s1 + $0x54] sm:$0xf]
          %v1036 = vld [vmem:[%s1 + $0x58] sm:$0xf]
          %v1037 = vld [vmem:[%s1 + $0x5c] sm:$0xf]
          %s1038 = scalar_lea.vmem %s1, 96
          %v1039 = vld [vmem:[%s1038] sm:$0xf]
          %v1040 = vld [vmem:[%s1038 + $0x4] sm:$0xf]
          %v1041 = vld [vmem:[%s1038 + $0x8] sm:$0xf]
          %v1042 = vld [vmem:[%s1038 + $0xc] sm:$0xf]
          %v1043 = vld [vmem:[%s1038 + $0x10] sm:$0xf]
          %v1044 = vld [vmem:[%s1038 + $0x14] sm:$0xf]
          %v1045 = vld [vmem:[%s1038 + $0x18] sm:$0xf]
          %v1046 = vld [vmem:[%s1038 + $0x1c] sm:$0xf]
          %v1047 = vld [vmem:[%s1038 + $0x20] sm:$0xf]
          %v1048 = vld [vmem:[%s1038 + $0x24] sm:$0xf]
          %v1049 = vld [vmem:[%s1038 + $0x28] sm:$0xf]
          %v1050 = vld [vmem:[%s1038 + $0x2c] sm:$0xf]
          %v1051 = vld [vmem:[%s1038 + $0x30] sm:$0xf]
          %v1052 = vld [vmem:[%s1038 + $0x34] sm:$0xf]
          %v1053 = vld [vmem:[%s1038 + $0x38] sm:$0xf]
          %v1054 = vld [vmem:[%s1038 + $0x3c] sm:$0xf]
          %v1055 = vld [vmem:[%s1038 + $0x40] sm:$0xf]
          %v1056 = vld [vmem:[%s1038 + $0x44] sm:$0xf]
          %v1057 = vld [vmem:[%s1038 + $0x48] sm:$0xf]
          %v1058 = vld [vmem:[%s1038 + $0x4c] sm:$0xf]
          %v1059 = vld [vmem:[%s1038 + $0x50] sm:$0xf]
          %v1060 = vld [vmem:[%s1038 + $0x54] sm:$0xf]
          %v1061 = vld [vmem:[%s1038 + $0x58] sm:$0xf]
          %v1062 = vld [vmem:[%s1038 + $0x5c] sm:$0xf]
          %v1087 = vunpack.c.l.b16 %v1039
          %v1088 = vunpack.c.l.b16 %v1040
          %v1089 = vunpack.c.l.b16 %v1041
          %v1090 = vunpack.c.l.b16 %v1042
          %v1091 = vunpack.c.l.b16 %v1043
          %v1092 = vunpack.c.l.b16 %v1044
          %v1093 = vunpack.c.l.b16 %v1045
          %v1094 = vunpack.c.l.b16 %v1046
          %v1095 = vunpack.c.l.b16 %v1047
          %v1096 = vunpack.c.l.b16 %v1048
          %v1097 = vunpack.c.l.b16 %v1049
          %v1098 = vunpack.c.l.b16 %v1050
          %v1099 = vunpack.c.l.b16 %v1051
          %v1100 = vunpack.c.l.b16 %v1052
          %v1101 = vunpack.c.l.b16 %v1053
          %v1102 = vunpack.c.l.b16 %v1054
          %v1103 = vunpack.c.l.b16 %v1055
          %v1104 = vunpack.c.l.b16 %v1056
          %v1105 = vunpack.c.l.b16 %v1057
          %v1106 = vunpack.c.l.b16 %v1058
          %v1107 = vunpack.c.l.b16 %v1059
          %v1108 = vunpack.c.l.b16 %v1060
          %v1109 = vunpack.c.l.b16 %v1061
          %v1110 = vunpack.c.l.b16 %v1062
          %v1111 = vpack.c.b16 %v1088, %v1087
          %v1112 = vpack.c.b16 %v1090, %v1089
          %v1113 = vpack.c.b16 %v1092, %v1091
          %v1114 = vpack.c.b16 %v1094, %v1093
          %v1115 = vpack.c.b16 %v1096, %v1095
          %v1116 = vpack.c.b16 %v1098, %v1097
          %v1117 = vpack.c.b16 %v1100, %v1099
          %v1118 = vpack.c.b16 %v1102, %v1101
          %v1119 = vpack.c.b16 %v1104, %v1103
          %v1120 = vpack.c.b16 %v1106, %v1105
          %v1121 = vpack.c.b16 %v1108, %v1107
          %v1122 = vpack.c.b16 %v1110, %v1109
          %v1136 = vsel %vm983, %v958, 0
          %v1139 = vsel %vm983, %v961, 0
          %v1142 = vsel %vm983, %v964, 0
          %v1145 = vsel %vm983, %v967, 0
          %v1148 = vsel %vm983, %v970, 0
          %v1151 = vsel %vm983, %v973, 0
          %v1154 = vsel %vm983, %v976, 0
          %v1157 = vsel %vm983, %v979, 0
          %1159 = vmatprep.subr.bf16.mxu0 0
          %1160 = vmatpush1.bf16.msra.mxu0 %v1111
          %1161 = vmatprep.subr.bf16.mxu0 0
          %1162 = vmatpush1.bf16.msra.mxu0 %v1112
          %1163 = vmatprep.subr.bf16.mxu0 0
          %1164 = vmatpush1.bf16.msra.mxu0 %v1113
          %1165 = vmatprep.subr.bf16.mxu0 0
          %1166 = vmatpush1.bf16.msra.mxu0 %v1114
          %1167 = vmatprep.subr.bf16.mxu0 0
          %1168 = vmatpush1.bf16.msra.mxu0 %v1115
          %1169 = vmatprep.subr.bf16.mxu0 0
          %1170 = vmatpush1.bf16.msra.mxu0 %v1116
          %1171 = vmatprep.subr.bf16.mxu0 0
          %1172 = vmatpush1.bf16.msra.mxu0 %v1117
          %1173 = vmatprep.subr.bf16.mxu0 0
          %1174 = vmatpush1.bf16.msra.mxu0 %v1118
          %1175 = vmatprep.subr.bf16.mxu0 0
          %1176 = vmatpush1.bf16.msra.mxu0 %v1119
          %1177 = vmatprep.subr.bf16.mxu0 0
          %1178 = vmatpush1.bf16.msra.mxu0 %v1120
          %1179 = vmatprep.subr.bf16.mxu0 0
          %1180 = vmatpush1.bf16.msra.mxu0 %v1121
          %1181 = vmatprep.subr.bf16.mxu0 0
          %1182 = vmatpush1.bf16.msra.mxu0 %v1122
          %1183 = vmatprep.subr.bf16.mxu0 0
          %1184 = vmatpush1.bf16.msra.mxu0 0
          %1185 = vmatprep.subr.bf16.mxu0 0
          %1186 = vmatpush1.bf16.msra.mxu0 0
          %1187 = vmatprep.subr.bf16.mxu0 0
          %1188 = vmatpush1.bf16.msra.mxu0 0
          %1189 = vmatprep.subr.bf16.mxu0 0
          %1190 = vmatpush1.bf16.msra.mxu0 0
          %1191 = vmatprep.mubr.bf16.mxu0 %v1136
          %1192 = vmatmul.mubr.bf16.gmra.mrb[0].mxu0 %v988
          %v1193 = vpop.f32.mrb[0].mxu0
          %v1194 = vadd.f32 0.0, %v1193
          %v1195 = vpop.f32.mrb[0].mxu0
          %v1196 = vpop.f32.mrb[0].mxu0
          %v1197 = vadd.f32 0.0, %v1196
          %v1198 = vpop.f32.mrb[0].mxu0
          %1199 = vmatprep.mubr.bf16.mxu0 %v1139
          %1200 = vmatmul.mubr.bf16.gmra.mrb[0].mxu0 %v991
          %v1201 = vpop.f32.mrb[0].mxu0
          %v1202 = vadd.f32 0.0, %v1201
          %v1203 = vpop.f32.mrb[0].mxu0
          %v1204 = vpop.f32.mrb[0].mxu0
          %v1205 = vadd.f32 0.0, %v1204
          %v1206 = vpop.f32.mrb[0].mxu0
          %1207 = vmatprep.mubr.bf16.mxu0 %v1142
          %1208 = vmatmul.mubr.bf16.gmra.mrb[0].mxu0 %v994
          %v1209 = vpop.f32.mrb[0].mxu0
          %v1210 = vadd.f32 0.0, %v1209
          %v1211 = vpop.f32.mrb[0].mxu0
          %v1212 = vpop.f32.mrb[0].mxu0
          %v1213 = vadd.f32 0.0, %v1212
          %v1214 = vpop.f32.mrb[0].mxu0
          %1215 = vmatprep.mubr.bf16.mxu0 %v1145
          %1216 = vmatmul.mubr.bf16.gmra.mrb[0].mxu0 %v997
          %v1217 = vpop.f32.mrb[0].mxu0
          %v1218 = vadd.f32 0.0, %v1217
          %v1219 = vpop.f32.mrb[0].mxu0
          %v1220 = vpop.f32.mrb[0].mxu0
          %v1221 = vadd.f32 0.0, %v1220
          %v1222 = vpop.f32.mrb[0].mxu0
          %1223 = vmatprep.mubr.bf16.mxu0 %v1148
          %1224 = vmatmul.mubr.bf16.gmra.mrb[0].mxu0 %v1000
          %v1225 = vpop.f32.mrb[0].mxu0
          %v1226 = vadd.f32 0.0, %v1225
          %v1227 = vpop.f32.mrb[0].mxu0
          %v1228 = vpop.f32.mrb[0].mxu0
          %v1229 = vadd.f32 0.0, %v1228
          %v1230 = vpop.f32.mrb[0].mxu0
          %1231 = vmatprep.mubr.bf16.mxu0 %v1151
          %1232 = vmatmul.mubr.bf16.gmra.mrb[0].mxu0 %v1003
          %v1233 = vpop.f32.mrb[0].mxu0
          %v1234 = vadd.f32 0.0, %v1233
          %v1235 = vpop.f32.mrb[0].mxu0
          %v1236 = vpop.f32.mrb[0].mxu0
          %v1237 = vadd.f32 0.0, %v1236
          %v1238 = vpop.f32.mrb[0].mxu0
          %1239 = vmatprep.mubr.bf16.mxu0 %v1154
          %1240 = vmatmul.mubr.bf16.gmra.mrb[0].mxu0 %v1006
          %v1241 = vpop.f32.mrb[0].mxu0
          %v1242 = vadd.f32 0.0, %v1241
          %v1243 = vpop.f32.mrb[0].mxu0
          %v1244 = vpop.f32.mrb[0].mxu0
          %v1245 = vadd.f32 0.0, %v1244
          %v1246 = vpop.f32.mrb[0].mxu0
          %1247 = vmatprep.mubr.bf16.mxu0 %v1157
          %1248 = vmatmul.mubr.bf16.gmra.mrb[0].mxu0 %v1009
          %v1249 = vpop.f32.mrb[0].mxu0
          %v1250 = vadd.f32 0.0, %v1249
          %v1251 = vpop.f32.mrb[0].mxu0
          %v1252 = vpop.f32.mrb[0].mxu0
          %v1253 = vadd.f32 0.0, %v1252
          %v1254 = vpop.f32.mrb[0].mxu0
          %1255 = vdwg.mxu0
          %v1280 = vunpack.c.l.b16 %v1014
          %v1281 = vunpack.c.l.b16 %v1015
          %v1282 = vunpack.c.l.b16 %v1016
          %v1283 = vunpack.c.l.b16 %v1017
          %v1284 = vunpack.c.l.b16 %v1018
          %v1285 = vunpack.c.l.b16 %v1019
          %v1286 = vunpack.c.l.b16 %v1020
          %v1287 = vunpack.c.l.b16 %v1021
          %v1288 = vunpack.c.l.b16 %v1022
          %v1289 = vunpack.c.l.b16 %v1023
          %v1290 = vunpack.c.l.b16 %v1024
          %v1291 = vunpack.c.l.b16 %v1025
          %v1292 = vunpack.c.l.b16 %v1026
          %v1293 = vunpack.c.l.b16 %v1027
          %v1294 = vunpack.c.l.b16 %v1028
          %v1295 = vunpack.c.l.b16 %v1029
          %v1296 = vunpack.c.l.b16 %v1030
          %v1297 = vunpack.c.l.b16 %v1031
          %v1298 = vunpack.c.l.b16 %v1032
          %v1299 = vunpack.c.l.b16 %v1033
          %v1300 = vunpack.c.l.b16 %v1034
          %v1301 = vunpack.c.l.b16 %v1035
          %v1302 = vunpack.c.l.b16 %v1036
          %v1303 = vunpack.c.l.b16 %v1037
          %v1304 = vpack.c.b16 %v1281, %v1280
          %v1305 = vpack.c.b16 %v1283, %v1282
          %v1306 = vpack.c.b16 %v1285, %v1284
          %v1307 = vpack.c.b16 %v1287, %v1286
          %v1308 = vpack.c.b16 %v1289, %v1288
          %v1309 = vpack.c.b16 %v1291, %v1290
          %v1310 = vpack.c.b16 %v1293, %v1292
          %v1311 = vpack.c.b16 %v1295, %v1294
          %v1312 = vpack.c.b16 %v1297, %v1296
          %v1313 = vpack.c.b16 %v1299, %v1298
          %v1314 = vpack.c.b16 %v1301, %v1300
          %v1315 = vpack.c.b16 %v1303, %v1302
          %v1329 = vsel %vm983, %v955, 0
          %1331 = vmatprep.subr.bf16.mxu0 0
          %1332 = vmatpush1.bf16.msra.mxu0 %v1304
          %1333 = vmatprep.subr.bf16.mxu0 0
          %1334 = vmatpush1.bf16.msra.mxu0 %v1305
          %1335 = vmatprep.subr.bf16.mxu0 0
          %1336 = vmatpush1.bf16.msra.mxu0 %v1306
          %1337 = vmatprep.subr.bf16.mxu0 0
          %1338 = vmatpush1.bf16.msra.mxu0 %v1307
          %1339 = vmatprep.subr.bf16.mxu0 0
          %1340 = vmatpush1.bf16.msra.mxu0 %v1308
          %1341 = vmatprep.subr.bf16.mxu0 0
          %1342 = vmatpush1.bf16.msra.mxu0 %v1309
          %1343 = vmatprep.subr.bf16.mxu0 0
          %1344 = vmatpush1.bf16.msra.mxu0 %v1310
          %1345 = vmatprep.subr.bf16.mxu0 0
          %1346 = vmatpush1.bf16.msra.mxu0 %v1311
          %1347 = vmatprep.subr.bf16.mxu0 0
          %1348 = vmatpush1.bf16.msra.mxu0 %v1312
          %1349 = vmatprep.subr.bf16.mxu0 0
          %1350 = vmatpush1.bf16.msra.mxu0 %v1313
          %1351 = vmatprep.subr.bf16.mxu0 0
          %1352 = vmatpush1.bf16.msra.mxu0 %v1314
          %1353 = vmatprep.subr.bf16.mxu0 0
          %1354 = vmatpush1.bf16.msra.mxu0 %v1315
          %1355 = vmatprep.subr.bf16.mxu0 0
          %1356 = vmatpush1.bf16.msra.mxu0 0
          %1357 = vmatprep.subr.bf16.mxu0 0
          %1358 = vmatpush1.bf16.msra.mxu0 0
          %1359 = vmatprep.subr.bf16.mxu0 0
          %1360 = vmatpush1.bf16.msra.mxu0 0
          %1361 = vmatprep.subr.bf16.mxu0 0
          %1362 = vmatpush1.bf16.msra.mxu0 0
          %1363 = vmatprep.mubr.bf16.mxu0 %v1329
          %1364 = vmatmul.mubr.bf16.gmra.mrb[0].mxu0 %v985
          %v1365 = vpop.f32.mrb[0].mxu0
          %v1366 = vadd.f32 %v1194, %v1365
          %v1367 = vpop.f32.mrb[0].mxu0
          %v1368 = vpop.f32.mrb[0].mxu0
          %v1369 = vadd.f32 %v1197, %v1368
          %v1370 = vpop.f32.mrb[0].mxu0
          %1371 = vmatprep.mubr.bf16.mxu0 %v1136
          %1372 = vmatmul.mubr.bf16.gmra.mrb[0].mxu0 %v988
          %v1373 = vpop.f32.mrb[0].mxu0
          %v1374 = vadd.f32 %v1202, %v1373
          %v1375 = vpop.f32.mrb[0].mxu0
          %v1376 = vpop.f32.mrb[0].mxu0
          %v1377 = vadd.f32 %v1205, %v1376
          %v1378 = vpop.f32.mrb[0].mxu0
          %1379 = vmatprep.mubr.bf16.mxu0 %v1139
          %1380 = vmatmul.mubr.bf16.gmra.mrb[0].mxu0 %v991
          %v1381 = vpop.f32.mrb[0].mxu0
          %v1382 = vadd.f32 %v1210, %v1381
          %v1383 = vpop.f32.mrb[0].mxu0
          %v1384 = vpop.f32.mrb[0].mxu0
          %v1385 = vadd.f32 %v1213, %v1384
          %v1386 = vpop.f32.mrb[0].mxu0
          %1387 = vmatprep.mubr.bf16.mxu0 %v1142
          %1388 = vmatmul.mubr.bf16.gmra.mrb[0].mxu0 %v994
          %v1389 = vpop.f32.mrb[0].mxu0
          %v1390 = vadd.f32 %v1218, %v1389
          %v1391 = vpop.f32.mrb[0].mxu0
          %v1392 = vpop.f32.mrb[0].mxu0
          %v1393 = vadd.f32 %v1221, %v1392
          %v1394 = vpop.f32.mrb[0].mxu0
          %1395 = vmatprep.mubr.bf16.mxu0 %v1145
          %1396 = vmatmul.mubr.bf16.gmra.mrb[0].mxu0 %v997
          %v1397 = vpop.f32.mrb[0].mxu0
          %v1398 = vadd.f32 %v1226, %v1397
          %v1399 = vpop.f32.mrb[0].mxu0
          %v1400 = vpop.f32.mrb[0].mxu0
          %v1401 = vadd.f32 %v1229, %v1400
          %v1402 = vpop.f32.mrb[0].mxu0
          %1403 = vmatprep.mubr.bf16.mxu0 %v1148
          %1404 = vmatmul.mubr.bf16.gmra.mrb[0].mxu0 %v1000
          %v1405 = vpop.f32.mrb[0].mxu0
          %v1406 = vadd.f32 %v1234, %v1405
          %v1407 = vpop.f32.mrb[0].mxu0
          %v1408 = vpop.f32.mrb[0].mxu0
          %v1409 = vadd.f32 %v1237, %v1408
          %v1410 = vpop.f32.mrb[0].mxu0
          %1411 = vmatprep.mubr.bf16.mxu0 %v1151
          %1412 = vmatmul.mubr.bf16.gmra.mrb[0].mxu0 %v1003
          %v1413 = vpop.f32.mrb[0].mxu0
          %v1414 = vadd.f32 %v1242, %v1413
          %v1415 = vpop.f32.mrb[0].mxu0
          %v1416 = vpop.f32.mrb[0].mxu0
          %v1417 = vadd.f32 %v1245, %v1416
          %v1418 = vpop.f32.mrb[0].mxu0
          %1419 = vmatprep.mubr.bf16.mxu0 %v1154
          %1420 = vmatmul.mubr.bf16.gmra.mrb[0].mxu0 %v1006
          %v1421 = vpop.f32.mrb[0].mxu0
          %v1422 = vadd.f32 %v1250, %v1421
          %v1423 = vpop.f32.mrb[0].mxu0
          %v1424 = vpop.f32.mrb[0].mxu0
          %v1425 = vadd.f32 %v1253, %v1424
          %v1426 = vpop.f32.mrb[0].mxu0
          %1427 = vdwg.mxu0
          %s1428 = scalar_lea.vmem %s1, 192
          %v1429 = vld [vmem:[%s1428] sm:$0xf]
          %v1430 = vld [vmem:[%s1428 + $0x4] sm:$0xf]
          %v1431 = vld [vmem:[%s1428 + $0x8] sm:$0xf]
          %v1432 = vld [vmem:[%s1428 + $0xc] sm:$0xf]
          %v1433 = vld [vmem:[%s1428 + $0x10] sm:$0xf]
          %v1434 = vld [vmem:[%s1428 + $0x14] sm:$0xf]
          %v1435 = vld [vmem:[%s1428 + $0x18] sm:$0xf]
          %v1436 = vld [vmem:[%s1428 + $0x1c] sm:$0xf]
          %v1437 = vld [vmem:[%s1428 + $0x20] sm:$0xf]
          %v1438 = vld [vmem:[%s1428 + $0x24] sm:$0xf]
          %v1439 = vld [vmem:[%s1428 + $0x28] sm:$0xf]
          %v1440 = vld [vmem:[%s1428 + $0x2c] sm:$0xf]
          %v1441 = vld [vmem:[%s1428 + $0x30] sm:$0xf]
          %v1442 = vld [vmem:[%s1428 + $0x34] sm:$0xf]
          %v1443 = vld [vmem:[%s1428 + $0x38] sm:$0xf]
          %v1444 = vld [vmem:[%s1428 + $0x3c] sm:$0xf]
          %v1445 = vld [vmem:[%s1428 + $0x40] sm:$0xf]
          %v1446 = vld [vmem:[%s1428 + $0x44] sm:$0xf]
          %v1447 = vld [vmem:[%s1428 + $0x48] sm:$0xf]
          %v1448 = vld [vmem:[%s1428 + $0x4c] sm:$0xf]
          %v1449 = vld [vmem:[%s1428 + $0x50] sm:$0xf]
          %v1450 = vld [vmem:[%s1428 + $0x54] sm:$0xf]
          %v1451 = vld [vmem:[%s1428 + $0x58] sm:$0xf]
          %v1452 = vld [vmem:[%s1428 + $0x5c] sm:$0xf]
          %v1477 = vunpack.c.l.b16 %v1429
          %v1478 = vunpack.c.l.b16 %v1430
          %v1479 = vunpack.c.l.b16 %v1431
          %v1480 = vunpack.c.l.b16 %v1432
          %v1481 = vunpack.c.l.b16 %v1433
          %v1482 = vunpack.c.l.b16 %v1434
          %v1483 = vunpack.c.l.b16 %v1435
          %v1484 = vunpack.c.l.b16 %v1436
          %v1485 = vunpack.c.l.b16 %v1437
          %v1486 = vunpack.c.l.b16 %v1438
          %v1487 = vunpack.c.l.b16 %v1439
          %v1488 = vunpack.c.l.b16 %v1440
          %v1489 = vunpack.c.l.b16 %v1441
          %v1490 = vunpack.c.l.b16 %v1442
          %v1491 = vunpack.c.l.b16 %v1443
          %v1492 = vunpack.c.l.b16 %v1444
          %v1493 = vunpack.c.l.b16 %v1445
          %v1494 = vunpack.c.l.b16 %v1446
          %v1495 = vunpack.c.l.b16 %v1447
          %v1496 = vunpack.c.l.b16 %v1448
          %v1497 = vunpack.c.l.b16 %v1449
          %v1498 = vunpack.c.l.b16 %v1450
          %v1499 = vunpack.c.l.b16 %v1451
          %v1500 = vunpack.c.l.b16 %v1452
          %v1501 = vpack.c.b16 %v1478, %v1477
          %v1502 = vpack.c.b16 %v1480, %v1479
          %v1503 = vpack.c.b16 %v1482, %v1481
          %v1504 = vpack.c.b16 %v1484, %v1483
          %v1505 = vpack.c.b16 %v1486, %v1485
          %v1506 = vpack.c.b16 %v1488, %v1487
          %v1507 = vpack.c.b16 %v1490, %v1489
          %v1508 = vpack.c.b16 %v1492, %v1491
          %v1509 = vpack.c.b16 %v1494, %v1493
          %v1510 = vpack.c.b16 %v1496, %v1495
          %v1511 = vpack.c.b16 %v1498, %v1497
          %v1512 = vpack.c.b16 %v1500, %v1499
          %v1526 = vsel %vm983, %v982, 0
          %1528 = vmatprep.subr.bf16.mxu0 0
          %1529 = vmatpush1.bf16.msra.mxu0 %v1501
          %1530 = vmatprep.subr.bf16.mxu0 0
          %1531 = vmatpush1.bf16.msra.mxu0 %v1502
          %1532 = vmatprep.subr.bf16.mxu0 0
          %1533 = vmatpush1.bf16.msra.mxu0 %v1503
          %1534 = vmatprep.subr.bf16.mxu0 0
          %1535 = vmatpush1.bf16.msra.mxu0 %v1504
          %1536 = vmatprep.subr.bf16.mxu0 0
          %1537 = vmatpush1.bf16.msra.mxu0 %v1505
          %1538 = vmatprep.subr.bf16.mxu0 0
          %1539 = vmatpush1.bf16.msra.mxu0 %v1506
          %1540 = vmatprep.subr.bf16.mxu0 0
          %1541 = vmatpush1.bf16.msra.mxu0 %v1507
          %1542 = vmatprep.subr.bf16.mxu0 0
          %1543 = vmatpush1.bf16.msra.mxu0 %v1508
          %1544 = vmatprep.subr.bf16.mxu0 0
          %1545 = vmatpush1.bf16.msra.mxu0 %v1509
          %1546 = vmatprep.subr.bf16.mxu0 0
          %1547 = vmatpush1.bf16.msra.mxu0 %v1510
          %1548 = vmatprep.subr.bf16.mxu0 0
          %1549 = vmatpush1.bf16.msra.mxu0 %v1511
          %1550 = vmatprep.subr.bf16.mxu0 0
          %1551 = vmatpush1.bf16.msra.mxu0 %v1512
          %1552 = vmatprep.subr.bf16.mxu0 0
          %1553 = vmatpush1.bf16.msra.mxu0 0
          %1554 = vmatprep.subr.bf16.mxu0 0
          %1555 = vmatpush1.bf16.msra.mxu0 0
          %1556 = vmatprep.subr.bf16.mxu0 0
          %1557 = vmatpush1.bf16.msra.mxu0 0
          %1558 = vmatprep.subr.bf16.mxu0 0
          %1559 = vmatpush1.bf16.msra.mxu0 0
          %1560 = vmatprep.mubr.bf16.mxu0 %v1139
          %1561 = vmatmul.mubr.bf16.gmra.mrb[0].mxu0 %v991
          %v1562 = vpop.f32.mrb[0].mxu0
          %v1563 = vadd.f32 0.0, %v1562
          %v1564 = vpop.f32.mrb[0].mxu0
          %v1565 = vpop.f32.mrb[0].mxu0
          %v1566 = vadd.f32 0.0, %v1565
          %v1567 = vpop.f32.mrb[0].mxu0
          %1568 = vmatprep.mubr.bf16.mxu0 %v1142
          %1569 = vmatmul.mubr.bf16.gmra.mrb[0].mxu0 %v994
          %v1570 = vpop.f32.mrb[0].mxu0
          %v1571 = vadd.f32 0.0, %v1570
          %v1572 = vpop.f32.mrb[0].mxu0
          %v1573 = vpop.f32.mrb[0].mxu0
          %v1574 = vadd.f32 0.0, %v1573
          %v1575 = vpop.f32.mrb[0].mxu0
          %1576 = vmatprep.mubr.bf16.mxu0 %v1145
          %1577 = vmatmul.mubr.bf16.gmra.mrb[0].mxu0 %v997
          %v1578 = vpop.f32.mrb[0].mxu0
          %v1579 = vadd.f32 0.0, %v1578
          %v1580 = vpop.f32.mrb[0].mxu0
          %v1581 = vpop.f32.mrb[0].mxu0
          %v1582 = vadd.f32 0.0, %v1581
          %v1583 = vpop.f32.mrb[0].mxu0
          %1584 = vmatprep.mubr.bf16.mxu0 %v1148
          %1585 = vmatmul.mubr.bf16.gmra.mrb[0].mxu0 %v1000
          %v1586 = vpop.f32.mrb[0].mxu0
          %v1587 = vadd.f32 0.0, %v1586
          %v1588 = vpop.f32.mrb[0].mxu0
          %v1589 = vpop.f32.mrb[0].mxu0
          %v1590 = vadd.f32 0.0, %v1589
          %v1591 = vpop.f32.mrb[0].mxu0
          %1592 = vmatprep.mubr.bf16.mxu0 %v1151
          %1593 = vmatmul.mubr.bf16.gmra.mrb[0].mxu0 %v1003
          %v1594 = vpop.f32.mrb[0].mxu0
          %v1595 = vadd.f32 0.0, %v1594
          %v1596 = vpop.f32.mrb[0].mxu0
          %v1597 = vpop.f32.mrb[0].mxu0
          %v1598 = vadd.f32 0.0, %v1597
          %v1599 = vpop.f32.mrb[0].mxu0
          %1600 = vmatprep.mubr.bf16.mxu0 %v1154
          %1601 = vmatmul.mubr.bf16.gmra.mrb[0].mxu0 %v1006
          %v1602 = vpop.f32.mrb[0].mxu0
          %v1603 = vadd.f32 0.0, %v1602
          %v1604 = vpop.f32.mrb[0].mxu0
          %v1605 = vpop.f32.mrb[0].mxu0
          %v1606 = vadd.f32 0.0, %v1605
          %v1607 = vpop.f32.mrb[0].mxu0
          %1608 = vmatprep.mubr.bf16.mxu0 %v1157
          %1609 = vmatmul.mubr.bf16.gmra.mrb[0].mxu0 %v1009
          %v1610 = vpop.f32.mrb[0].mxu0
          %v1611 = vadd.f32 0.0, %v1610
          %v1612 = vpop.f32.mrb[0].mxu0
          %v1613 = vpop.f32.mrb[0].mxu0
          %v1614 = vadd.f32 0.0, %v1613
          %v1615 = vpop.f32.mrb[0].mxu0
          %1616 = vmatprep.mubr.bf16.mxu0 %v1526
          %1617 = vmatmul.mubr.bf16.gmra.mrb[0].mxu0 %v1012
          %v1618 = vpop.f32.mrb[0].mxu0
          %v1619 = vadd.f32 0.0, %v1618
          %v1620 = vpop.f32.mrb[0].mxu0
          %v1621 = vpop.f32.mrb[0].mxu0
          %v1622 = vadd.f32 0.0, %v1621
          %v1623 = vpop.f32.mrb[0].mxu0
          %1624 = vdwg.mxu0
          %v1625 = vadd.f32 %v1366, %v1563
          %v1626 = vadd.f32 %v1369, %v1566
          %v1627 = vadd.f32 %v1374, %v1571
          %v1628 = vadd.f32 %v1377, %v1574
          %v1629 = vadd.f32 %v1382, %v1579
          %v1630 = vadd.f32 %v1385, %v1582
          %v1631 = vadd.f32 %v1390, %v1587
          %v1632 = vadd.f32 %v1393, %v1590
          %v1633 = vadd.f32 %v1398, %v1595
          %v1634 = vadd.f32 %v1401, %v1598
          %v1635 = vadd.f32 %v1406, %v1603
          %v1636 = vadd.f32 %v1409, %v1606
          %v1637 = vadd.f32 %v1414, %v1611
          %v1638 = vadd.f32 %v1417, %v1614
          %v1639 = vadd.f32 %v1422, %v1619
          %v1640 = vadd.f32 %v1425, %v1622
          %v1641 = vld [vmem:[#allocation5] sm:$0x1]
          %v1642 = vsel %vm983, %v1625, 0.0
          %v1643 = vsel %vm983, %v1626, 0.0
          %v1644 = vadd.f32 %v1642, %v1643
          %v1645 = vsel %vm983, %v1627, 0.0
          %v1646 = vadd.f32 %v1644, %v1645
          %v1647 = vsel %vm983, %v1628, 0.0
          %v1648 = vadd.f32 %v1646, %v1647
          %v1649 = vsel %vm983, %v1629, 0.0
          %v1650 = vadd.f32 %v1648, %v1649
          %v1651 = vsel %vm983, %v1630, 0.0
          %v1652 = vadd.f32 %v1650, %v1651
          %v1653 = vsel %vm983, %v1631, 0.0
          %v1654 = vadd.f32 %v1652, %v1653
          %v1655 = vsel %vm983, %v1632, 0.0
          %v1656 = vadd.f32 %v1654, %v1655
          %v1657 = vsel %vm983, %v1633, 0.0
          %v1658 = vadd.f32 %v1656, %v1657
          %v1659 = vsel %vm983, %v1634, 0.0
          %v1660 = vadd.f32 %v1658, %v1659
          %v1661 = vsel %vm983, %v1635, 0.0
          %v1662 = vadd.f32 %v1660, %v1661
          %v1663 = vsel %vm983, %v1636, 0.0
          %v1664 = vadd.f32 %v1662, %v1663
          %v1665 = vsel %vm983, %v1637, 0.0
          %v1666 = vadd.f32 %v1664, %v1665
          %v1667 = vsel %vm983, %v1638, 0.0
          %v1668 = vadd.f32 %v1666, %v1667
          %v1669 = vsel %vm983, %v1639, 0.0
          %v1670 = vadd.f32 %v1668, %v1669
          %v1671 = vsel %vm983, %v1640, 0.0
          %v1672 = vadd.f32 %v1670, %v1671
          %v1673 = vrot.slane %v1672, 4
          %v1674 = vadd.f32 %v1672, %v1673
          %v1675 = vrot.slane %v1674, 2
          %v1676 = vadd.f32 %v1674, %v1675
          %v1677 = vrot.slane %v1676, 1
          %v1678 = vadd.f32 %v1676, %v1677
          %v1679 = vadd.f32 %v1641, %v1678
          %vm1680 = vcmask 516096
          %1681 = vst.msk [vmem:[#allocation5] sm:$0x1] %vm1680, %v1679
          %v1682 = vld [vmem:[#allocation5 + $0x1] sm:$0x1]
          %v1683 = vmul.f32 %v1625, %v1625
          %v1684 = vmul.f32 %v1626, %v1626
          %v1685 = vmul.f32 %v1627, %v1627
          %v1686 = vmul.f32 %v1628, %v1628
          %v1687 = vmul.f32 %v1629, %v1629
          %v1688 = vmul.f32 %v1630, %v1630
          %v1689 = vmul.f32 %v1631, %v1631
          %v1690 = vmul.f32 %v1632, %v1632
          %v1691 = vmul.f32 %v1633, %v1633
          %v1692 = vmul.f32 %v1634, %v1634
          %v1693 = vmul.f32 %v1635, %v1635
          %v1694 = vmul.f32 %v1636, %v1636
          %v1695 = vmul.f32 %v1637, %v1637
          %v1696 = vmul.f32 %v1638, %v1638
          %v1697 = vmul.f32 %v1639, %v1639
          %v1698 = vmul.f32 %v1640, %v1640
          %v1699 = vsel %vm983, %v1683, 0.0
          %v1700 = vsel %vm983, %v1684, 0.0
          %v1701 = vadd.f32 %v1699, %v1700
          %v1702 = vsel %vm983, %v1685, 0.0
          %v1703 = vadd.f32 %v1701, %v1702
          %v1704 = vsel %vm983, %v1686, 0.0
          %v1705 = vadd.f32 %v1703, %v1704
          %v1706 = vsel %vm983, %v1687, 0.0
          %v1707 = vadd.f32 %v1705, %v1706
          %v1708 = vsel %vm983, %v1688, 0.0
          %v1709 = vadd.f32 %v1707, %v1708
          %v1710 = vsel %vm983, %v1689, 0.0
          %v1711 = vadd.f32 %v1709, %v1710
          %v1712 = vsel %vm983, %v1690, 0.0
          %v1713 = vadd.f32 %v1711, %v1712
          %v1714 = vsel %vm983, %v1691, 0.0
          %v1715 = vadd.f32 %v1713, %v1714
          %v1716 = vsel %vm983, %v1692, 0.0
          %v1717 = vadd.f32 %v1715, %v1716
          %v1718 = vsel %vm983, %v1693, 0.0
          %v1719 = vadd.f32 %v1717, %v1718
          %v1720 = vsel %vm983, %v1694, 0.0
          %v1721 = vadd.f32 %v1719, %v1720
          %v1722 = vsel %vm983, %v1695, 0.0
          %v1723 = vadd.f32 %v1721, %v1722
          %v1724 = vsel %vm983, %v1696, 0.0
          %v1725 = vadd.f32 %v1723, %v1724
          %v1726 = vsel %vm983, %v1697, 0.0
          %v1727 = vadd.f32 %v1725, %v1726
          %v1728 = vsel %vm983, %v1698, 0.0
          %v1729 = vadd.f32 %v1727, %v1728
          %v1730 = vrot.slane %v1729, 4
          %v1731 = vadd.f32 %v1729, %v1730
          %v1732 = vrot.slane %v1731, 2
          %v1733 = vadd.f32 %v1731, %v1732
          %v1734 = vrot.slane %v1733, 1
          %v1735 = vadd.f32 %v1733, %v1734
          %v1736 = vadd.f32 %v1682, %v1735
          %1737 = vst.msk [vmem:[#allocation5 + $0x1] sm:$0x1] %vm1680, %v1736
          %v1738 = vpack.c.bf16 %v1626, %v1625
          %v1739 = vpack.c.bf16 %v1628, %v1627
          %v1740 = vpack.c.bf16 %v1630, %v1629
          %v1741 = vpack.c.bf16 %v1632, %v1631
          %v1742 = vpack.c.bf16 %v1634, %v1633
          %v1743 = vpack.c.bf16 %v1636, %v1635
          %v1744 = vpack.c.bf16 %v1638, %v1637
          %v1745 = vpack.c.bf16 %v1640, %v1639
          %v1747 = vshrl.u32 %v1738, 16
          %v1749 = vrot.slane %v1747, 7
          %v1750 = vshll.u32 %v1738, 16
          %v1752 = vor.u32 %v1749, %v1750
          %v1754 = vshrl.u32 %v1739, 16
          %v1756 = vrot.slane %v1754, 7
          %v1757 = vshll.u32 %v1739, 16
          %v1759 = vor.u32 %v1756, %v1757
          %v1761 = vshrl.u32 %v1740, 16
          %v1763 = vrot.slane %v1761, 7
          %v1764 = vshll.u32 %v1740, 16
          %v1766 = vor.u32 %v1763, %v1764
          %v1768 = vshrl.u32 %v1741, 16
          %v1770 = vrot.slane %v1768, 7
          %v1771 = vshll.u32 %v1741, 16
          %v1773 = vor.u32 %v1770, %v1771
          %v1775 = vshrl.u32 %v1742, 16
          %v1777 = vrot.slane %v1775, 7
          %v1778 = vshll.u32 %v1742, 16
          %v1780 = vor.u32 %v1777, %v1778
          %v1782 = vshrl.u32 %v1743, 16
          %v1784 = vrot.slane %v1782, 7
          %v1785 = vshll.u32 %v1743, 16
          %v1787 = vor.u32 %v1784, %v1785
          %v1789 = vshrl.u32 %v1744, 16
          %v1791 = vrot.slane %v1789, 7
          %v1792 = vshll.u32 %v1744, 16
          %v1794 = vor.u32 %v1791, %v1792
          %v1796 = vshrl.u32 %v1745, 16
          %v1798 = vrot.slane %v1796, 7
          %v1799 = vshll.u32 %v1745, 16
          %v1801 = vor.u32 %v1798, %v1799
          %vm1818 = vcmask 1040384
          %vm1819 = vsmask.f32 256
          %vm1820 = vmand %vm1818, %vm1819
          %v1821 = vsel %vm1820, 0, %v1752
          %v1822 = vsel %vm1820, 0, %v1759
          %v1823 = vsel %vm1820, 0, %v1766
          %v1824 = vsel %vm1820, 0, %v1773
          %v1825 = vsel %vm1820, 0, %v1780
          %v1826 = vsel %vm1820, 0, %v1787
          %v1827 = vsel %vm1820, 0, %v1794
          %v1828 = vsel %vm1820, 0, %v1801
          %v1829 = vsel %vm1820, %v1749, 0
          %v1830 = vsel %vm1820, %v1756, 0
          %v1831 = vsel %vm1820, %v1763, 0
          %v1832 = vsel %vm1820, %v1770, 0
          %v1833 = vsel %vm1820, %v1777, 0
          %v1834 = vsel %vm1820, %v1784, 0
          %v1835 = vsel %vm1820, %v1791, 0
          %v1836 = vsel %vm1820, %v1798, 0
          %s1837 = sadd.s32 %s272, 1
          %v1854 = vunpack.c.l.b16 %v1821
          %v1855 = vunpack.c.h.b16 %v1821
          %v1856 = vunpack.c.l.b16 %v1829
          %v1857 = vunpack.c.l.b16 %v1822
          %v1858 = vunpack.c.h.b16 %v1822
          %v1859 = vunpack.c.l.b16 %v1830
          %v1860 = vunpack.c.l.b16 %v1823
          %v1861 = vunpack.c.h.b16 %v1823
          %v1862 = vunpack.c.l.b16 %v1831
          %v1863 = vunpack.c.l.b16 %v1824
          %v1864 = vunpack.c.h.b16 %v1824
          %v1865 = vunpack.c.l.b16 %v1832
          %v1866 = vunpack.c.l.b16 %v1825
          %v1867 = vunpack.c.h.b16 %v1825
          %v1868 = vunpack.c.l.b16 %v1833
          %v1869 = vunpack.c.l.b16 %v1826
          %v1870 = vunpack.c.h.b16 %v1826
          %v1871 = vunpack.c.l.b16 %v1834
          %v1872 = vunpack.c.l.b16 %v1827
          %v1873 = vunpack.c.h.b16 %v1827
          %v1874 = vunpack.c.l.b16 %v1835
          %v1875 = vunpack.c.l.b16 %v1828
          %v1876 = vunpack.c.h.b16 %v1828
          %v1877 = vunpack.c.l.b16 %v1836
          %v1878 = vpack.c.b16 %v1854, %v1854
          %v1879 = vpack.c.b16 %v1855, %v1855
          %v1880 = vpack.c.b16 %v1856, %v1856
          %v1881 = vpack.c.b16 %v1857, %v1857
          %v1882 = vpack.c.b16 %v1858, %v1858
          %v1883 = vpack.c.b16 %v1859, %v1859
          %v1884 = vpack.c.b16 %v1860, %v1860
          %v1885 = vpack.c.b16 %v1861, %v1861
          %v1886 = vpack.c.b16 %v1862, %v1862
          %v1887 = vpack.c.b16 %v1863, %v1863
          %v1888 = vpack.c.b16 %v1864, %v1864
          %v1889 = vpack.c.b16 %v1865, %v1865
          %v1890 = vpack.c.b16 %v1866, %v1866
          %v1891 = vpack.c.b16 %v1867, %v1867
          %v1892 = vpack.c.b16 %v1868, %v1868
          %v1893 = vpack.c.b16 %v1869, %v1869
          %v1894 = vpack.c.b16 %v1870, %v1870
          %v1895 = vpack.c.b16 %v1871, %v1871
          %v1896 = vpack.c.b16 %v1872, %v1872
          %v1897 = vpack.c.b16 %v1873, %v1873
          %v1898 = vpack.c.b16 %v1874, %v1874
          %v1899 = vpack.c.b16 %v1875, %v1875
          %v1900 = vpack.c.b16 %v1876, %v1876
          %v1901 = vpack.c.b16 %v1877, %v1877
          %s1926 = smul.u32 %s1837, 3
          %s1927 = sadd.s32 %s1926, %s527
          %s1928 = smul.addr %s1927, 4
          %s1929 = scalar_lea.vmem [#allocation3], %s1928
          %vm1930 = vcmask 519168
          %1931 = vst.msk [vmem:[%s1929] sm:$0xf] %vm1930, %v1878
          %1932 = vst.msk [vmem:[%s1929 + $0x4] sm:$0xf] %vm1930, %v1879
          %1933 = vst.msk [vmem:[%s1929 + $0x8] sm:$0x1] %vm1680, %v1880
          %1934 = vst.msk [vmem:[%s1929 + $0xc] sm:$0xf] %vm1930, %v1881
          %1935 = vst.msk [vmem:[%s1929 + $0x10] sm:$0xf] %vm1930, %v1882
          %1936 = vst.msk [vmem:[%s1929 + $0x14] sm:$0x1] %vm1680, %v1883
          %1937 = vst.msk [vmem:[%s1929 + $0x18] sm:$0xf] %vm1930, %v1884
          %1938 = vst.msk [vmem:[%s1929 + $0x1c] sm:$0xf] %vm1930, %v1885
          %1939 = vst.msk [vmem:[%s1929 + $0x20] sm:$0x1] %vm1680, %v1886
          %1940 = vst.msk [vmem:[%s1929 + $0x24] sm:$0xf] %vm1930, %v1887
          %1941 = vst.msk [vmem:[%s1929 + $0x28] sm:$0xf] %vm1930, %v1888
          %1942 = vst.msk [vmem:[%s1929 + $0x2c] sm:$0x1] %vm1680, %v1889
          %1943 = vst.msk [vmem:[%s1929 + $0x30] sm:$0xf] %vm1930, %v1890
          %1944 = vst.msk [vmem:[%s1929 + $0x34] sm:$0xf] %vm1930, %v1891
          %1945 = vst.msk [vmem:[%s1929 + $0x38] sm:$0x1] %vm1680, %v1892
          %1946 = vst.msk [vmem:[%s1929 + $0x3c] sm:$0xf] %vm1930, %v1893
          %1947 = vst.msk [vmem:[%s1929 + $0x40] sm:$0xf] %vm1930, %v1894
          %1948 = vst.msk [vmem:[%s1929 + $0x44] sm:$0x1] %vm1680, %v1895
          %1949 = vst.msk [vmem:[%s1929 + $0x48] sm:$0xf] %vm1930, %v1896
          %1950 = vst.msk [vmem:[%s1929 + $0x4c] sm:$0xf] %vm1930, %v1897
          %1951 = vst.msk [vmem:[%s1929 + $0x50] sm:$0x1] %vm1680, %v1898
          %1952 = vst.msk [vmem:[%s1929 + $0x54] sm:$0xf] %vm1930, %v1899
          %1953 = vst.msk [vmem:[%s1929 + $0x58] sm:$0xf] %vm1930, %v1900
          %1954 = vst.msk [vmem:[%s1929 + $0x5c] sm:$0x1] %vm1680, %v1901
        $region48: #{tpu_custom_call.1} parent=35 // pred_fallthru
          _
        %p1955 = scmp.eq.s32.totalorder %s23, 2
        %p1956 = pnand %p1955, %p274
        %p1957 = pneg %p1956
        %p1958 = pnand %p1957, %p277
        %p1959 = pneg %p1958
        // Predicated region
        $region49: #{tpu_custom_call.1} parent=35 // pred_check
          _
        $region50: #{tpu_custom_call.1} parent=35 // pred_check_branch
          %1961 = sbr.rel (%p1958) target = $region52
        $region51: #{tpu_custom_call.1} parent=35 // pred_region
          %v1962 = vld [vmem:[#allocation5] sm:$0x1]
          %v1963 = vmul.f32 %v1962, 0.001953125
          %v1964 = vld [vmem:[#allocation5 + $0x1] sm:$0x1]
          %v1965 = vmul.f32 %v1964, 0.001953125
          %v1966 = vmul.f32 %v1963, %v1963
          %v1967 = vsub.f32 %v1965, %v1966
          %v1968 = vmax.f32 %v1967, 0.0
          %v1969 = vld [vmem:[%s3] sm:$0x1]
          %v1970 = vadd.f32 %v1968, 1e-05
          %v1971 = vrsqrt.pop %v1970
          %v1972 = vmul.f32 %v1969, %v1971
          %vm1973 = vcmask 516096
          %1974 = vst.msk [vmem:[#allocation5 + $0x4] sm:$0x1] %vm1973, %v1972
          %v1975 = vld [vmem:[%s3 + $0x1] sm:$0x1]
          %v1976 = vmul.f32 %v1963, %v1972
          %v1977 = vsub.f32 %v1975, %v1976
          %1978 = vst.msk [vmem:[#allocation5 + $0x5] sm:$0x1] %vm1973, %v1977
        $region52: #{tpu_custom_call.1} parent=35 // pred_fallthru
          _
        // Predicated region
        $region53: #{tpu_custom_call.1} parent=35 // pred_check
          %p1979 = pneg %p1955
        $region54: #{tpu_custom_call.1} parent=35 // pred_check_branch
          %1981 = sbr.rel (%p1979) target = $region56
        $region55: #{tpu_custom_call.1} parent=35 // pred_region
          %s1982 = smul.u32 %s272, 3
          %s1983 = smul.u32 %s24, 54
          %s1984 = sadd.s32 %s1982, %s1983
          %s1985 = smul.addr %s1984, 4
          %s1986 = scalar_lea.vmem [#allocation3], %s1985
          %v1987 = vld [vmem:[%s1986] sm:$0xf]
          %v1988 = vld [vmem:[%s1986 + $0x4] sm:$0xf]
          %v1989 = vld [vmem:[%s1986 + $0x8] sm:$0x1]
          %v1990 = vld [vmem:[%s1986 + $0xc] sm:$0xf]
          %v1991 = vld [vmem:[%s1986 + $0x10] sm:$0xf]
          %v1992 = vld [vmem:[%s1986 + $0x14] sm:$0x1]
          %v1993 = vld [vmem:[%s1986 + $0x18] sm:$0xf]
          %v1994 = vld [vmem:[%s1986 + $0x1c] sm:$0xf]
          %v1995 = vld [vmem:[%s1986 + $0x20] sm:$0x1]
          %v1996 = vld [vmem:[%s1986 + $0x24] sm:$0xf]
          %v1997 = vld [vmem:[%s1986 + $0x28] sm:$0xf]
          %v1998 = vld [vmem:[%s1986 + $0x2c] sm:$0x1]
          %v1999 = vld [vmem:[%s1986 + $0x30] sm:$0xf]
          %v2000 = vld [vmem:[%s1986 + $0x34] sm:$0xf]
          %v2001 = vld [vmem:[%s1986 + $0x38] sm:$0x1]
          %v2002 = vld [vmem:[%s1986 + $0x3c] sm:$0xf]
          %v2003 = vld [vmem:[%s1986 + $0x40] sm:$0xf]
          %v2004 = vld [vmem:[%s1986 + $0x44] sm:$0x1]
          %v2005 = vld [vmem:[%s1986 + $0x48] sm:$0xf]
          %v2006 = vld [vmem:[%s1986 + $0x4c] sm:$0xf]
          %v2007 = vld [vmem:[%s1986 + $0x50] sm:$0x1]
          %v2008 = vld [vmem:[%s1986 + $0x54] sm:$0xf]
          %v2009 = vld [vmem:[%s1986 + $0x58] sm:$0xf]
          %v2010 = vld [vmem:[%s1986 + $0x5c] sm:$0x1]
          %v2011 = vld [vmem:[%s1986 + $0x60] sm:$0xf]
          %v2012 = vld [vmem:[%s1986 + $0x64] sm:$0xf]
          %v2013 = vld [vmem:[%s1986 + $0x68] sm:$0x1]
          %v2014 = vld [vmem:[%s1986 + $0x6c] sm:$0xf]
          %v2015 = vld [vmem:[%s1986 + $0x70] sm:$0xf]
          %v2016 = vld [vmem:[%s1986 + $0x74] sm:$0x1]
          %v2017 = vunpack.c.l.bf16 %v1987
          %v2018 = vunpack.c.l.bf16 %v1988
          %v2019 = vunpack.c.l.bf16 %v1989
          %v2020 = vunpack.c.l.bf16 %v1990
          %v2021 = vunpack.c.l.bf16 %v1991
          %v2022 = vunpack.c.l.bf16 %v1992
          %v2023 = vunpack.c.l.bf16 %v1993
          %v2024 = vunpack.c.l.bf16 %v1994
          %v2025 = vunpack.c.l.bf16 %v1995
          %v2026 = vunpack.c.l.bf16 %v1996
          %v2027 = vunpack.c.l.bf16 %v1997
          %v2028 = vunpack.c.l.bf16 %v1998
          %v2029 = vunpack.c.l.bf16 %v1999
          %v2030 = vunpack.c.l.bf16 %v2000
          %v2031 = vunpack.c.l.bf16 %v2001
          %v2032 = vunpack.c.l.bf16 %v2002
          %v2033 = vunpack.c.l.bf16 %v2003
          %v2034 = vunpack.c.l.bf16 %v2004
          %v2035 = vunpack.c.l.bf16 %v2005
          %v2036 = vunpack.c.l.bf16 %v2006
          %v2037 = vunpack.c.l.bf16 %v2007
          %v2038 = vunpack.c.l.bf16 %v2008
          %v2039 = vunpack.c.l.bf16 %v2009
          %v2040 = vunpack.c.l.bf16 %v2010
          %v2041 = vunpack.c.l.bf16 %v2011
          %v2042 = vunpack.c.l.bf16 %v2012
          %v2043 = vunpack.c.l.bf16 %v2013
          %v2044 = vunpack.c.l.bf16 %v2014
          %v2045 = vunpack.c.l.bf16 %v2015
          %v2046 = vunpack.c.l.bf16 %v2016
          %v2047 = vld [vmem:[#allocation5 + $0x4] sm:$0x1]
          %v2048 = vlaneseq
          %v2049 = vshrl.u32 %v2048, 7
          %v2050 = vsub.s32 0, %v2049
          %v2051 = vrot.slane %v2047, %v2050
          %v2052 = vmul.f32 %v2017, %v2051
          %v2053 = vmul.f32 %v2018, %v2051
          %v2054 = vmul.f32 %v2019, %v2051
          %v2055 = vmul.f32 %v2020, %v2051
          %v2056 = vmul.f32 %v2021, %v2051
          %v2057 = vmul.f32 %v2022, %v2051
          %v2058 = vmul.f32 %v2023, %v2051
          %v2059 = vmul.f32 %v2024, %v2051
          %v2060 = vmul.f32 %v2025, %v2051
          %v2061 = vmul.f32 %v2026, %v2051
          %v2062 = vmul.f32 %v2027, %v2051
          %v2063 = vmul.f32 %v2028, %v2051
          %v2064 = vmul.f32 %v2029, %v2051
          %v2065 = vmul.f32 %v2030, %v2051
          %v2066 = vmul.f32 %v2031, %v2051
          %v2067 = vmul.f32 %v2032, %v2051
          %v2068 = vmul.f32 %v2033, %v2051
          %v2069 = vmul.f32 %v2034, %v2051
          %v2070 = vmul.f32 %v2035, %v2051
          %v2071 = vmul.f32 %v2036, %v2051
          %v2072 = vmul.f32 %v2037, %v2051
          %v2073 = vmul.f32 %v2038, %v2051
          %v2074 = vmul.f32 %v2039, %v2051
          %v2075 = vmul.f32 %v2040, %v2051
          %v2076 = vmul.f32 %v2041, %v2051
          %v2077 = vmul.f32 %v2042, %v2051
          %v2078 = vmul.f32 %v2043, %v2051
          %v2079 = vmul.f32 %v2044, %v2051
          %v2080 = vmul.f32 %v2045, %v2051
          %v2081 = vmul.f32 %v2046, %v2051
          %v2082 = vld [vmem:[#allocation5 + $0x5] sm:$0x1]
          %v2083 = vlaneseq
          %v2084 = vshrl.u32 %v2083, 7
          %v2085 = vsub.s32 0, %v2084
          %v2086 = vrot.slane %v2082, %v2085
          %v2087 = vadd.f32 %v2052, %v2086
          %v2088 = vadd.f32 %v2053, %v2086
          %v2089 = vadd.f32 %v2054, %v2086
          %v2090 = vadd.f32 %v2055, %v2086
          %v2091 = vadd.f32 %v2056, %v2086
          %v2092 = vadd.f32 %v2057, %v2086
          %v2093 = vadd.f32 %v2058, %v2086
          %v2094 = vadd.f32 %v2059, %v2086
          %v2095 = vadd.f32 %v2060, %v2086
          %v2096 = vadd.f32 %v2061, %v2086
          %v2097 = vadd.f32 %v2062, %v2086
          %v2098 = vadd.f32 %v2063, %v2086
          %v2099 = vadd.f32 %v2064, %v2086
          %v2100 = vadd.f32 %v2065, %v2086
          %v2101 = vadd.f32 %v2066, %v2086
          %v2102 = vadd.f32 %v2067, %v2086
          %v2103 = vadd.f32 %v2068, %v2086
          %v2104 = vadd.f32 %v2069, %v2086
          %v2105 = vadd.f32 %v2070, %v2086
          %v2106 = vadd.f32 %v2071, %v2086
          %v2107 = vadd.f32 %v2072, %v2086
          %v2108 = vadd.f32 %v2073, %v2086
          %v2109 = vadd.f32 %v2074, %v2086
          %v2110 = vadd.f32 %v2075, %v2086
          %v2111 = vadd.f32 %v2076, %v2086
          %v2112 = vadd.f32 %v2077, %v2086
          %v2113 = vadd.f32 %v2078, %v2086
          %v2114 = vadd.f32 %v2079, %v2086
          %v2115 = vadd.f32 %v2080, %v2086
          %v2116 = vadd.f32 %v2081, %v2086
          %v2117 = vxor.u32 %v2087, 2147483648
          %v2118 = vxor.u32 %v2088, 2147483648
          %v2119 = vxor.u32 %v2089, 2147483648
          %v2120 = vxor.u32 %v2090, 2147483648
          %v2121 = vxor.u32 %v2091, 2147483648
          %v2122 = vxor.u32 %v2092, 2147483648
          %v2123 = vxor.u32 %v2093, 2147483648
          %v2124 = vxor.u32 %v2094, 2147483648
          %v2125 = vxor.u32 %v2095, 2147483648
          %v2126 = vxor.u32 %v2096, 2147483648
          %v2127 = vxor.u32 %v2097, 2147483648
          %v2128 = vxor.u32 %v2098, 2147483648
          %v2129 = vxor.u32 %v2099, 2147483648
          %v2130 = vxor.u32 %v2100, 2147483648
          %v2131 = vxor.u32 %v2101, 2147483648
          %v2132 = vxor.u32 %v2102, 2147483648
          %v2133 = vxor.u32 %v2103, 2147483648
          %v2134 = vxor.u32 %v2104, 2147483648
          %v2135 = vxor.u32 %v2105, 2147483648
          %v2136 = vxor.u32 %v2106, 2147483648
          %v2137 = vxor.u32 %v2107, 2147483648
          %v2138 = vxor.u32 %v2108, 2147483648
          %v2139 = vxor.u32 %v2109, 2147483648
          %v2140 = vxor.u32 %v2110, 2147483648
          %v2141 = vxor.u32 %v2111, 2147483648
          %v2142 = vxor.u32 %v2112, 2147483648
          %v2143 = vxor.u32 %v2113, 2147483648
          %v2144 = vxor.u32 %v2114, 2147483648
          %v2145 = vxor.u32 %v2115, 2147483648
          %v2146 = vxor.u32 %v2116, 2147483648
          %v2147 = vmul.f32 %v2117, 1.442695
          %v2148 = vpow.pop %v2147
          %v2149 = vmul.f32 %v2118, 1.442695
          %v2150 = vpow.pop %v2149
          %v2151 = vmul.f32 %v2119, 1.442695
          %v2152 = vpow.pop %v2151
          %v2153 = vmul.f32 %v2120, 1.442695
          %v2154 = vpow.pop %v2153
          %v2155 = vmul.f32 %v2121, 1.442695
          %v2156 = vpow.pop %v2155
          %v2157 = vmul.f32 %v2122, 1.442695
          %v2158 = vpow.pop %v2157
          %v2159 = vmul.f32 %v2123, 1.442695
          %v2160 = vpow.pop %v2159
          %v2161 = vmul.f32 %v2124, 1.442695
          %v2162 = vpow.pop %v2161
          %v2163 = vmul.f32 %v2125, 1.442695
          %v2164 = vpow.pop %v2163
          %v2165 = vmul.f32 %v2126, 1.442695
          %v2166 = vpow.pop %v2165
          %v2167 = vmul.f32 %v2127, 1.442695
          %v2168 = vpow.pop %v2167
          %v2169 = vmul.f32 %v2128, 1.442695
          %v2170 = vpow.pop %v2169
          %v2171 = vmul.f32 %v2129, 1.442695
          %v2172 = vpow.pop %v2171
          %v2173 = vmul.f32 %v2130, 1.442695
          %v2174 = vpow.pop %v2173
          %v2175 = vmul.f32 %v2131, 1.442695
          %v2176 = vpow.pop %v2175
          %v2177 = vmul.f32 %v2132, 1.442695
          %v2178 = vpow.pop %v2177
          %v2179 = vmul.f32 %v2133, 1.442695
          %v2180 = vpow.pop %v2179
          %v2181 = vmul.f32 %v2134, 1.442695
          %v2182 = vpow.pop %v2181
          %v2183 = vmul.f32 %v2135, 1.442695
          %v2184 = vpow.pop %v2183
          %v2185 = vmul.f32 %v2136, 1.442695
          %v2186 = vpow.pop %v2185
          %v2187 = vmul.f32 %v2137, 1.442695
          %v2188 = vpow.pop %v2187
          %v2189 = vmul.f32 %v2138, 1.442695
          %v2190 = vpow.pop %v2189
          %v2191 = vmul.f32 %v2139, 1.442695
          %v2192 = vpow.pop %v2191
          %v2193 = vmul.f32 %v2140, 1.442695
          %v2194 = vpow.pop %v2193
          %v2195 = vmul.f32 %v2141, 1.442695
          %v2196 = vpow.pop %v2195
          %v2197 = vmul.f32 %v2142, 1.442695
          %v2198 = vpow.pop %v2197
          %v2199 = vmul.f32 %v2143, 1.442695
          %v2200 = vpow.pop %v2199
          %v2201 = vmul.f32 %v2144, 1.442695
          %v2202 = vpow.pop %v2201
          %v2203 = vmul.f32 %v2145, 1.442695
          %v2204 = vpow.pop %v2203
          %v2205 = vmul.f32 %v2146, 1.442695
          %v2206 = vpow.pop %v2205
          %v2207 = vadd.f32 %v2148, 1.0
          %v2208 = vadd.f32 %v2150, 1.0
          %v2209 = vadd.f32 %v2152, 1.0
          %v2210 = vadd.f32 %v2154, 1.0
          %v2211 = vadd.f32 %v2156, 1.0
          %v2212 = vadd.f32 %v2158, 1.0
          %v2213 = vadd.f32 %v2160, 1.0
          %v2214 = vadd.f32 %v2162, 1.0
          %v2215 = vadd.f32 %v2164, 1.0
          %v2216 = vadd.f32 %v2166, 1.0
          %v2217 = vadd.f32 %v2168, 1.0
          %v2218 = vadd.f32 %v2170, 1.0
          %v2219 = vadd.f32 %v2172, 1.0
          %v2220 = vadd.f32 %v2174, 1.0
          %v2221 = vadd.f32 %v2176, 1.0
          %v2222 = vadd.f32 %v2178, 1.0
          %v2223 = vadd.f32 %v2180, 1.0
          %v2224 = vadd.f32 %v2182, 1.0
          %v2225 = vadd.f32 %v2184, 1.0
          %v2226 = vadd.f32 %v2186, 1.0
          %v2227 = vadd.f32 %v2188, 1.0
          %v2228 = vadd.f32 %v2190, 1.0
          %v2229 = vadd.f32 %v2192, 1.0
          %v2230 = vadd.f32 %v2194, 1.0
          %v2231 = vadd.f32 %v2196, 1.0
          %v2232 = vadd.f32 %v2198, 1.0
          %v2233 = vadd.f32 %v2200, 1.0
          %v2234 = vadd.f32 %v2202, 1.0
          %v2235 = vadd.f32 %v2204, 1.0
          %v2236 = vadd.f32 %v2206, 1.0
          %v2237 = vrcp.pop %v2207
          %v2238 = vmul.f32 1.0, %v2237
          %v2239 = vrcp.pop %v2208
          %v2240 = vmul.f32 1.0, %v2239
          %v2241 = vrcp.pop %v2209
          %v2242 = vmul.f32 1.0, %v2241
          %v2243 = vrcp.pop %v2210
          %v2244 = vmul.f32 1.0, %v2243
          %v2245 = vrcp.pop %v2211
          %v2246 = vmul.f32 1.0, %v2245
          %v2247 = vrcp.pop %v2212
          %v2248 = vmul.f32 1.0, %v2247
          %v2249 = vrcp.pop %v2213
          %v2250 = vmul.f32 1.0, %v2249
          %v2251 = vrcp.pop %v2214
          %v2252 = vmul.f32 1.0, %v2251
          %v2253 = vrcp.pop %v2215
          %v2254 = vmul.f32 1.0, %v2253
          %v2255 = vrcp.pop %v2216
          %v2256 = vmul.f32 1.0, %v2255
          %v2257 = vrcp.pop %v2217
          %v2258 = vmul.f32 1.0, %v2257
          %v2259 = vrcp.pop %v2218
          %v2260 = vmul.f32 1.0, %v2259
          %v2261 = vrcp.pop %v2219
          %v2262 = vmul.f32 1.0, %v2261
          %v2263 = vrcp.pop %v2220
          %v2264 = vmul.f32 1.0, %v2263
          %v2265 = vrcp.pop %v2221
          %v2266 = vmul.f32 1.0, %v2265
          %v2267 = vrcp.pop %v2222
          %v2268 = vmul.f32 1.0, %v2267
          %v2269 = vrcp.pop %v2223
          %v2270 = vmul.f32 1.0, %v2269
          %v2271 = vrcp.pop %v2224
          %v2272 = vmul.f32 1.0, %v2271
          %v2273 = vrcp.pop %v2225
          %v2274 = vmul.f32 1.0, %v2273
          %v2275 = vrcp.pop %v2226
          %v2276 = vmul.f32 1.0, %v2275
          %v2277 = vrcp.pop %v2227
          %v2278 = vmul.f32 1.0, %v2277
          %v2279 = vrcp.pop %v2228
          %v2280 = vmul.f32 1.0, %v2279
          %v2281 = vrcp.pop %v2229
          %v2282 = vmul.f32 1.0, %v2281
          %v2283 = vrcp.pop %v2230
          %v2284 = vmul.f32 1.0, %v2283
          %v2285 = vrcp.pop %v2231
          %v2286 = vmul.f32 1.0, %v2285
          %v2287 = vrcp.pop %v2232
          %v2288 = vmul.f32 1.0, %v2287
          %v2289 = vrcp.pop %v2233
          %v2290 = vmul.f32 1.0, %v2289
          %v2291 = vrcp.pop %v2234
          %v2292 = vmul.f32 1.0, %v2291
          %v2293 = vrcp.pop %v2235
          %v2294 = vmul.f32 1.0, %v2293
          %v2295 = vrcp.pop %v2236
          %v2296 = vmul.f32 1.0, %v2295
          %v2297 = vmul.f32 %v2087, %v2238
          %v2298 = vmul.f32 %v2088, %v2240
          %v2299 = vmul.f32 %v2089, %v2242
          %v2300 = vmul.f32 %v2090, %v2244
          %v2301 = vmul.f32 %v2091, %v2246
          %v2302 = vmul.f32 %v2092, %v2248
          %v2303 = vmul.f32 %v2093, %v2250
          %v2304 = vmul.f32 %v2094, %v2252
          %v2305 = vmul.f32 %v2095, %v2254
          %v2306 = vmul.f32 %v2096, %v2256
          %v2307 = vmul.f32 %v2097, %v2258
          %v2308 = vmul.f32 %v2098, %v2260
          %v2309 = vmul.f32 %v2099, %v2262
          %v2310 = vmul.f32 %v2100, %v2264
          %v2311 = vmul.f32 %v2101, %v2266
          %v2312 = vmul.f32 %v2102, %v2268
          %v2313 = vmul.f32 %v2103, %v2270
          %v2314 = vmul.f32 %v2104, %v2272
          %v2315 = vmul.f32 %v2105, %v2274
          %v2316 = vmul.f32 %v2106, %v2276
          %v2317 = vmul.f32 %v2107, %v2278
          %v2318 = vmul.f32 %v2108, %v2280
          %v2319 = vmul.f32 %v2109, %v2282
          %v2320 = vmul.f32 %v2110, %v2284
          %v2321 = vmul.f32 %v2111, %v2286
          %v2322 = vmul.f32 %v2112, %v2288
          %v2323 = vmul.f32 %v2113, %v2290
          %v2324 = vmul.f32 %v2114, %v2292
          %v2325 = vmul.f32 %v2115, %v2294
          %v2326 = vmul.f32 %v2116, %v2296
          %v2327 = vstv %s272
          %v2328 = vadd.s32 %v2327, 1
          %v2329 = vadd.s32 %v2327, 2
          %v2330 = vadd.s32 %v2327, 3
          %v2331 = vadd.s32 %v2327, 4
          %v2332 = vadd.s32 %v2327, 5
          %v2333 = vadd.s32 %v2327, 6
          %v2334 = vadd.s32 %v2327, 7
          %v2335 = vadd.s32 %v2327, 8
          %v2336 = vadd.s32 %v2327, 9
          %v2337 = vlaneseq
          %v2338 = vshrl.u32 %v2337, 7
          %v2339 = vadd.s32 %v2338, 8
          %v2340 = vadd.s32 %v2338, 16
          %vm2341 = vcmp.ge.s32.totalorder %v2327, 1
          %vm2342 = vcmp.ge.s32.totalorder %v2328, 1
          %vm2343 = vcmp.ge.s32.totalorder %v2329, 1
          %vm2344 = vcmp.ge.s32.totalorder %v2330, 1
          %vm2345 = vcmp.ge.s32.totalorder %v2331, 1
          %vm2346 = vcmp.ge.s32.totalorder %v2332, 1
          %vm2347 = vcmp.ge.s32.totalorder %v2333, 1
          %vm2348 = vcmp.ge.s32.totalorder %v2334, 1
          %vm2349 = vcmp.ge.s32.totalorder %v2335, 1
          %vm2350 = vcmp.ge.s32.totalorder %v2336, 1
          %vm2351 = vcmp.le.s32.totalorder %v2327, 16
          %vm2352 = vcmp.le.s32.totalorder %v2328, 16
          %vm2353 = vcmp.le.s32.totalorder %v2329, 16
          %vm2354 = vcmp.le.s32.totalorder %v2330, 16
          %vm2355 = vcmp.le.s32.totalorder %v2331, 16
          %vm2356 = vcmp.le.s32.totalorder %v2332, 16
          %vm2357 = vcmp.le.s32.totalorder %v2333, 16
          %vm2358 = vcmp.le.s32.totalorder %v2334, 16
          %vm2359 = vcmp.le.s32.totalorder %v2335, 16
          %vm2360 = vcmp.le.s32.totalorder %v2336, 16
          %vm2361 = vmand %vm2341, %vm2351
          %vm2362 = vmand %vm2342, %vm2352
          %vm2363 = vmand %vm2343, %vm2353
          %vm2364 = vmand %vm2344, %vm2354
          %vm2365 = vmand %vm2345, %vm2355
          %vm2366 = vmand %vm2346, %vm2356
          %vm2367 = vmand %vm2347, %vm2357
          %vm2368 = vmand %vm2348, %vm2358
          %vm2369 = vmand %vm2349, %vm2359
          %vm2370 = vmand %vm2350, %vm2360
          %vm2371 = vcmp.ge.s32.totalorder %v2338, 1
          %vm2372 = vcmp.ge.s32.totalorder %v2339, 1
          %vm2373 = vcmp.ge.s32.totalorder %v2340, 1
          %vm2374 = vmand %vm2361, %vm2371
          %vm2375 = vmand %vm2361, %vm2372
          %vm2376 = vmand %vm2361, %vm2373
          %vm2377 = vmand %vm2362, %vm2371
          %vm2378 = vmand %vm2362, %vm2372
          %vm2379 = vmand %vm2362, %vm2373
          %vm2380 = vmand %vm2363, %vm2371
          %vm2381 = vmand %vm2363, %vm2372
          %vm2382 = vmand %vm2363, %vm2373
          %vm2383 = vmand %vm2364, %vm2371
          %vm2384 = vmand %vm2364, %vm2372
          %vm2385 = vmand %vm2364, %vm2373
          %vm2386 = vmand %vm2365, %vm2371
          %vm2387 = vmand %vm2365, %vm2372
          %vm2388 = vmand %vm2365, %vm2373
          %vm2389 = vmand %vm2366, %vm2371
          %vm2390 = vmand %vm2366, %vm2372
          %vm2391 = vmand %vm2366, %vm2373
          %vm2392 = vmand %vm2367, %vm2371
          %vm2393 = vmand %vm2367, %vm2372
          %vm2394 = vmand %vm2367, %vm2373
          %vm2395 = vmand %vm2368, %vm2371
          %vm2396 = vmand %vm2368, %vm2372
          %vm2397 = vmand %vm2368, %vm2373
          %vm2398 = vmand %vm2369, %vm2371
          %vm2399 = vmand %vm2369, %vm2372
          %vm2400 = vmand %vm2369, %vm2373
          %vm2401 = vmand %vm2370, %vm2371
          %vm2402 = vmand %vm2370, %vm2372
          %vm2403 = vmand %vm2370, %vm2373
          %vm2404 = vcmp.le.s32.totalorder %v2338, 16
          %vm2405 = vcmp.le.s32.totalorder %v2339, 16
          %vm2406 = vcmp.le.s32.totalorder %v2340, 16
          %vm2407 = vmand %vm2374, %vm2404
          %vm2408 = vmand %vm2375, %vm2405
          %vm2409 = vmand %vm2376, %vm2406
          %vm2410 = vmand %vm2377, %vm2404
          %vm2411 = vmand %vm2378, %vm2405
          %vm2412 = vmand %vm2379, %vm2406
          %vm2413 = vmand %vm2380, %vm2404
          %vm2414 = vmand %vm2381, %vm2405
          %vm2415 = vmand %vm2382, %vm2406
          %vm2416 = vmand %vm2383, %vm2404
          %vm2417 = vmand %vm2384, %vm2405
          %vm2418 = vmand %vm2385, %vm2406
          %vm2419 = vmand %vm2386, %vm2404
          %vm2420 = vmand %vm2387, %vm2405
          %vm2421 = vmand %vm2388, %vm2406
          %vm2422 = vmand %vm2389, %vm2404
          %vm2423 = vmand %vm2390, %vm2405
          %vm2424 = vmand %vm2391, %vm2406
          %vm2425 = vmand %vm2392, %vm2404
          %vm2426 = vmand %vm2393, %vm2405
          %vm2427 = vmand %vm2394, %vm2406
          %vm2428 = vmand %vm2395, %vm2404
          %vm2429 = vmand %vm2396, %vm2405
          %vm2430 = vmand %vm2397, %vm2406
          %vm2431 = vmand %vm2398, %vm2404
          %vm2432 = vmand %vm2399, %vm2405
          %vm2433 = vmand %vm2400, %vm2406
          %vm2434 = vmand %vm2401, %vm2404
          %vm2435 = vmand %vm2402, %vm2405
          %vm2436 = vmand %vm2403, %vm2406
          %v2437 = vsel %vm2407, %v2297, 0.0
          %v2438 = vsel %vm2408, %v2298, 0.0
          %v2439 = vsel %vm2409, %v2299, 0.0
          %v2440 = vsel %vm2410, %v2300, 0.0
          %v2441 = vsel %vm2411, %v2301, 0.0
          %v2442 = vsel %vm2412, %v2302, 0.0
          %v2443 = vsel %vm2413, %v2303, 0.0
          %v2444 = vsel %vm2414, %v2304, 0.0
          %v2445 = vsel %vm2415, %v2305, 0.0
          %v2446 = vsel %vm2416, %v2306, 0.0
          %v2447 = vsel %vm2417, %v2307, 0.0
          %v2448 = vsel %vm2418, %v2308, 0.0
          %v2449 = vsel %vm2419, %v2309, 0.0
          %v2450 = vsel %vm2420, %v2310, 0.0
          %v2451 = vsel %vm2421, %v2311, 0.0
          %v2452 = vsel %vm2422, %v2312, 0.0
          %v2453 = vsel %vm2423, %v2313, 0.0
          %v2454 = vsel %vm2424, %v2314, 0.0
          %v2455 = vsel %vm2425, %v2315, 0.0
          %v2456 = vsel %vm2426, %v2316, 0.0
          %v2457 = vsel %vm2427, %v2317, 0.0
          %v2458 = vsel %vm2428, %v2318, 0.0
          %v2459 = vsel %vm2429, %v2319, 0.0
          %v2460 = vsel %vm2430, %v2320, 0.0
          %v2461 = vsel %vm2431, %v2321, 0.0
          %v2462 = vsel %vm2432, %v2322, 0.0
          %v2463 = vsel %vm2433, %v2323, 0.0
          %v2464 = vsel %vm2434, %v2324, 0.0
          %v2465 = vsel %vm2435, %v2325, 0.0
          %v2466 = vsel %vm2436, %v2326, 0.0
          %v2467 = vpack.c.bf16 %v2438, %v2437
          %v2468 = vpack.c.bf16 %v2439, %v2439
          %v2469 = vpack.c.bf16 %v2441, %v2440
          %v2470 = vpack.c.bf16 %v2442, %v2442
          %v2471 = vpack.c.bf16 %v2444, %v2443
          %v2472 = vpack.c.bf16 %v2445, %v2445
          %v2473 = vpack.c.bf16 %v2447, %v2446
          %v2474 = vpack.c.bf16 %v2448, %v2448
          %v2475 = vpack.c.bf16 %v2450, %v2449
          %v2476 = vpack.c.bf16 %v2451, %v2451
          %v2477 = vpack.c.bf16 %v2453, %v2452
          %v2478 = vpack.c.bf16 %v2454, %v2454
          %v2479 = vpack.c.bf16 %v2456, %v2455
          %v2480 = vpack.c.bf16 %v2457, %v2457
          %v2481 = vpack.c.bf16 %v2459, %v2458
          %v2482 = vpack.c.bf16 %v2460, %v2460
          %v2483 = vpack.c.bf16 %v2462, %v2461
          %v2484 = vpack.c.bf16 %v2463, %v2463
          %v2485 = vpack.c.bf16 %v2465, %v2464
          %v2486 = vpack.c.bf16 %v2466, %v2466
          %vm2487 = vsmask.f32 7424
          %v2489 = vshrl.u32 %v2467, 16
          %v2491 = vshll.u32 %v2467, 16
          %v2493 = vrot.slane %v2491, 1
          %v2494 = vor.u32 %v2489, %v2493
          %v2496 = vshll.u32 %v2468, 16
          %v2498 = vrot.slane %v2496, 1
          %v2499 = vsel %vm2487, %v2494, %v2498
          %v2501 = vshrl.u32 %v2469, 16
          %v2503 = vshll.u32 %v2469, 16
          %v2505 = vrot.slane %v2503, 1
          %v2506 = vor.u32 %v2501, %v2505
          %v2508 = vshll.u32 %v2470, 16
          %v2510 = vrot.slane %v2508, 1
          %v2511 = vsel %vm2487, %v2506, %v2510
          %v2513 = vshrl.u32 %v2471, 16
          %v2515 = vshll.u32 %v2471, 16
          %v2517 = vrot.slane %v2515, 1
          %v2518 = vor.u32 %v2513, %v2517
          %v2520 = vshll.u32 %v2472, 16
          %v2522 = vrot.slane %v2520, 1
          %v2523 = vsel %vm2487, %v2518, %v2522
          %v2525 = vshrl.u32 %v2473, 16
          %v2527 = vshll.u32 %v2473, 16
          %v2529 = vrot.slane %v2527, 1
          %v2530 = vor.u32 %v2525, %v2529
          %v2532 = vshll.u32 %v2474, 16
          %v2534 = vrot.slane %v2532, 1
          %v2535 = vsel %vm2487, %v2530, %v2534
          %v2537 = vshrl.u32 %v2475, 16
          %v2539 = vshll.u32 %v2475, 16
          %v2541 = vrot.slane %v2539, 1
          %v2542 = vor.u32 %v2537, %v2541
          %v2544 = vshll.u32 %v2476, 16
          %v2546 = vrot.slane %v2544, 1
          %v2547 = vsel %vm2487, %v2542, %v2546
          %v2549 = vshrl.u32 %v2477, 16
          %v2551 = vshll.u32 %v2477, 16
          %v2553 = vrot.slane %v2551, 1
          %v2554 = vor.u32 %v2549, %v2553
          %v2556 = vshll.u32 %v2478, 16
          %v2558 = vrot.slane %v2556, 1
          %v2559 = vsel %vm2487, %v2554, %v2558
          %v2561 = vshrl.u32 %v2479, 16
          %v2563 = vshll.u32 %v2479, 16
          %v2565 = vrot.slane %v2563, 1
          %v2566 = vor.u32 %v2561, %v2565
          %v2568 = vshll.u32 %v2480, 16
          %v2570 = vrot.slane %v2568, 1
          %v2571 = vsel %vm2487, %v2566, %v2570
          %v2573 = vshrl.u32 %v2481, 16
          %v2575 = vshll.u32 %v2481, 16
          %v2577 = vrot.slane %v2575, 1
          %v2578 = vor.u32 %v2573, %v2577
          %v2580 = vshll.u32 %v2482, 16
          %v2582 = vrot.slane %v2580, 1
          %v2583 = vsel %vm2487, %v2578, %v2582
          %v2585 = vshrl.u32 %v2483, 16
          %v2587 = vshll.u32 %v2483, 16
          %v2589 = vrot.slane %v2587, 1
          %v2590 = vor.u32 %v2585, %v2589
          %v2592 = vshll.u32 %v2484, 16
          %v2594 = vrot.slane %v2592, 1
          %v2595 = vsel %vm2487, %v2590, %v2594
          %v2597 = vshrl.u32 %v2485, 16
          %v2599 = vshll.u32 %v2485, 16
          %v2601 = vrot.slane %v2599, 1
          %v2602 = vor.u32 %v2597, %v2601
          %v2604 = vshll.u32 %v2486, 16
          %v2606 = vrot.slane %v2604, 1
          %v2607 = vsel %vm2487, %v2602, %v2606
          %2608 = vrot.lane.b32.xlu0 %v2499, 64
          %v2609 = vpop.permute.xlu0 %2608
          %2610 = vrot.lane.b32.xlu0 %v2511, 64
          %v2611 = vpop.permute.xlu0 %2610
          %2612 = vrot.lane.b32.xlu0 %v2523, 64
          %v2613 = vpop.permute.xlu0 %2612
          %2614 = vrot.lane.b32.xlu0 %v2535, 64
          %v2615 = vpop.permute.xlu0 %2614
          %2616 = vrot.lane.b32.xlu0 %v2547, 64
          %v2617 = vpop.permute.xlu0 %2616
          %2618 = vrot.lane.b32.xlu0 %v2559, 64
          %v2619 = vpop.permute.xlu0 %2618
          %2620 = vrot.lane.b32.xlu0 %v2571, 64
          %v2621 = vpop.permute.xlu0 %2620
          %2622 = vrot.lane.b32.xlu0 %v2583, 64
          %v2623 = vpop.permute.xlu0 %2622
          %2624 = vrot.lane.b32.xlu0 %v2595, 64
          %v2625 = vpop.permute.xlu0 %2624
          %2626 = vrot.lane.b32.xlu0 %v2607, 64
          %v2627 = vpop.permute.xlu0 %2626
          %vm2648 = vcmask 1046528
          %v2649 = vrot.slane %v2467, 1
          %v2650 = vrot.slane %v2468, 1
          %v2651 = vsel %vm2648, %v2649, %v2650
          %v2652 = vrot.slane %v2469, 1
          %v2653 = vrot.slane %v2470, 1
          %v2654 = vsel %vm2648, %v2652, %v2653
          %v2655 = vrot.slane %v2471, 1
          %v2656 = vrot.slane %v2472, 1
          %v2657 = vsel %vm2648, %v2655, %v2656
          %v2658 = vrot.slane %v2473, 1
          %v2659 = vrot.slane %v2474, 1
          %v2660 = vsel %vm2648, %v2658, %v2659
          %v2661 = vrot.slane %v2475, 1
          %v2662 = vrot.slane %v2476, 1
          %v2663 = vsel %vm2648, %v2661, %v2662
          %v2664 = vrot.slane %v2477, 1
          %v2665 = vrot.slane %v2478, 1
          %v2666 = vsel %vm2648, %v2664, %v2665
          %v2667 = vrot.slane %v2479, 1
          %v2668 = vrot.slane %v2480, 1
          %v2669 = vsel %vm2648, %v2667, %v2668
          %v2670 = vrot.slane %v2481, 1
          %v2671 = vrot.slane %v2482, 1
          %v2672 = vsel %vm2648, %v2670, %v2671
          %v2673 = vrot.slane %v2483, 1
          %v2674 = vrot.slane %v2484, 1
          %v2675 = vsel %vm2648, %v2673, %v2674
          %v2676 = vrot.slane %v2485, 1
          %v2677 = vrot.slane %v2486, 1
          %v2678 = vsel %vm2648, %v2676, %v2677
          %vm2679 = vcmask 523264
          %v2681 = vsel %vm2679, %v2467, %v2609
          %v2684 = vsel %vm2679, %v2469, %v2611
          %v2687 = vsel %vm2679, %v2471, %v2613
          %v2690 = vsel %vm2679, %v2473, %v2615
          %v2693 = vsel %vm2679, %v2475, %v2617
          %v2696 = vsel %vm2679, %v2477, %v2619
          %v2699 = vsel %vm2679, %v2479, %v2621
          %v2702 = vsel %vm2679, %v2481, %v2623
          %v2705 = vsel %vm2679, %v2483, %v2625
          %v2708 = vsel %vm2679, %v2485, %v2627
          %v2710 = vld [vmem:[%s2] sm:$0xf]
          %v2711 = vld [vmem:[%s2 + $0x4] sm:$0xf]
          %v2712 = vld [vmem:[%s2 + $0x8] sm:$0xf]
          %v2713 = vld [vmem:[%s2 + $0xc] sm:$0xf]
          %v2714 = vld [vmem:[%s2 + $0x10] sm:$0xf]
          %v2715 = vld [vmem:[%s2 + $0x14] sm:$0xf]
          %v2716 = vld [vmem:[%s2 + $0x18] sm:$0xf]
          %v2717 = vld [vmem:[%s2 + $0x1c] sm:$0xf]
          %v2718 = vld [vmem:[%s2 + $0x20] sm:$0xf]
          %v2719 = vld [vmem:[%s2 + $0x24] sm:$0xf]
          %v2720 = vld [vmem:[%s2 + $0x28] sm:$0xf]
          %v2721 = vld [vmem:[%s2 + $0x2c] sm:$0xf]
          %v2722 = vld [vmem:[%s2 + $0x30] sm:$0xf]
          %v2723 = vld [vmem:[%s2 + $0x34] sm:$0xf]
          %v2724 = vld [vmem:[%s2 + $0x38] sm:$0xf]
          %v2725 = vld [vmem:[%s2 + $0x3c] sm:$0xf]
          %v2726 = vld [vmem:[%s2 + $0x40] sm:$0xf]
          %v2727 = vld [vmem:[%s2 + $0x44] sm:$0xf]
          %v2728 = vld [vmem:[%s2 + $0x48] sm:$0xf]
          %v2729 = vld [vmem:[%s2 + $0x4c] sm:$0xf]
          %v2730 = vld [vmem:[%s2 + $0x50] sm:$0xf]
          %v2731 = vld [vmem:[%s2 + $0x54] sm:$0xf]
          %v2732 = vld [vmem:[%s2 + $0x58] sm:$0xf]
          %v2733 = vld [vmem:[%s2 + $0x5c] sm:$0xf]
          %s2734 = scalar_lea.vmem %s2, 96
          %v2735 = vld [vmem:[%s2734] sm:$0xf]
          %v2736 = vld [vmem:[%s2734 + $0x4] sm:$0xf]
          %v2737 = vld [vmem:[%s2734 + $0x8] sm:$0xf]
          %v2738 = vld [vmem:[%s2734 + $0xc] sm:$0xf]
          %v2739 = vld [vmem:[%s2734 + $0x10] sm:$0xf]
          %v2740 = vld [vmem:[%s2734 + $0x14] sm:$0xf]
          %v2741 = vld [vmem:[%s2734 + $0x18] sm:$0xf]
          %v2742 = vld [vmem:[%s2734 + $0x1c] sm:$0xf]
          %v2743 = vld [vmem:[%s2734 + $0x20] sm:$0xf]
          %v2744 = vld [vmem:[%s2734 + $0x24] sm:$0xf]
          %v2745 = vld [vmem:[%s2734 + $0x28] sm:$0xf]
          %v2746 = vld [vmem:[%s2734 + $0x2c] sm:$0xf]
          %v2747 = vld [vmem:[%s2734 + $0x30] sm:$0xf]
          %v2748 = vld [vmem:[%s2734 + $0x34] sm:$0xf]
          %v2749 = vld [vmem:[%s2734 + $0x38] sm:$0xf]
          %v2750 = vld [vmem:[%s2734 + $0x3c] sm:$0xf]
          %v2751 = vld [vmem:[%s2734 + $0x40] sm:$0xf]
          %v2752 = vld [vmem:[%s2734 + $0x44] sm:$0xf]
          %v2753 = vld [vmem:[%s2734 + $0x48] sm:$0xf]
          %v2754 = vld [vmem:[%s2734 + $0x4c] sm:$0xf]
          %v2755 = vld [vmem:[%s2734 + $0x50] sm:$0xf]
          %v2756 = vld [vmem:[%s2734 + $0x54] sm:$0xf]
          %v2757 = vld [vmem:[%s2734 + $0x58] sm:$0xf]
          %v2758 = vld [vmem:[%s2734 + $0x5c] sm:$0xf]
          %v2783 = vunpack.c.l.b16 %v2735
          %v2784 = vunpack.c.l.b16 %v2736
          %v2785 = vunpack.c.l.b16 %v2737
          %v2786 = vunpack.c.l.b16 %v2738
          %v2787 = vunpack.c.l.b16 %v2739
          %v2788 = vunpack.c.l.b16 %v2740
          %v2789 = vunpack.c.l.b16 %v2741
          %v2790 = vunpack.c.l.b16 %v2742
          %v2791 = vunpack.c.l.b16 %v2743
          %v2792 = vunpack.c.l.b16 %v2744
          %v2793 = vunpack.c.l.b16 %v2745
          %v2794 = vunpack.c.l.b16 %v2746
          %v2795 = vunpack.c.l.b16 %v2747
          %v2796 = vunpack.c.l.b16 %v2748
          %v2797 = vunpack.c.l.b16 %v2749
          %v2798 = vunpack.c.l.b16 %v2750
          %v2799 = vunpack.c.l.b16 %v2751
          %v2800 = vunpack.c.l.b16 %v2752
          %v2801 = vunpack.c.l.b16 %v2753
          %v2802 = vunpack.c.l.b16 %v2754
          %v2803 = vunpack.c.l.b16 %v2755
          %v2804 = vunpack.c.l.b16 %v2756
          %v2805 = vunpack.c.l.b16 %v2757
          %v2806 = vunpack.c.l.b16 %v2758
          %v2807 = vpack.c.b16 %v2784, %v2783
          %v2808 = vpack.c.b16 %v2786, %v2785
          %v2809 = vpack.c.b16 %v2788, %v2787
          %v2810 = vpack.c.b16 %v2790, %v2789
          %v2811 = vpack.c.b16 %v2792, %v2791
          %v2812 = vpack.c.b16 %v2794, %v2793
          %v2813 = vpack.c.b16 %v2796, %v2795
          %v2814 = vpack.c.b16 %v2798, %v2797
          %v2815 = vpack.c.b16 %v2800, %v2799
          %v2816 = vpack.c.b16 %v2802, %v2801
          %v2817 = vpack.c.b16 %v2804, %v2803
          %v2818 = vpack.c.b16 %v2806, %v2805
          %v2832 = vsel %vm2679, %v2654, 0
          %v2835 = vsel %vm2679, %v2657, 0
          %v2838 = vsel %vm2679, %v2660, 0
          %v2841 = vsel %vm2679, %v2663, 0
          %v2844 = vsel %vm2679, %v2666, 0
          %v2847 = vsel %vm2679, %v2669, 0
          %v2850 = vsel %vm2679, %v2672, 0
          %v2853 = vsel %vm2679, %v2675, 0
          %2855 = vmatprep.subr.bf16.mxu0 0
          %2856 = vmatpush1.bf16.msra.mxu0 %v2807
          %2857 = vmatprep.subr.bf16.mxu0 0
          %2858 = vmatpush1.bf16.msra.mxu0 %v2808
          %2859 = vmatprep.subr.bf16.mxu0 0
          %2860 = vmatpush1.bf16.msra.mxu0 %v2809
          %2861 = vmatprep.subr.bf16.mxu0 0
          %2862 = vmatpush1.bf16.msra.mxu0 %v2810
          %2863 = vmatprep.subr.bf16.mxu0 0
          %2864 = vmatpush1.bf16.msra.mxu0 %v2811
          %2865 = vmatprep.subr.bf16.mxu0 0
          %2866 = vmatpush1.bf16.msra.mxu0 %v2812
          %2867 = vmatprep.subr.bf16.mxu0 0
          %2868 = vmatpush1.bf16.msra.mxu0 %v2813
          %2869 = vmatprep.subr.bf16.mxu0 0
          %2870 = vmatpush1.bf16.msra.mxu0 %v2814
          %2871 = vmatprep.subr.bf16.mxu0 0
          %2872 = vmatpush1.bf16.msra.mxu0 %v2815
          %2873 = vmatprep.subr.bf16.mxu0 0
          %2874 = vmatpush1.bf16.msra.mxu0 %v2816
          %2875 = vmatprep.subr.bf16.mxu0 0
          %2876 = vmatpush1.bf16.msra.mxu0 %v2817
          %2877 = vmatprep.subr.bf16.mxu0 0
          %2878 = vmatpush1.bf16.msra.mxu0 %v2818
          %2879 = vmatprep.subr.bf16.mxu0 0
          %2880 = vmatpush1.bf16.msra.mxu0 0
          %2881 = vmatprep.subr.bf16.mxu0 0
          %2882 = vmatpush1.bf16.msra.mxu0 0
          %2883 = vmatprep.subr.bf16.mxu0 0
          %2884 = vmatpush1.bf16.msra.mxu0 0
          %2885 = vmatprep.subr.bf16.mxu0 0
          %2886 = vmatpush1.bf16.msra.mxu0 0
          %2887 = vmatprep.mubr.bf16.mxu0 %v2832
          %2888 = vmatmul.mubr.bf16.gmra.mrb[0].mxu0 %v2684
          %v2889 = vpop.f32.mrb[0].mxu0
          %v2890 = vadd.f32 0.0, %v2889
          %v2891 = vpop.f32.mrb[0].mxu0
          %v2892 = vpop.f32.mrb[0].mxu0
          %v2893 = vadd.f32 0.0, %v2892
          %v2894 = vpop.f32.mrb[0].mxu0
          %2895 = vmatprep.mubr.bf16.mxu0 %v2835
          %2896 = vmatmul.mubr.bf16.gmra.mrb[0].mxu0 %v2687
          %v2897 = vpop.f32.mrb[0].mxu0
          %v2898 = vadd.f32 0.0, %v2897
          %v2899 = vpop.f32.mrb[0].mxu0
          %v2900 = vpop.f32.mrb[0].mxu0
          %v2901 = vadd.f32 0.0, %v2900
          %v2902 = vpop.f32.mrb[0].mxu0
          %2903 = vmatprep.mubr.bf16.mxu0 %v2838
          %2904 = vmatmul.mubr.bf16.gmra.mrb[0].mxu0 %v2690
          %v2905 = vpop.f32.mrb[0].mxu0
          %v2906 = vadd.f32 0.0, %v2905
          %v2907 = vpop.f32.mrb[0].mxu0
          %v2908 = vpop.f32.mrb[0].mxu0
          %v2909 = vadd.f32 0.0, %v2908
          %v2910 = vpop.f32.mrb[0].mxu0
          %2911 = vmatprep.mubr.bf16.mxu0 %v2841
          %2912 = vmatmul.mubr.bf16.gmra.mrb[0].mxu0 %v2693
          %v2913 = vpop.f32.mrb[0].mxu0
          %v2914 = vadd.f32 0.0, %v2913
          %v2915 = vpop.f32.mrb[0].mxu0
          %v2916 = vpop.f32.mrb[0].mxu0
          %v2917 = vadd.f32 0.0, %v2916
          %v2918 = vpop.f32.mrb[0].mxu0
          %2919 = vmatprep.mubr.bf16.mxu0 %v2844
          %2920 = vmatmul.mubr.bf16.gmra.mrb[0].mxu0 %v2696
          %v2921 = vpop.f32.mrb[0].mxu0
          %v2922 = vadd.f32 0.0, %v2921
          %v2923 = vpop.f32.mrb[0].mxu0
          %v2924 = vpop.f32.mrb[0].mxu0
          %v2925 = vadd.f32 0.0, %v2924
          %v2926 = vpop.f32.mrb[0].mxu0
          %2927 = vmatprep.mubr.bf16.mxu0 %v2847
          %2928 = vmatmul.mubr.bf16.gmra.mrb[0].mxu0 %v2699
          %v2929 = vpop.f32.mrb[0].mxu0
          %v2930 = vadd.f32 0.0, %v2929
          %v2931 = vpop.f32.mrb[0].mxu0
          %v2932 = vpop.f32.mrb[0].mxu0
          %v2933 = vadd.f32 0.0, %v2932
          %v2934 = vpop.f32.mrb[0].mxu0
          %2935 = vmatprep.mubr.bf16.mxu0 %v2850
          %2936 = vmatmul.mubr.bf16.gmra.mrb[0].mxu0 %v2702
          %v2937 = vpop.f32.mrb[0].mxu0
          %v2938 = vadd.f32 0.0, %v2937
          %v2939 = vpop.f32.mrb[0].mxu0
          %v2940 = vpop.f32.mrb[0].mxu0
          %v2941 = vadd.f32 0.0, %v2940
          %v2942 = vpop.f32.mrb[0].mxu0
          %2943 = vmatprep.mubr.bf16.mxu0 %v2853
          %2944 = vmatmul.mubr.bf16.gmra.mrb[0].mxu0 %v2705
          %v2945 = vpop.f32.mrb[0].mxu0
          %v2946 = vadd.f32 0.0, %v2945
          %v2947 = vpop.f32.mrb[0].mxu0
          %v2948 = vpop.f32.mrb[0].mxu0
          %v2949 = vadd.f32 0.0, %v2948
          %v2950 = vpop.f32.mrb[0].mxu0
          %2951 = vdwg.mxu0
          %v2976 = vunpack.c.l.b16 %v2710
          %v2977 = vunpack.c.l.b16 %v2711
          %v2978 = vunpack.c.l.b16 %v2712
          %v2979 = vunpack.c.l.b16 %v2713
          %v2980 = vunpack.c.l.b16 %v2714
          %v2981 = vunpack.c.l.b16 %v2715
          %v2982 = vunpack.c.l.b16 %v2716
          %v2983 = vunpack.c.l.b16 %v2717
          %v2984 = vunpack.c.l.b16 %v2718
          %v2985 = vunpack.c.l.b16 %v2719
          %v2986 = vunpack.c.l.b16 %v2720
          %v2987 = vunpack.c.l.b16 %v2721
          %v2988 = vunpack.c.l.b16 %v2722
          %v2989 = vunpack.c.l.b16 %v2723
          %v2990 = vunpack.c.l.b16 %v2724
          %v2991 = vunpack.c.l.b16 %v2725
          %v2992 = vunpack.c.l.b16 %v2726
          %v2993 = vunpack.c.l.b16 %v2727
          %v2994 = vunpack.c.l.b16 %v2728
          %v2995 = vunpack.c.l.b16 %v2729
          %v2996 = vunpack.c.l.b16 %v2730
          %v2997 = vunpack.c.l.b16 %v2731
          %v2998 = vunpack.c.l.b16 %v2732
          %v2999 = vunpack.c.l.b16 %v2733
          %v3000 = vpack.c.b16 %v2977, %v2976
          %v3001 = vpack.c.b16 %v2979, %v2978
          %v3002 = vpack.c.b16 %v2981, %v2980
          %v3003 = vpack.c.b16 %v2983, %v2982
          %v3004 = vpack.c.b16 %v2985, %v2984
          %v3005 = vpack.c.b16 %v2987, %v2986
          %v3006 = vpack.c.b16 %v2989, %v2988
          %v3007 = vpack.c.b16 %v2991, %v2990
          %v3008 = vpack.c.b16 %v2993, %v2992
          %v3009 = vpack.c.b16 %v2995, %v2994
          %v3010 = vpack.c.b16 %v2997, %v2996
          %v3011 = vpack.c.b16 %v2999, %v2998
          %v3025 = vsel %vm2679, %v2651, 0
          %3027 = vmatprep.subr.bf16.mxu0 0
          %3028 = vmatpush1.bf16.msra.mxu0 %v3000
          %3029 = vmatprep.subr.bf16.mxu0 0
          %3030 = vmatpush1.bf16.msra.mxu0 %v3001
          %3031 = vmatprep.subr.bf16.mxu0 0
          %3032 = vmatpush1.bf16.msra.mxu0 %v3002
          %3033 = vmatprep.subr.bf16.mxu0 0
          %3034 = vmatpush1.bf16.msra.mxu0 %v3003
          %3035 = vmatprep.subr.bf16.mxu0 0
          %3036 = vmatpush1.bf16.msra.mxu0 %v3004
          %3037 = vmatprep.subr.bf16.mxu0 0
          %3038 = vmatpush1.bf16.msra.mxu0 %v3005
          %3039 = vmatprep.subr.bf16.mxu0 0
          %3040 = vmatpush1.bf16.msra.mxu0 %v3006
          %3041 = vmatprep.subr.bf16.mxu0 0
          %3042 = vmatpush1.bf16.msra.mxu0 %v3007
          %3043 = vmatprep.subr.bf16.mxu0 0
          %3044 = vmatpush1.bf16.msra.mxu0 %v3008
          %3045 = vmatprep.subr.bf16.mxu0 0
          %3046 = vmatpush1.bf16.msra.mxu0 %v3009
          %3047 = vmatprep.subr.bf16.mxu0 0
          %3048 = vmatpush1.bf16.msra.mxu0 %v3010
          %3049 = vmatprep.subr.bf16.mxu0 0
          %3050 = vmatpush1.bf16.msra.mxu0 %v3011
          %3051 = vmatprep.subr.bf16.mxu0 0
          %3052 = vmatpush1.bf16.msra.mxu0 0
          %3053 = vmatprep.subr.bf16.mxu0 0
          %3054 = vmatpush1.bf16.msra.mxu0 0
          %3055 = vmatprep.subr.bf16.mxu0 0
          %3056 = vmatpush1.bf16.msra.mxu0 0
          %3057 = vmatprep.subr.bf16.mxu0 0
          %3058 = vmatpush1.bf16.msra.mxu0 0
          %3059 = vmatprep.mubr.bf16.mxu0 %v3025
          %3060 = vmatmul.mubr.bf16.gmra.mrb[0].mxu0 %v2681
          %v3061 = vpop.f32.mrb[0].mxu0
          %v3062 = vadd.f32 %v2890, %v3061
          %v3063 = vpop.f32.mrb[0].mxu0
          %v3064 = vpop.f32.mrb[0].mxu0
          %v3065 = vadd.f32 %v2893, %v3064
          %v3066 = vpop.f32.mrb[0].mxu0
          %3067 = vmatprep.mubr.bf16.mxu0 %v2832
          %3068 = vmatmul.mubr.bf16.gmra.mrb[0].mxu0 %v2684
          %v3069 = vpop.f32.mrb[0].mxu0
          %v3070 = vadd.f32 %v2898, %v3069
          %v3071 = vpop.f32.mrb[0].mxu0
          %v3072 = vpop.f32.mrb[0].mxu0
          %v3073 = vadd.f32 %v2901, %v3072
          %v3074 = vpop.f32.mrb[0].mxu0
          %3075 = vmatprep.mubr.bf16.mxu0 %v2835
          %3076 = vmatmul.mubr.bf16.gmra.mrb[0].mxu0 %v2687
          %v3077 = vpop.f32.mrb[0].mxu0
          %v3078 = vadd.f32 %v2906, %v3077
          %v3079 = vpop.f32.mrb[0].mxu0
          %v3080 = vpop.f32.mrb[0].mxu0
          %v3081 = vadd.f32 %v2909, %v3080
          %v3082 = vpop.f32.mrb[0].mxu0
          %3083 = vmatprep.mubr.bf16.mxu0 %v2838
          %3084 = vmatmul.mubr.bf16.gmra.mrb[0].mxu0 %v2690
          %v3085 = vpop.f32.mrb[0].mxu0
          %v3086 = vadd.f32 %v2914, %v3085
          %v3087 = vpop.f32.mrb[0].mxu0
          %v3088 = vpop.f32.mrb[0].mxu0
          %v3089 = vadd.f32 %v2917, %v3088
          %v3090 = vpop.f32.mrb[0].mxu0
          %3091 = vmatprep.mubr.bf16.mxu0 %v2841
          %3092 = vmatmul.mubr.bf16.gmra.mrb[0].mxu0 %v2693
          %v3093 = vpop.f32.mrb[0].mxu0
          %v3094 = vadd.f32 %v2922, %v3093
          %v3095 = vpop.f32.mrb[0].mxu0
          %v3096 = vpop.f32.mrb[0].mxu0
          %v3097 = vadd.f32 %v2925, %v3096
          %v3098 = vpop.f32.mrb[0].mxu0
          %3099 = vmatprep.mubr.bf16.mxu0 %v2844
          %3100 = vmatmul.mubr.bf16.gmra.mrb[0].mxu0 %v2696
          %v3101 = vpop.f32.mrb[0].mxu0
          %v3102 = vadd.f32 %v2930, %v3101
          %v3103 = vpop.f32.mrb[0].mxu0
          %v3104 = vpop.f32.mrb[0].mxu0
          %v3105 = vadd.f32 %v2933, %v3104
          %v3106 = vpop.f32.mrb[0].mxu0
          %3107 = vmatprep.mubr.bf16.mxu0 %v2847
          %3108 = vmatmul.mubr.bf16.gmra.mrb[0].mxu0 %v2699
          %v3109 = vpop.f32.mrb[0].mxu0
          %v3110 = vadd.f32 %v2938, %v3109
          %v3111 = vpop.f32.mrb[0].mxu0
          %v3112 = vpop.f32.mrb[0].mxu0
          %v3113 = vadd.f32 %v2941, %v3112
          %v3114 = vpop.f32.mrb[0].mxu0
          %3115 = vmatprep.mubr.bf16.mxu0 %v2850
          %3116 = vmatmul.mubr.bf16.gmra.mrb[0].mxu0 %v2702
          %v3117 = vpop.f32.mrb[0].mxu0
          %v3118 = vadd.f32 %v2946, %v3117
          %v3119 = vpop.f32.mrb[0].mxu0
          %v3120 = vpop.f32.mrb[0].mxu0
          %v3121 = vadd.f32 %v2949, %v3120
          %v3122 = vpop.f32.mrb[0].mxu0
          %3123 = vdwg.mxu0
          %s3124 = scalar_lea.vmem %s2, 192
          %v3125 = vld [vmem:[%s3124] sm:$0xf]
          %v3126 = vld [vmem:[%s3124 + $0x4] sm:$0xf]
          %v3127 = vld [vmem:[%s3124 + $0x8] sm:$0xf]
          %v3128 = vld [vmem:[%s3124 + $0xc] sm:$0xf]
          %v3129 = vld [vmem:[%s3124 + $0x10] sm:$0xf]
          %v3130 = vld [vmem:[%s3124 + $0x14] sm:$0xf]
          %v3131 = vld [vmem:[%s3124 + $0x18] sm:$0xf]
          %v3132 = vld [vmem:[%s3124 + $0x1c] sm:$0xf]
          %v3133 = vld [vmem:[%s3124 + $0x20] sm:$0xf]
          %v3134 = vld [vmem:[%s3124 + $0x24] sm:$0xf]
          %v3135 = vld [vmem:[%s3124 + $0x28] sm:$0xf]
          %v3136 = vld [vmem:[%s3124 + $0x2c] sm:$0xf]
          %v3137 = vld [vmem:[%s3124 + $0x30] sm:$0xf]
          %v3138 = vld [vmem:[%s3124 + $0x34] sm:$0xf]
          %v3139 = vld [vmem:[%s3124 + $0x38] sm:$0xf]
          %v3140 = vld [vmem:[%s3124 + $0x3c] sm:$0xf]
          %v3141 = vld [vmem:[%s3124 + $0x40] sm:$0xf]
          %v3142 = vld [vmem:[%s3124 + $0x44] sm:$0xf]
          %v3143 = vld [vmem:[%s3124 + $0x48] sm:$0xf]
          %v3144 = vld [vmem:[%s3124 + $0x4c] sm:$0xf]
          %v3145 = vld [vmem:[%s3124 + $0x50] sm:$0xf]
          %v3146 = vld [vmem:[%s3124 + $0x54] sm:$0xf]
          %v3147 = vld [vmem:[%s3124 + $0x58] sm:$0xf]
          %v3148 = vld [vmem:[%s3124 + $0x5c] sm:$0xf]
          %v3173 = vunpack.c.l.b16 %v3125
          %v3174 = vunpack.c.l.b16 %v3126
          %v3175 = vunpack.c.l.b16 %v3127
          %v3176 = vunpack.c.l.b16 %v3128
          %v3177 = vunpack.c.l.b16 %v3129
          %v3178 = vunpack.c.l.b16 %v3130
          %v3179 = vunpack.c.l.b16 %v3131
          %v3180 = vunpack.c.l.b16 %v3132
          %v3181 = vunpack.c.l.b16 %v3133
          %v3182 = vunpack.c.l.b16 %v3134
          %v3183 = vunpack.c.l.b16 %v3135
          %v3184 = vunpack.c.l.b16 %v3136
          %v3185 = vunpack.c.l.b16 %v3137
          %v3186 = vunpack.c.l.b16 %v3138
          %v3187 = vunpack.c.l.b16 %v3139
          %v3188 = vunpack.c.l.b16 %v3140
          %v3189 = vunpack.c.l.b16 %v3141
          %v3190 = vunpack.c.l.b16 %v3142
          %v3191 = vunpack.c.l.b16 %v3143
          %v3192 = vunpack.c.l.b16 %v3144
          %v3193 = vunpack.c.l.b16 %v3145
          %v3194 = vunpack.c.l.b16 %v3146
          %v3195 = vunpack.c.l.b16 %v3147
          %v3196 = vunpack.c.l.b16 %v3148
          %v3197 = vpack.c.b16 %v3174, %v3173
          %v3198 = vpack.c.b16 %v3176, %v3175
          %v3199 = vpack.c.b16 %v3178, %v3177
          %v3200 = vpack.c.b16 %v3180, %v3179
          %v3201 = vpack.c.b16 %v3182, %v3181
          %v3202 = vpack.c.b16 %v3184, %v3183
          %v3203 = vpack.c.b16 %v3186, %v3185
          %v3204 = vpack.c.b16 %v3188, %v3187
          %v3205 = vpack.c.b16 %v3190, %v3189
          %v3206 = vpack.c.b16 %v3192, %v3191
          %v3207 = vpack.c.b16 %v3194, %v3193
          %v3208 = vpack.c.b16 %v3196, %v3195
          %v3222 = vsel %vm2679, %v2678, 0
          %3224 = vmatprep.subr.bf16.mxu0 0
          %3225 = vmatpush1.bf16.msra.mxu0 %v3197
          %3226 = vmatprep.subr.bf16.mxu0 0
          %3227 = vmatpush1.bf16.msra.mxu0 %v3198
          %3228 = vmatprep.subr.bf16.mxu0 0
          %3229 = vmatpush1.bf16.msra.mxu0 %v3199
          %3230 = vmatprep.subr.bf16.mxu0 0
          %3231 = vmatpush1.bf16.msra.mxu0 %v3200
          %3232 = vmatprep.subr.bf16.mxu0 0
          %3233 = vmatpush1.bf16.msra.mxu0 %v3201
          %3234 = vmatprep.subr.bf16.mxu0 0
          %3235 = vmatpush1.bf16.msra.mxu0 %v3202
          %3236 = vmatprep.subr.bf16.mxu0 0
          %3237 = vmatpush1.bf16.msra.mxu0 %v3203
          %3238 = vmatprep.subr.bf16.mxu0 0
          %3239 = vmatpush1.bf16.msra.mxu0 %v3204
          %3240 = vmatprep.subr.bf16.mxu0 0
          %3241 = vmatpush1.bf16.msra.mxu0 %v3205
          %3242 = vmatprep.subr.bf16.mxu0 0
          %3243 = vmatpush1.bf16.msra.mxu0 %v3206
          %3244 = vmatprep.subr.bf16.mxu0 0
          %3245 = vmatpush1.bf16.msra.mxu0 %v3207
          %3246 = vmatprep.subr.bf16.mxu0 0
          %3247 = vmatpush1.bf16.msra.mxu0 %v3208
          %3248 = vmatprep.subr.bf16.mxu0 0
          %3249 = vmatpush1.bf16.msra.mxu0 0
          %3250 = vmatprep.subr.bf16.mxu0 0
          %3251 = vmatpush1.bf16.msra.mxu0 0
          %3252 = vmatprep.subr.bf16.mxu0 0
          %3253 = vmatpush1.bf16.msra.mxu0 0
          %3254 = vmatprep.subr.bf16.mxu0 0
          %3255 = vmatpush1.bf16.msra.mxu0 0
          %3256 = vmatprep.mubr.bf16.mxu0 %v2835
          %3257 = vmatmul.mubr.bf16.gmra.mrb[0].mxu0 %v2687
          %v3258 = vpop.f32.mrb[0].mxu0
          %v3259 = vadd.f32 0.0, %v3258
          %v3260 = vpop.f32.mrb[0].mxu0
          %v3261 = vpop.f32.mrb[0].mxu0
          %v3262 = vadd.f32 0.0, %v3261
          %v3263 = vpop.f32.mrb[0].mxu0
          %3264 = vmatprep.mubr.bf16.mxu0 %v2838
          %3265 = vmatmul.mubr.bf16.gmra.mrb[0].mxu0 %v2690
          %v3266 = vpop.f32.mrb[0].mxu0
          %v3267 = vadd.f32 0.0, %v3266
          %v3268 = vpop.f32.mrb[0].mxu0
          %v3269 = vpop.f32.mrb[0].mxu0
          %v3270 = vadd.f32 0.0, %v3269
          %v3271 = vpop.f32.mrb[0].mxu0
          %3272 = vmatprep.mubr.bf16.mxu0 %v2841
          %3273 = vmatmul.mubr.bf16.gmra.mrb[0].mxu0 %v2693
          %v3274 = vpop.f32.mrb[0].mxu0
          %v3275 = vadd.f32 0.0, %v3274
          %v3276 = vpop.f32.mrb[0].mxu0
          %v3277 = vpop.f32.mrb[0].mxu0
          %v3278 = vadd.f32 0.0, %v3277
          %v3279 = vpop.f32.mrb[0].mxu0
          %3280 = vmatprep.mubr.bf16.mxu0 %v2844
          %3281 = vmatmul.mubr.bf16.gmra.mrb[0].mxu0 %v2696
          %v3282 = vpop.f32.mrb[0].mxu0
          %v3283 = vadd.f32 0.0, %v3282
          %v3284 = vpop.f32.mrb[0].mxu0
          %v3285 = vpop.f32.mrb[0].mxu0
          %v3286 = vadd.f32 0.0, %v3285
          %v3287 = vpop.f32.mrb[0].mxu0
          %3288 = vmatprep.mubr.bf16.mxu0 %v2847
          %3289 = vmatmul.mubr.bf16.gmra.mrb[0].mxu0 %v2699
          %v3290 = vpop.f32.mrb[0].mxu0
          %v3291 = vadd.f32 0.0, %v3290
          %v3292 = vpop.f32.mrb[0].mxu0
          %v3293 = vpop.f32.mrb[0].mxu0
          %v3294 = vadd.f32 0.0, %v3293
          %v3295 = vpop.f32.mrb[0].mxu0
          %3296 = vmatprep.mubr.bf16.mxu0 %v2850
          %3297 = vmatmul.mubr.bf16.gmra.mrb[0].mxu0 %v2702
          %v3298 = vpop.f32.mrb[0].mxu0
          %v3299 = vadd.f32 0.0, %v3298
          %v3300 = vpop.f32.mrb[0].mxu0
          %v3301 = vpop.f32.mrb[0].mxu0
          %v3302 = vadd.f32 0.0, %v3301
          %v3303 = vpop.f32.mrb[0].mxu0
          %3304 = vmatprep.mubr.bf16.mxu0 %v2853
          %3305 = vmatmul.mubr.bf16.gmra.mrb[0].mxu0 %v2705
          %v3306 = vpop.f32.mrb[0].mxu0
          %v3307 = vadd.f32 0.0, %v3306
          %v3308 = vpop.f32.mrb[0].mxu0
          %v3309 = vpop.f32.mrb[0].mxu0
          %v3310 = vadd.f32 0.0, %v3309
          %v3311 = vpop.f32.mrb[0].mxu0
          %3312 = vmatprep.mubr.bf16.mxu0 %v3222
          %3313 = vmatmul.mubr.bf16.gmra.mrb[0].mxu0 %v2708
          %v3314 = vpop.f32.mrb[0].mxu0
          %v3315 = vadd.f32 0.0, %v3314
          %v3316 = vpop.f32.mrb[0].mxu0
          %v3317 = vpop.f32.mrb[0].mxu0
          %v3318 = vadd.f32 0.0, %v3317
          %v3319 = vpop.f32.mrb[0].mxu0
          %3320 = vdwg.mxu0
          %v3321 = vadd.f32 %v3062, %v3259
          %v3322 = vadd.f32 %v3065, %v3262
          %v3323 = vadd.f32 %v3070, %v3267
          %v3324 = vadd.f32 %v3073, %v3270
          %v3325 = vadd.f32 %v3078, %v3275
          %v3326 = vadd.f32 %v3081, %v3278
          %v3327 = vadd.f32 %v3086, %v3283
          %v3328 = vadd.f32 %v3089, %v3286
          %v3329 = vadd.f32 %v3094, %v3291
          %v3330 = vadd.f32 %v3097, %v3294
          %v3331 = vadd.f32 %v3102, %v3299
          %v3332 = vadd.f32 %v3105, %v3302
          %v3333 = vadd.f32 %v3110, %v3307
          %v3334 = vadd.f32 %v3113, %v3310
          %v3335 = vadd.f32 %v3118, %v3315
          %v3336 = vadd.f32 %v3121, %v3318
          %v3337 = vld [vmem:[#allocation5 + $0x2] sm:$0x1]
          %v3338 = vsel %vm2679, %v3321, 0.0
          %v3339 = vsel %vm2679, %v3322, 0.0
          %v3340 = vadd.f32 %v3338, %v3339
          %v3341 = vsel %vm2679, %v3323, 0.0
          %v3342 = vadd.f32 %v3340, %v3341
          %v3343 = vsel %vm2679, %v3324, 0.0
          %v3344 = vadd.f32 %v3342, %v3343
          %v3345 = vsel %vm2679, %v3325, 0.0
          %v3346 = vadd.f32 %v3344, %v3345
          %v3347 = vsel %vm2679, %v3326, 0.0
          %v3348 = vadd.f32 %v3346, %v3347
          %v3349 = vsel %vm2679, %v3327, 0.0
          %v3350 = vadd.f32 %v3348, %v3349
          %v3351 = vsel %vm2679, %v3328, 0.0
          %v3352 = vadd.f32 %v3350, %v3351
          %v3353 = vsel %vm2679, %v3329, 0.0
          %v3354 = vadd.f32 %v3352, %v3353
          %v3355 = vsel %vm2679, %v3330, 0.0
          %v3356 = vadd.f32 %v3354, %v3355
          %v3357 = vsel %vm2679, %v3331, 0.0
          %v3358 = vadd.f32 %v3356, %v3357
          %v3359 = vsel %vm2679, %v3332, 0.0
          %v3360 = vadd.f32 %v3358, %v3359
          %v3361 = vsel %vm2679, %v3333, 0.0
          %v3362 = vadd.f32 %v3360, %v3361
          %v3363 = vsel %vm2679, %v3334, 0.0
          %v3364 = vadd.f32 %v3362, %v3363
          %v3365 = vsel %vm2679, %v3335, 0.0
          %v3366 = vadd.f32 %v3364, %v3365
          %v3367 = vsel %vm2679, %v3336, 0.0
          %v3368 = vadd.f32 %v3366, %v3367
          %v3369 = vrot.slane %v3368, 4
          %v3370 = vadd.f32 %v3368, %v3369
          %v3371 = vrot.slane %v3370, 2
          %v3372 = vadd.f32 %v3370, %v3371
          %v3373 = vrot.slane %v3372, 1
          %v3374 = vadd.f32 %v3372, %v3373
          %v3375 = vadd.f32 %v3337, %v3374
          %vm3376 = vcmask 516096
          %3377 = vst.msk [vmem:[#allocation5 + $0x2] sm:$0x1] %vm3376, %v3375
          %v3378 = vld [vmem:[#allocation5 + $0x3] sm:$0x1]
          %v3379 = vmul.f32 %v3321, %v3321
          %v3380 = vmul.f32 %v3322, %v3322
          %v3381 = vmul.f32 %v3323, %v3323
          %v3382 = vmul.f32 %v3324, %v3324
          %v3383 = vmul.f32 %v3325, %v3325
          %v3384 = vmul.f32 %v3326, %v3326
          %v3385 = vmul.f32 %v3327, %v3327
          %v3386 = vmul.f32 %v3328, %v3328
          %v3387 = vmul.f32 %v3329, %v3329
          %v3388 = vmul.f32 %v3330, %v3330
          %v3389 = vmul.f32 %v3331, %v3331
          %v3390 = vmul.f32 %v3332, %v3332
          %v3391 = vmul.f32 %v3333, %v3333
          %v3392 = vmul.f32 %v3334, %v3334
          %v3393 = vmul.f32 %v3335, %v3335
          %v3394 = vmul.f32 %v3336, %v3336
          %v3395 = vsel %vm2679, %v3379, 0.0
          %v3396 = vsel %vm2679, %v3380, 0.0
          %v3397 = vadd.f32 %v3395, %v3396
          %v3398 = vsel %vm2679, %v3381, 0.0
          %v3399 = vadd.f32 %v3397, %v3398
          %v3400 = vsel %vm2679, %v3382, 0.0
          %v3401 = vadd.f32 %v3399, %v3400
          %v3402 = vsel %vm2679, %v3383, 0.0
          %v3403 = vadd.f32 %v3401, %v3402
          %v3404 = vsel %vm2679, %v3384, 0.0
          %v3405 = vadd.f32 %v3403, %v3404
          %v3406 = vsel %vm2679, %v3385, 0.0
          %v3407 = vadd.f32 %v3405, %v3406
          %v3408 = vsel %vm2679, %v3386, 0.0
          %v3409 = vadd.f32 %v3407, %v3408
          %v3410 = vsel %vm2679, %v3387, 0.0
          %v3411 = vadd.f32 %v3409, %v3410
          %v3412 = vsel %vm2679, %v3388, 0.0
          %v3413 = vadd.f32 %v3411, %v3412
          %v3414 = vsel %vm2679, %v3389, 0.0
          %v3415 = vadd.f32 %v3413, %v3414
          %v3416 = vsel %vm2679, %v3390, 0.0
          %v3417 = vadd.f32 %v3415, %v3416
          %v3418 = vsel %vm2679, %v3391, 0.0
          %v3419 = vadd.f32 %v3417, %v3418
          %v3420 = vsel %vm2679, %v3392, 0.0
          %v3421 = vadd.f32 %v3419, %v3420
          %v3422 = vsel %vm2679, %v3393, 0.0
          %v3423 = vadd.f32 %v3421, %v3422
          %v3424 = vsel %vm2679, %v3394, 0.0
          %v3425 = vadd.f32 %v3423, %v3424
          %v3426 = vrot.slane %v3425, 4
          %v3427 = vadd.f32 %v3425, %v3426
          %v3428 = vrot.slane %v3427, 2
          %v3429 = vadd.f32 %v3427, %v3428
          %v3430 = vrot.slane %v3429, 1
          %v3431 = vadd.f32 %v3429, %v3430
          %v3432 = vadd.f32 %v3378, %v3431
          %3433 = vst.msk [vmem:[#allocation5 + $0x3] sm:$0x1] %vm3376, %v3432
          %v3434 = vpack.c.bf16 %v3322, %v3321
          %v3435 = vpack.c.bf16 %v3324, %v3323
          %v3436 = vpack.c.bf16 %v3326, %v3325
          %v3437 = vpack.c.bf16 %v3328, %v3327
          %v3438 = vpack.c.bf16 %v3330, %v3329
          %v3439 = vpack.c.bf16 %v3332, %v3331
          %v3440 = vpack.c.bf16 %v3334, %v3333
          %v3441 = vpack.c.bf16 %v3336, %v3335
          %s3442 = smul.u32 %s24, 16
          %s3443 = sadd.s32 %s272, %s3442
          %s3444 = smul.addr %s3443, 8
          %s3445 = scalar_lea.vmem [#allocation4], %s3444
          %3446 = vst.msk [vmem:[%s3445] sm:$0xff] %vm2679, %v3434
          %3447 = vst.msk [vmem:[%s3445 + $0x8] sm:$0xff] %vm2679, %v3435
          %3448 = vst.msk [vmem:[%s3445 + $0x10] sm:$0xff] %vm2679, %v3436
          %3449 = vst.msk [vmem:[%s3445 + $0x18] sm:$0xff] %vm2679, %v3437
          %3450 = vst.msk [vmem:[%s3445 + $0x20] sm:$0xff] %vm2679, %v3438
          %3451 = vst.msk [vmem:[%s3445 + $0x28] sm:$0xff] %vm2679, %v3439
          %3452 = vst.msk [vmem:[%s3445 + $0x30] sm:$0xff] %vm2679, %v3440
          %3453 = vst.msk [vmem:[%s3445 + $0x38] sm:$0xff] %vm2679, %v3441
        $region56: #{tpu_custom_call.1} parent=35 // pred_fallthru
          _
        %p3454 = scmp.eq.s32.totalorder %s23, 3
        %p3455 = pnand %p3454, %p274
        %p3456 = pneg %p3455
        %p3457 = pnand %p3456, %p277
        %p3458 = pneg %p3457
        // Predicated region
        $region57: #{tpu_custom_call.1} parent=35 // pred_check
          _
        $region58: #{tpu_custom_call.1} parent=35 // pred_check_branch
          %3460 = sbr.rel (%p3457) target = $region60
        $region59: #{tpu_custom_call.1} parent=35 // pred_region
          %v3461 = vld [vmem:[#allocation5 + $0x2] sm:$0x1]
          %v3462 = vmul.f32 %v3461, 0.001953125
          %v3463 = vld [vmem:[#allocation5 + $0x3] sm:$0x1]
          %v3464 = vmul.f32 %v3463, 0.001953125
          %v3465 = vmul.f32 %v3462, %v3462
          %v3466 = vsub.f32 %v3464, %v3465
          %v3467 = vmax.f32 %v3466, 0.0
          %v3468 = vld [vmem:[%s3 + $0x2] sm:$0x1]
          %v3469 = vadd.f32 %v3467, 1e-05
          %v3470 = vrsqrt.pop %v3469
          %v3471 = vmul.f32 %v3468, %v3470
          %v3472 = vld [vmem:[%s3 + $0x3] sm:$0x1]
          %v3473 = vmul.f32 %v3462, %v3471
          %v3474 = vsub.f32 %v3472, %v3473
          %v3475 = vld [vmem:[%s3 + $0x4] sm:$0x1]
          %v3476 = vmul.f32 %v3475, %v3471
          %vm3477 = vcmask 516096
          %3478 = vst.msk [vmem:[#allocation5 + $0x6] sm:$0x1] %vm3477, %v3476
          %v3479 = vld [vmem:[%s3 + $0x4] sm:$0x1]
          %v3480 = vmul.f32 %v3479, %v3474
          %3481 = vst.msk [vmem:[#allocation5 + $0x7] sm:$0x1] %vm3477, %v3480
        $region60: #{tpu_custom_call.1} parent=35 // pred_fallthru
          _
        // Predicated region
        $region61: #{tpu_custom_call.1} parent=35 // pred_check
          %p3482 = pneg %p3454
        $region62: #{tpu_custom_call.1} parent=35 // pred_check_branch
          %3484 = sbr.rel (%p3482) target = $region64
        $region63: #{tpu_custom_call.1} parent=35 // pred_region
          %s3485 = smul.u32 %s24, 16
          %s3486 = sadd.s32 %s272, %s3485
          %s3487 = smul.addr %s3486, 8
          %s3488 = scalar_lea.vmem [#allocation4], %s3487
          %v3489 = vld [vmem:[%s3488] sm:$0xff]
          %v3490 = vld [vmem:[%s3488 + $0x8] sm:$0xff]
          %v3491 = vld [vmem:[%s3488 + $0x10] sm:$0xff]
          %v3492 = vld [vmem:[%s3488 + $0x18] sm:$0xff]
          %v3493 = vld [vmem:[%s3488 + $0x20] sm:$0xff]
          %v3494 = vld [vmem:[%s3488 + $0x28] sm:$0xff]
          %v3495 = vld [vmem:[%s3488 + $0x30] sm:$0xff]
          %v3496 = vld [vmem:[%s3488 + $0x38] sm:$0xff]
          %v3497 = vunpack.c.l.bf16 %v3489
          %v3498 = vunpack.c.h.bf16 %v3489
          %v3499 = vunpack.c.l.bf16 %v3490
          %v3500 = vunpack.c.h.bf16 %v3490
          %v3501 = vunpack.c.l.bf16 %v3491
          %v3502 = vunpack.c.h.bf16 %v3491
          %v3503 = vunpack.c.l.bf16 %v3492
          %v3504 = vunpack.c.h.bf16 %v3492
          %v3505 = vunpack.c.l.bf16 %v3493
          %v3506 = vunpack.c.h.bf16 %v3493
          %v3507 = vunpack.c.l.bf16 %v3494
          %v3508 = vunpack.c.h.bf16 %v3494
          %v3509 = vunpack.c.l.bf16 %v3495
          %v3510 = vunpack.c.h.bf16 %v3495
          %v3511 = vunpack.c.l.bf16 %v3496
          %v3512 = vunpack.c.h.bf16 %v3496
          %v3513 = vld [vmem:[%s262] sm:$0xff]
          %v3514 = vld [vmem:[%s262 + $0x8] sm:$0xff]
          %v3515 = vld [vmem:[%s262 + $0x10] sm:$0xff]
          %v3516 = vld [vmem:[%s262 + $0x18] sm:$0xff]
          %v3517 = vld [vmem:[%s262 + $0x20] sm:$0xff]
          %v3518 = vld [vmem:[%s262 + $0x28] sm:$0xff]
          %v3519 = vld [vmem:[%s262 + $0x30] sm:$0xff]
          %v3520 = vld [vmem:[%s262 + $0x38] sm:$0xff]
          %v3521 = vld [vmem:[%s262 + $0x40] sm:$0xff]
          %v3522 = vld [vmem:[%s262 + $0x48] sm:$0xff]
          %v3523 = vld [vmem:[%s262 + $0x50] sm:$0xff]
          %v3524 = vld [vmem:[%s262 + $0x58] sm:$0xff]
          %v3525 = vld [vmem:[%s262 + $0x60] sm:$0xff]
          %v3526 = vld [vmem:[%s262 + $0x68] sm:$0xff]
          %v3527 = vld [vmem:[%s262 + $0x70] sm:$0xff]
          %v3528 = vld [vmem:[%s262 + $0x78] sm:$0xff]
          %v3529 = vld [vmem:[#allocation5 + $0x6] sm:$0x1]
          %v3530 = vlaneseq
          %v3531 = vshrl.u32 %v3530, 7
          %v3532 = vsub.s32 0, %v3531
          %v3533 = vrot.slane %v3529, %v3532
          %v3534 = vmul.f32 %v3497, %v3533
          %v3535 = vmul.f32 %v3498, %v3533
          %v3536 = vmul.f32 %v3499, %v3533
          %v3537 = vmul.f32 %v3500, %v3533
          %v3538 = vmul.f32 %v3501, %v3533
          %v3539 = vmul.f32 %v3502, %v3533
          %v3540 = vmul.f32 %v3503, %v3533
          %v3541 = vmul.f32 %v3504, %v3533
          %v3542 = vmul.f32 %v3505, %v3533
          %v3543 = vmul.f32 %v3506, %v3533
          %v3544 = vmul.f32 %v3507, %v3533
          %v3545 = vmul.f32 %v3508, %v3533
          %v3546 = vmul.f32 %v3509, %v3533
          %v3547 = vmul.f32 %v3510, %v3533
          %v3548 = vmul.f32 %v3511, %v3533
          %v3549 = vmul.f32 %v3512, %v3533
          %v3550 = vadd.f32 %v3513, %v3534
          %v3551 = vadd.f32 %v3514, %v3535
          %v3552 = vadd.f32 %v3515, %v3536
          %v3553 = vadd.f32 %v3516, %v3537
          %v3554 = vadd.f32 %v3517, %v3538
          %v3555 = vadd.f32 %v3518, %v3539
          %v3556 = vadd.f32 %v3519, %v3540
          %v3557 = vadd.f32 %v3520, %v3541
          %v3558 = vadd.f32 %v3521, %v3542
          %v3559 = vadd.f32 %v3522, %v3543
          %v3560 = vadd.f32 %v3523, %v3544
          %v3561 = vadd.f32 %v3524, %v3545
          %v3562 = vadd.f32 %v3525, %v3546
          %v3563 = vadd.f32 %v3526, %v3547
          %v3564 = vadd.f32 %v3527, %v3548
          %v3565 = vadd.f32 %v3528, %v3549
          %v3566 = vld [vmem:[#allocation5 + $0x7] sm:$0x1]
          %v3567 = vlaneseq
          %v3568 = vshrl.u32 %v3567, 7
          %v3569 = vsub.s32 0, %v3568
          %v3570 = vrot.slane %v3566, %v3569
          %v3571 = vadd.f32 %v3550, %v3570
          %v3572 = vadd.f32 %v3551, %v3570
          %v3573 = vadd.f32 %v3552, %v3570
          %v3574 = vadd.f32 %v3553, %v3570
          %v3575 = vadd.f32 %v3554, %v3570
          %v3576 = vadd.f32 %v3555, %v3570
          %v3577 = vadd.f32 %v3556, %v3570
          %v3578 = vadd.f32 %v3557, %v3570
          %v3579 = vadd.f32 %v3558, %v3570
          %v3580 = vadd.f32 %v3559, %v3570
          %v3581 = vadd.f32 %v3560, %v3570
          %v3582 = vadd.f32 %v3561, %v3570
          %v3583 = vadd.f32 %v3562, %v3570
          %v3584 = vadd.f32 %v3563, %v3570
          %v3585 = vadd.f32 %v3564, %v3570
          %v3586 = vadd.f32 %v3565, %v3570
          %vm3587 = vcmask 523264
          %3588 = vst.msk [vmem:[%s248] sm:$0xff] %vm3587, %v3571
          %3589 = vst.msk [vmem:[%s248 + $0x8] sm:$0xff] %vm3587, %v3572
          %3590 = vst.msk [vmem:[%s248 + $0x10] sm:$0xff] %vm3587, %v3573
          %3591 = vst.msk [vmem:[%s248 + $0x18] sm:$0xff] %vm3587, %v3574
          %3592 = vst.msk [vmem:[%s248 + $0x20] sm:$0xff] %vm3587, %v3575
          %3593 = vst.msk [vmem:[%s248 + $0x28] sm:$0xff] %vm3587, %v3576
          %3594 = vst.msk [vmem:[%s248 + $0x30] sm:$0xff] %vm3587, %v3577
          %3595 = vst.msk [vmem:[%s248 + $0x38] sm:$0xff] %vm3587, %v3578
          %3596 = vst.msk [vmem:[%s248 + $0x40] sm:$0xff] %vm3587, %v3579
          %3597 = vst.msk [vmem:[%s248 + $0x48] sm:$0xff] %vm3587, %v3580
          %3598 = vst.msk [vmem:[%s248 + $0x50] sm:$0xff] %vm3587, %v3581
          %3599 = vst.msk [vmem:[%s248 + $0x58] sm:$0xff] %vm3587, %v3582
          %3600 = vst.msk [vmem:[%s248 + $0x60] sm:$0xff] %vm3587, %v3583
          %3601 = vst.msk [vmem:[%s248 + $0x68] sm:$0xff] %vm3587, %v3584
          %3602 = vst.msk [vmem:[%s248 + $0x70] sm:$0xff] %vm3587, %v3585
          %3603 = vst.msk [vmem:[%s248 + $0x78] sm:$0xff] %vm3587, %v3586
        $region64: #{tpu_custom_call.1} parent=35 // pred_fallthru
          _
        %s3604 = sand.u32 %s150, 1
        %s3605 = scalar_lea.sflag [#allocation7], %s3604
        %s3606 = sand.u32 %s150, 1
        %s3607 = smul.addr %s3606, 128
        %s3608 = scalar_lea.vmem [#allocation6], %s3607
        // Predicated region
        $region65: #{tpu_custom_call.1} parent=35 // pred_check
          %p3609 = pneg %p160
        $region66: #{tpu_custom_call.1} parent=35 // pred_check_branch
          %3611 = sbr.rel (%p3609) target = $region68
        $region67: #{tpu_custom_call.1} parent=35 // pred_region
          %p3612 = scmp.eq.s32.totalorder %s23, 3
          %s3613 = scalar_select %p3612, %s25, 0
          %s3614 = smul.u32 8, %s3613
          %s3616 = ssub.s32 2048, 2048
          %3617 = vsyncadd %s3605, %s3616
          %s3618 = smul.addr %s3614, 2
          %s3619 = smul.addr %s24, 32
          %s3620 = sadd.s32 %s3618, %s3619
          %s3621 = smul.addr %s3620, 128
          %s3622 = scalar_lea.hbm %s4, %s3621
          %s3623 = sshll.u32 %s3608, 4
          %s3624 = int_to_ptr.vmem [resolvable:$true] %s3623
          %3629 = dma.vmem_to_hbm [thread:$0]  %s3624, 2048, %s3622, %s3605, 128, 128, 8
        $region68: #{tpu_custom_call.1} parent=35 // pred_fallthru
          _
      $region36: #{tpu_custom_call.1} parent=5 // pred_fallthru
        _
      %p3630 = scmp.le.s32.totalorder 2, %s13
      // Predicated region
      $region69: #{tpu_custom_call.1} parent=5 // pred_check
        %p3631 = pneg %p3630
      $region70: #{tpu_custom_call.1} parent=5 // pred_check_branch
        %3633 = sbr.rel (%p3631) target = $region72
      $region71: #{tpu_custom_call.1} parent=5 // pred_region
        %s3634 = ssub.s32 %s13, 2
        // Predicated region
        $region73: #{tpu_custom_call.1} parent=71 // pred_check
          %p3635 = pneg %p166
        $region74: #{tpu_custom_call.1} parent=71 // pred_check_branch
          %3637 = sbr.rel (%p3635) target = $region76
        $region75: #{tpu_custom_call.1} parent=71 // pred_region
          %s3638 = sand.u32 %s151, 1
          %s3639 = scalar_lea.sflag [#allocation7], %s3638
          %s3640 = sand.u32 %s151, 1
          %s3641 = smul.addr %s3640, 128
          %s3642 = scalar_lea.vmem [#allocation6], %s3641
          %3643 = dma.done %s3639, 2048
        $region76: #{tpu_custom_call.1} parent=71 // pred_fallthru
          _
      $region72: #{tpu_custom_call.1} parent=5 // pred_fallthru
        _
    $region6: #{tpu_custom_call.1} parent=1 // loop_footer
      %s17 = sadd.s32 1, %s13
    $region7: #{tpu_custom_call.1} parent=1 // loop_footer_branch
      %12 = sbr.rel target = $region3
    $region8: #{tpu_custom_call.1} parent=1 // loop_exit
      _
    %3644 = vsyncpa [#allocation7], 1
    %s3645 = scalar_lea.sflag [#allocation7], 1
    %3646 = vsyncpa %s3645, 1

</llo_original>
